<compile_context>
chip_gen: v7x
topology: tpu7x:2x2x1
jax: 0.10.0
libtpu: 0.0.40
codegen_flags: <defaults>
</compile_context>

<pallas_src>
import functools

import jax
import jax.numpy as jnp
import numpy as np
from jax.experimental import pallas as pl
from jax.experimental.pallas import tpu as pltpu


def _round_up(x: int, m: int) -> int:
    return ((x + m - 1) // m) * m


@functools.lru_cache(maxsize=None)
def _selection_matrix_s(n_towers: int, tower_dim: int) -> np.ndarray:
    """S [Dn*td, Dn]: S[t*td*td + i*td + j, t*td + i] = 1 (sum over j into output row i).

    0/1 values are exact in bf16.  Cached so it is not rebuilt per call (and it
    constant-folds entirely when the wrapper runs under jit).
    """
    dn = n_towers * tower_dim
    k = dn * tower_dim
    s = np.zeros((k, dn), np.float32)
    for t in range(n_towers):
        for i in range(tower_dim):
            for j in range(tower_dim):
                s[t * tower_dim * tower_dim + i * tower_dim + j, t * tower_dim + i] = 1.0
    return s


def _multitower_edge_kernel(ef_ref, idx_ref, w_ref, b_ref, ng_ref, s_ref, out_ref):
    te = ef_ref.shape[0]
    n_pad = ng_ref.shape[0]

    # Linear on the MXU: bf16 inputs / f32 accumulation.  Bias + ReLU in f32 on the VPU.
    h = jnp.dot(ef_ref[...].astype(jnp.bfloat16), w_ref[...],
                preferred_element_type=jnp.float32)                 # [TE, K]
    h = jnp.maximum(h + b_ref[...], 0.0)                            # Dropout == identity (inference)

    # In-kernel neighbor gather fused with the per-tower broadcast expansion:
    #   onehot[e, n] = (idx[e] == n);  nbr_exp = onehot @ NG   (exact row selection, f32 acc).
    # Ragged-tail note: garbage idx in the padded rows of the last block only produces values
    # in output rows that Pallas drops (out-of-bounds writes are masked).
    node_iota = jax.lax.broadcasted_iota(jnp.int32, (te, n_pad), 1)
    onehot = jnp.where(idx_ref[...] == node_iota,
                       jnp.float32(1.0), jnp.float32(0.0)).astype(jnp.bfloat16)   # [TE, N_pad]
    nbr_exp = jnp.dot(onehot, ng_ref[...],
                      preferred_element_type=jnp.float32)            # [TE, K]

    # Per-tower matvec reduction on the MXU via the 0/1 selection matrix S (bf16 single pass).
    out = jnp.dot((h * nbr_exp).astype(jnp.bfloat16), s_ref[...],
                  preferred_element_type=jnp.float32)                # [TE, Dn]
    out_ref[...] = out.astype(out_ref.dtype)


def multitower_edge_forward(node_features, edge_features, edge_index, w, b,
                            *, n_towers: int = 8, edge_tile: int = 1024):
    """w: [De, Dn*td] ("in, out" layout); b: [Dn*td]."""
    E, De = edge_features.shape
    N, Dn = node_features.shape
    assert Dn % n_towers == 0, "n_node_features must be divisible by n_towers"
    td = Dn // n_towers
    K = Dn * td
    assert w.shape == (De, K) and b.shape == (K,)

    # Edge tile: large, to amortise the ~0.35us per-grid-step overhead, while keeping the
    # grid >= 2 steps per TensorCore on dual-TC v7x at moderate E.
    TE = min(edge_tile, _round_up(E, 8))
    TE = max(8, _round_up(TE, 8))
    grid = (pl.cdiv(E, TE),)

    # Pre-expand the (small) node table to the per-tower broadcast layout:
    #   NG[n, t*td*td + i*td + j] = node_features[n, t*td + j]
    # Pure reshape/broadcast on [N, Dn]; nothing E-sized is materialised in HBM.
    ng = jnp.broadcast_to(node_features.reshape(N, n_towers, 1, td),
                          (N, n_towers, td, td)).reshape(N, K)
    n_pad = _round_up(N, 128)          # lane-dense one-hot / clean MXU contraction dim
    if n_pad != N:
        ng = jnp.pad(ng, ((0, n_pad - N), (0, 0)))
    ng = ng.astype(jnp.bfloat16)

    idx = edge_index[1].astype(jnp.int32).reshape(E, 1)          # tiny int32 stream
    s_mat = jnp.asarray(_selection_matrix_s(n_towers, td)).astype(jnp.bfloat16)
    w_bf16 = w.astype(jnp.bfloat16)                              # constant-folds under jit
    b2 = b.astype(jnp.float32).reshape(1, K)

    cost = pl.CostEstimate(
        flops=int(2 * E * (De * K + n_pad * K + K * Dn)),
        transcendentals=0,
        bytes_accessed=int(E * (De * edge_features.dtype.itemsize + 4
                                + Dn * node_features.dtype.itemsize)
                           + w_bf16.size * 2 + b2.size * 4
                           + ng.size * 2 + s_mat.size * 2),
    )

    return pl.pallas_call(
        _multitower_edge_kernel,
        out_shape=jax.ShapeDtypeStruct((E, Dn), node_features.dtype),
        grid_spec=pltpu.PrefetchScalarGridSpec(
            num_scalar_prefetch=0,
            grid=grid,
            in_specs=[
                pl.BlockSpec((TE, De), lambda i: (i, 0)),     # edge features tile
                pl.BlockSpec((TE, 1), lambda i: (i, 0)),      # neighbor indices tile (int32)
                pl.BlockSpec((De, K), lambda i: (0, 0)),      # W (bf16), grid-invariant
                pl.BlockSpec((1, K), lambda i: (0, 0)),       # bias (f32), grid-invariant
                pl.BlockSpec((n_pad, K), lambda i: (0, 0)),   # expanded node table NG (bf16)
                pl.BlockSpec((K, Dn), lambda i: (0, 0)),      # S selection matrix (bf16)
            ],
            # NOTE: out last dim (Dn=32) < 128 lanes -> masked stores; amortised by large TE
            # and the penalty disappears for production configs with Dn >= 128.
            out_specs=pl.BlockSpec((TE, Dn), lambda i: (i, 0)),
        ),
        compiler_params=pltpu.CompilerParams(dimension_semantics=("parallel",)),
        cost_estimate=cost,
    )(edge_features, idx, w_bf16, b2, ng, s_mat)


def reference_forward(node_features, edge_features, edge_index, w, b, n_towers):
    """Pure-JAX reference matching the PyTorch module (f32 throughout)."""
    E = edge_features.shape[0]
    Dn = node_features.shape[-1]
    td = Dn // n_towers
    nbr = node_features[edge_index[1]]
    h = jnp.maximum(edge_features @ w + b, 0.0)          # Dropout identity at inference
    edge_out = h.reshape(E, n_towers, td, td)
    nbr_r = nbr.reshape(E, n_towers, td)
    return jnp.einsum("etij,etj->eti", edge_out, nbr_r).reshape(E, Dn)


if __name__ == "__main__":
    # Small, deterministic example shapes.
    N_NODES = 128
    N_EDGES = 4096        # 4 tiles at TE=1024 -> 2 grid steps per TensorCore on v7x
    D_EDGE = 16
    N_TOWERS = 8
    D_NODE = 32           # tower_dimension = 4; Linear output width = 128 (one full lane vreg)
    TD = D_NODE // N_TOWERS

    key = jax.random.PRNGKey(0)
    k1, k2, k3, kw, kb = jax.random.split(key, 5)

    node_features = jax.random.normal(k1, (N_NODES, D_NODE), jnp.float32)
    edge_features = jax.random.normal(k2, (N_EDGES, D_EDGE), jnp.float32)
    edge_index = jax.random.randint(k3, (2, N_EDGES), 0, N_NODES, jnp.int32)

    # nn.Linear-style init: uniform +-1/sqrt(fan_in); W stored as [in, out].
    bound = 1.0 / np.sqrt(D_EDGE)
    w = jax.random.uniform(kw, (D_EDGE, D_NODE * TD), jnp.float32, -bound, bound)
    b = jax.random.uniform(kb, (D_NODE * TD,), jnp.float32, -bound, bound)

    fwd = jax.jit(functools.partial(multitower_edge_forward,
                                    n_towers=N_TOWERS, edge_tile=1024))
    out = jax.block_until_ready(fwd(node_features, edge_features, edge_index, w, b))

    ref = reference_forward(node_features, edge_features, edge_index, w, b, N_TOWERS)
    # bf16 MXU inputs (W, ef, node table, and the h*nbr product) with f32 accumulation
    # introduce ~1e-2-level relative drift vs the f32 reference.
    np.testing.assert_allclose(np.asarray(out), np.asarray(ref), rtol=2e-2, atol=8e-2)

    assert out.shape == (N_EDGES, D_NODE)
    print("KERNEL_OK")
</pallas_src>

<mosaic_0001>
module attributes {stable_mosaic.version = 11 : i64} {
  func.func @_multitower_edge_kernel(%arg0: i32, %arg1: memref<1024x16xf32, #tpu.memory_space<vmem>>, %arg2: memref<1024x1xi32, #tpu.memory_space<vmem>>, %arg3: memref<16x128xbf16, #tpu.memory_space<vmem>>, %arg4: memref<1x128xf32, #tpu.memory_space<vmem>>, %arg5: memref<128x128xbf16, #tpu.memory_space<vmem>>, %arg6: memref<128x32xbf16, #tpu.memory_space<vmem>>, %arg7: memref<1024x32xf32, #tpu.memory_space<vmem>>) attributes {dimension_semantics = [#tpu.dimension_semantics<parallel>], iteration_bounds = array<i64: 4>, scalar_prefetch = 0 : i64, scratch_operands = 0 : i64, tpu.core_type = #tpu.core_type<tc>, window_params = [{transform_indices = @transform_0, window_bounds = array<i64: 1024, 16>}, {transform_indices = @transform_1, window_bounds = array<i64: 1024, 1>}, {pipeline_mode = #tpu.pipeline_mode<synchronous>, transform_indices = @transform_2, window_bounds = array<i64: 16, 128>}, {pipeline_mode = #tpu.pipeline_mode<synchronous>, transform_indices = @transform_3, window_bounds = array<i64: 1, 128>}, {pipeline_mode = #tpu.pipeline_mode<synchronous>, transform_indices = @transform_4, window_bounds = array<i64: 128, 128>}, {pipeline_mode = #tpu.pipeline_mode<synchronous>, transform_indices = @transform_5, window_bounds = array<i64: 128, 32>}, {transform_indices = @transform_6, window_bounds = array<i64: 1024, 32>}]} {
    %c0 = arith.constant 0 : index
    %c0_0 = arith.constant 0 : index
    %0 = vector.load %arg1[%c0, %c0_0] : memref<1024x16xf32, #tpu.memory_space<vmem>>, vector<1024x16xf32>
    %1 = arith.truncf %0 : vector<1024x16xf32> to vector<1024x16xbf16>
    %c0_1 = arith.constant 0 : index
    %c0_2 = arith.constant 0 : index
    %2 = vector.load %arg3[%c0_1, %c0_2] : memref<16x128xbf16, #tpu.memory_space<vmem>>, vector<16x128xbf16>
    %cst = arith.constant dense<0.000000e+00> : vector<1024x128xf32>
    %3 = tpu.matmul %1, %2, %cst {dimension_numbers = #tpu.dot_dimension_numbers<[1], [0], [0], [1], [0, 0, 1, 1], [], []>} : vector<1024x16xbf16>, vector<16x128xbf16>, vector<1024x128xf32> -> vector<1024x128xf32>
    %c0_3 = arith.constant 0 : index
    %c0_4 = arith.constant 0 : index
    %4 = vector.load %arg4[%c0_3, %c0_4] : memref<1x128xf32, #tpu.memory_space<vmem>>, vector<1x128xf32>
    %5 = vector.broadcast %4 : vector<1x128xf32> to vector<1024x128xf32>
    %6 = arith.addf %3, %5 : vector<1024x128xf32>
    %cst_5 = arith.constant 0.000000e+00 : f32
    %7 = vector.broadcast %cst_5 : f32 to vector<1024x128xf32>
    %8 = arith.maximumf %6, %7 : vector<1024x128xf32>
    %9 = tpu.iota {dimensions = array<i32: 1>} : vector<1024x128xi32>
    %c0_6 = arith.constant 0 : index
    %c0_7 = arith.constant 0 : index
    %10 = vector.load %arg2[%c0_6, %c0_7] : memref<1024x1xi32, #tpu.memory_space<vmem>>, vector<1024x1xi32>
    %11 = vector.broadcast %10 : vector<1024x1xi32> to vector<1024x128xi32>
    %12 = arith.cmpi eq, %11, %9 : vector<1024x128xi32>
    %cst_8 = arith.constant 1.000000e+00 : f32
    %cst_9 = arith.constant 0.000000e+00 : f32
    %13 = vector.broadcast %cst_8 : f32 to vector<1024x128xf32>
    %14 = vector.broadcast %cst_9 : f32 to vector<1024x128xf32>
    %15 = arith.select %12, %13, %14 : vector<1024x128xi1>, vector<1024x128xf32>
    %16 = arith.truncf %15 : vector<1024x128xf32> to vector<1024x128xbf16>
    %c0_10 = arith.constant 0 : index
    %c0_11 = arith.constant 0 : index
    %17 = vector.load %arg5[%c0_10, %c0_11] : memref<128x128xbf16, #tpu.memory_space<vmem>>, vector<128x128xbf16>
    %cst_12 = arith.constant dense<0.000000e+00> : vector<1024x128xf32>
    %18 = tpu.matmul %16, %17, %cst_12 {dimension_numbers = #tpu.dot_dimension_numbers<[1], [0], [0], [1], [0, 0, 1, 1], [], []>} : vector<1024x128xbf16>, vector<128x128xbf16>, vector<1024x128xf32> -> vector<1024x128xf32>
    %19 = arith.mulf %8, %18 : vector<1024x128xf32>
    %20 = arith.truncf %19 : vector<1024x128xf32> to vector<1024x128xbf16>
    %c0_13 = arith.constant 0 : index
    %c0_14 = arith.constant 0 : index
    %21 = vector.load %arg6[%c0_13, %c0_14] : memref<128x32xbf16, #tpu.memory_space<vmem>>, vector<128x32xbf16>
    %cst_15 = arith.constant dense<0.000000e+00> : vector<1024x32xf32>
    %22 = tpu.matmul %20, %21, %cst_15 {dimension_numbers = #tpu.dot_dimension_numbers<[1], [0], [0], [1], [0, 0, 1, 1], [], []>} : vector<1024x128xbf16>, vector<128x32xbf16>, vector<1024x32xf32> -> vector<1024x32xf32>
    %c0_16 = arith.constant 0 : index
    %c0_17 = arith.constant 0 : index
    %23 = vector.load %arg7[%c0_16, %c0_17] : memref<1024x32xf32, #tpu.memory_space<vmem>>, vector<1024x32xf32>
    tpu.vector_store %arg7[%c0_16, %c0_17], %22 {strides = array<i32>} : memref<1024x32xf32, #tpu.memory_space<vmem>>, vector<1024x32xf32>,
    return
  }
  func.func @transform_0(%arg0: i32) -> (i32, i32) {
    %c0_i32 = arith.constant 0 : i32
    %c0_i32_0 = arith.constant 0 : i32
    return %arg0, %c0_i32 : i32, i32
  }
  func.func @transform_1(%arg0: i32) -> (i32, i32) {
    %c0_i32 = arith.constant 0 : i32
    %c0_i32_0 = arith.constant 0 : i32
    return %arg0, %c0_i32 : i32, i32
  }
  func.func @transform_2(%arg0: i32) -> (i32, i32) {
    %c0_i32 = arith.constant 0 : i32
    %c0_i32_0 = arith.constant 0 : i32
    %c0_i32_1 = arith.constant 0 : i32
    return %c0_i32, %c0_i32_0 : i32, i32
  }
  func.func @transform_3(%arg0: i32) -> (i32, i32) {
    %c0_i32 = arith.constant 0 : i32
    %c0_i32_0 = arith.constant 0 : i32
    %c0_i32_1 = arith.constant 0 : i32
    return %c0_i32, %c0_i32_0 : i32, i32
  }
  func.func @transform_4(%arg0: i32) -> (i32, i32) {
    %c0_i32 = arith.constant 0 : i32
    %c0_i32_0 = arith.constant 0 : i32
    %c0_i32_1 = arith.constant 0 : i32
    return %c0_i32, %c0_i32_0 : i32, i32
  }
  func.func @transform_5(%arg0: i32) -> (i32, i32) {
    %c0_i32 = arith.constant 0 : i32
    %c0_i32_0 = arith.constant 0 : i32
    %c0_i32_1 = arith.constant 0 : i32
    return %c0_i32, %c0_i32_0 : i32, i32
  }
  func.func @transform_6(%arg0: i32) -> (i32, i32) {
    %c0_i32 = arith.constant 0 : i32
    %c0_i32_0 = arith.constant 0 : i32
    return %arg0, %c0_i32 : i32, i32
  }
}

</mosaic_0001>

<llo_original>
// kernel: multitower_edge_forward.1
$region0: #{multitower_edge_forward.1}
  #allocation0 [shape = 'u32[]', space=smem, size = 0x4, offset = 0x4, fixed_abs, tag = 'smem constant byte address 0x4 - core index']
  #allocation1 [shape = 'u32[144,128]{1,0:T(1,128)}', space=vmem, size = 0x12000, scoped, tag = 'internal scratch']
  %s0 = inlined_call_operand.vmem [shape: f32[4096,16], index: 0, kind: input, shape index: {}]
  %s1 = inlined_call_operand.vmem [shape: s32[4096,1], index: 1, kind: input, shape index: {}]
  %s2 = inlined_call_operand.vmem [shape: bf16[16,128], index: 2, kind: input, shape index: {}]
  %s3 = inlined_call_operand.vmem [shape: f32[1,128], index: 3, kind: input, shape index: {}]
  %s4 = inlined_call_operand.vmem [shape: bf16[128,128], index: 4, kind: input, shape index: {}]
  %s5 = inlined_call_operand.vmem [shape: bf16[128,32], index: 5, kind: input, shape index: {}]
  %s6 = inlined_call_operand.vmem [shape: f32[4096,32], index: 6, kind: output, shape index: {}]
  %s7 = sld [smem:[#allocation0]]
  $region57: #{multitower_edge_forward.1} parent=0
    _
  %s9 = ssub.s32 1, %s7
  %s10 = scalar_select 0, %s9, %s7
  loop: start=0, step=1, limit=6
  $region2: #{multitower_edge_forward.1} parent=0 // loop_pre_header
    _
  $region3: #{multitower_edge_forward.1} parent=0 // loop_header
    %s12 = sphi 0, %s16
    %p13 = scmp.ge.s32.totalorder %s12, 6
    %s22 = sphi 0, %s24
    %s25 = sphi 0, %s22
    %s26 = sphi 0, %s25
    %s42 = sphi 0, %s26
    %s48 = sphi 0, %s50
    %s51 = sphi 0, %s48
    %s52 = sphi 0, %s51
    %s68 = sphi 0, %s52
    %s72 = sphi 0, %s72
    %s74 = sphi 0, %s72
    %s75 = sphi 0, %s74
    %s89 = sphi 0, %s75
    %s93 = sphi 0, %s93
    %s95 = sphi 0, %s93
    %s96 = sphi 0, %s95
    %s110 = sphi 0, %s96
    %s114 = sphi 0, %s114
    %s116 = sphi 0, %s114
    %s117 = sphi 0, %s116
    %s131 = sphi 0, %s117
    %s135 = sphi 0, %s135
    %s137 = sphi 0, %s135
    %s138 = sphi 0, %s137
    %s152 = sphi 0, %s138
    %s158 = sphi 0, %s160
    %s161 = sphi 0, %s158
    %s162 = sphi 0, %s161
    %s178 = sphi 0, %s162
  $region4: #{multitower_edge_forward.1} parent=0 // loop_header_branch
    %15 = sbr.rel (%p13) target = $region8
  $region5: #{multitower_edge_forward.1} parent=0 // loop_body
    %s17 = ssub.s32 %s12, 1
    %s18 = ssub.s32 %s12, 2
    %s19 = sadd.s32 %s12, 1
    %s20 = ssub.s32 %s12, %s19
    %p21 = scmp.eq.s32.totalorder %s20, 0
    %s23 = sadd.s32 %s22, 1
    %s24 = scalar_select %p21, %s22, %s23
    %p27 = pneg %p21
    %p28 = scmp.eq.s32.totalorder %s12, 3
    %p29 = por %p27, %p28
    %p30 = scmp.ne.s32.totalorder %s22, %s25
    %p31 = scmp.eq.s32.totalorder %s12, 0
    %p32 = por %p30, %p31
    %p33 = scmp.ne.s32.totalorder %s22, %s25
    %p34 = scmp.eq.s32.totalorder %s17, 3
    %p35 = por %p33, %p34
    %p36 = scmp.ne.s32.totalorder %s25, %s26
    %p37 = scmp.eq.s32.totalorder %s17, 0
    %p38 = por %p36, %p37
    %p39 = scmp.ne.s32.totalorder %s25, %s26
    %p40 = scmp.eq.s32.totalorder %s18, 3
    %p41 = por %p39, %p40
    %p43 = scmp.ne.s32.totalorder %s26, %s42
    %p44 = scmp.eq.s32.totalorder %s18, 0
    %p45 = por %p43, %p44
    %s46 = ssub.s32 %s12, %s19
    %p47 = scmp.eq.s32.totalorder %s46, 0
    %s49 = sadd.s32 %s48, 1
    %s50 = scalar_select %p47, %s48, %s49
    %p53 = pneg %p47
    %p54 = scmp.eq.s32.totalorder %s12, 3
    %p55 = por %p53, %p54
    %p56 = scmp.ne.s32.totalorder %s48, %s51
    %p57 = scmp.eq.s32.totalorder %s12, 0
    %p58 = por %p56, %p57
    %p59 = scmp.ne.s32.totalorder %s48, %s51
    %p60 = scmp.eq.s32.totalorder %s17, 3
    %p61 = por %p59, %p60
    %p62 = scmp.ne.s32.totalorder %s51, %s52
    %p63 = scmp.eq.s32.totalorder %s17, 0
    %p64 = por %p62, %p63
    %p65 = scmp.ne.s32.totalorder %s51, %s52
    %p66 = scmp.eq.s32.totalorder %s18, 3
    %p67 = por %p65, %p66
    %p69 = scmp.ne.s32.totalorder %s52, %s68
    %p70 = scmp.eq.s32.totalorder %s18, 0
    %p71 = por %p69, %p70
    %s73 = sadd.s32 %s72, 1
    %p76 = scmp.eq.s32.totalorder %s12, 3
    %p77 = scmp.ne.s32.totalorder %s72, %s74
    %p78 = scmp.eq.s32.totalorder %s12, 0
    %p79 = por %p77, %p78
    %p80 = scmp.ne.s32.totalorder %s72, %s74
    %p81 = scmp.eq.s32.totalorder %s17, 3
    %p82 = por %p80, %p81
    %p83 = scmp.ne.s32.totalorder %s74, %s75
    %p84 = scmp.eq.s32.totalorder %s17, 0
    %p85 = por %p83, %p84
    %p86 = scmp.ne.s32.totalorder %s74, %s75
    %p87 = scmp.eq.s32.totalorder %s18, 3
    %p88 = por %p86, %p87
    %p90 = scmp.ne.s32.totalorder %s75, %s89
    %p91 = scmp.eq.s32.totalorder %s18, 0
    %p92 = por %p90, %p91
    %s94 = sadd.s32 %s93, 1
    %p97 = scmp.eq.s32.totalorder %s12, 3
    %p98 = scmp.ne.s32.totalorder %s93, %s95
    %p99 = scmp.eq.s32.totalorder %s12, 0
    %p100 = por %p98, %p99
    %p101 = scmp.ne.s32.totalorder %s93, %s95
    %p102 = scmp.eq.s32.totalorder %s17, 3
    %p103 = por %p101, %p102
    %p104 = scmp.ne.s32.totalorder %s95, %s96
    %p105 = scmp.eq.s32.totalorder %s17, 0
    %p106 = por %p104, %p105
    %p107 = scmp.ne.s32.totalorder %s95, %s96
    %p108 = scmp.eq.s32.totalorder %s18, 3
    %p109 = por %p107, %p108
    %p111 = scmp.ne.s32.totalorder %s96, %s110
    %p112 = scmp.eq.s32.totalorder %s18, 0
    %p113 = por %p111, %p112
    %s115 = sadd.s32 %s114, 1
    %p118 = scmp.eq.s32.totalorder %s12, 3
    %p119 = scmp.ne.s32.totalorder %s114, %s116
    %p120 = scmp.eq.s32.totalorder %s12, 0
    %p121 = por %p119, %p120
    %p122 = scmp.ne.s32.totalorder %s114, %s116
    %p123 = scmp.eq.s32.totalorder %s17, 3
    %p124 = por %p122, %p123
    %p125 = scmp.ne.s32.totalorder %s116, %s117
    %p126 = scmp.eq.s32.totalorder %s17, 0
    %p127 = por %p125, %p126
    %p128 = scmp.ne.s32.totalorder %s116, %s117
    %p129 = scmp.eq.s32.totalorder %s18, 3
    %p130 = por %p128, %p129
    %p132 = scmp.ne.s32.totalorder %s117, %s131
    %p133 = scmp.eq.s32.totalorder %s18, 0
    %p134 = por %p132, %p133
    %s136 = sadd.s32 %s135, 1
    %p139 = scmp.eq.s32.totalorder %s12, 3
    %p140 = scmp.ne.s32.totalorder %s135, %s137
    %p141 = scmp.eq.s32.totalorder %s12, 0
    %p142 = por %p140, %p141
    %p143 = scmp.ne.s32.totalorder %s135, %s137
    %p144 = scmp.eq.s32.totalorder %s17, 3
    %p145 = por %p143, %p144
    %p146 = scmp.ne.s32.totalorder %s137, %s138
    %p147 = scmp.eq.s32.totalorder %s17, 0
    %p148 = por %p146, %p147
    %p149 = scmp.ne.s32.totalorder %s137, %s138
    %p150 = scmp.eq.s32.totalorder %s18, 3
    %p151 = por %p149, %p150
    %p153 = scmp.ne.s32.totalorder %s138, %s152
    %p154 = scmp.eq.s32.totalorder %s18, 0
    %p155 = por %p153, %p154
    %s156 = ssub.s32 %s12, %s19
    %p157 = scmp.eq.s32.totalorder %s156, 0
    %s159 = sadd.s32 %s158, 1
    %s160 = scalar_select %p157, %s158, %s159
    %p163 = pneg %p157
    %p164 = scmp.eq.s32.totalorder %s12, 3
    %p165 = por %p163, %p164
    %p166 = scmp.ne.s32.totalorder %s158, %s161
    %p167 = scmp.eq.s32.totalorder %s12, 0
    %p168 = por %p166, %p167
    %p169 = scmp.ne.s32.totalorder %s158, %s161
    %p170 = scmp.eq.s32.totalorder %s17, 3
    %p171 = por %p169, %p170
    %p172 = scmp.ne.s32.totalorder %s161, %s162
    %p173 = scmp.eq.s32.totalorder %s17, 0
    %p174 = por %p172, %p173
    %p175 = scmp.ne.s32.totalorder %s161, %s162
    %p176 = scmp.eq.s32.totalorder %s18, 3
    %p177 = por %p175, %p176
    %p179 = scmp.ne.s32.totalorder %s162, %s178
    %p180 = scmp.eq.s32.totalorder %s18, 0
    %p181 = por %p179, %p180
    %p182 = scmp.le.s32.totalorder 1, %s12
    %p183 = scmp.lt.s32.totalorder %s12, 5
    %p184 = pnand %p182, %p183
    %p185 = pneg %p184
    // Predicated region
    $region9: #{multitower_edge_forward.1} parent=5 // pred_check
      _
    $region10: #{multitower_edge_forward.1} parent=5 // pred_check_branch
      %187 = sbr.rel (%p184) target = $region12
    $region11: #{multitower_edge_forward.1} parent=5 // pred_region
      %s188 = ssub.s32 %s12, 1
      // Predicated region
      $region13: #{multitower_edge_forward.1} parent=11 // pred_check
        %p189 = pneg %p85
      $region14: #{multitower_edge_forward.1} parent=11 // pred_check_branch
        %191 = sbr.rel (%p189) target = $region16
      $region15: #{multitower_edge_forward.1} parent=11 // pred_region
        _
      $region16: #{multitower_edge_forward.1} parent=11 // pred_fallthru
        _
      // Predicated region
      $region17: #{multitower_edge_forward.1} parent=11 // pred_check
        %p192 = pneg %p106
      $region18: #{multitower_edge_forward.1} parent=11 // pred_check_branch
        %194 = sbr.rel (%p192) target = $region20
      $region19: #{multitower_edge_forward.1} parent=11 // pred_region
        _
      $region20: #{multitower_edge_forward.1} parent=11 // pred_fallthru
        _
      // Predicated region
      $region21: #{multitower_edge_forward.1} parent=11 // pred_check
        %p195 = pneg %p127
      $region22: #{multitower_edge_forward.1} parent=11 // pred_check_branch
        %197 = sbr.rel (%p195) target = $region24
      $region23: #{multitower_edge_forward.1} parent=11 // pred_region
        _
      $region24: #{multitower_edge_forward.1} parent=11 // pred_fallthru
        _
      // Predicated region
      $region25: #{multitower_edge_forward.1} parent=11 // pred_check
        %p198 = pneg %p148
      $region26: #{multitower_edge_forward.1} parent=11 // pred_check_branch
        %200 = sbr.rel (%p198) target = $region28
      $region27: #{multitower_edge_forward.1} parent=11 // pred_region
        _
      $region28: #{multitower_edge_forward.1} parent=11 // pred_fallthru
        _
    $region12: #{multitower_edge_forward.1} parent=5 // pred_fallthru
      _
    %p201 = scmp.lt.s32.totalorder %s12, 4
    // Predicated region
    $region29: #{multitower_edge_forward.1} parent=5 // pred_check
      %p202 = pneg %p201
    $region30: #{multitower_edge_forward.1} parent=5 // pred_check_branch
      %204 = sbr.rel (%p202) target = $region32
    $region31: #{multitower_edge_forward.1} parent=5 // pred_region
      // Predicated region
      $region33: #{multitower_edge_forward.1} parent=31 // pred_check
        %p205 = pneg %p32
      $region34: #{multitower_edge_forward.1} parent=31 // pred_check_branch
        %207 = sbr.rel (%p205) target = $region36
      $region35: #{multitower_edge_forward.1} parent=31 // pred_region
        %s208 = smul.u32 128, %s12
        %p209 = scmp.lt.s32.totalorder %s208, 511
        %s210 = scalar_select %p209, %s208, 511
        %s211 = smul.addr %s210, 8
        %s212 = scalar_lea.vmem %s0, %s211
        %s213 = smul.u32 128, %s12
      $region36: #{multitower_edge_forward.1} parent=31 // pred_fallthru
        _
      // Predicated region
      $region37: #{multitower_edge_forward.1} parent=31 // pred_check
        %p214 = pneg %p58
      $region38: #{multitower_edge_forward.1} parent=31 // pred_check_branch
        %216 = sbr.rel (%p214) target = $region40
      $region39: #{multitower_edge_forward.1} parent=31 // pred_region
        %s217 = smul.u32 128, %s12
        %p218 = scmp.lt.s32.totalorder %s217, 511
        %s219 = scalar_select %p218, %s217, 511
        %s220 = smul.addr %s219, 8
        %s221 = scalar_lea.vmem %s1, %s220
        %s222 = smul.u32 128, %s12
      $region40: #{multitower_edge_forward.1} parent=31 // pred_fallthru
        _
    $region32: #{multitower_edge_forward.1} parent=5 // pred_fallthru
      _
    %p223 = scmp.le.s32.totalorder 1, %s12
    %p224 = scmp.lt.s32.totalorder %s12, 5
    %p225 = pnand %p223, %p224
    %p226 = pneg %p225
    // Predicated region
    $region41: #{multitower_edge_forward.1} parent=5 // pred_check
      _
    $region42: #{multitower_edge_forward.1} parent=5 // pred_check_branch
      %228 = sbr.rel (%p225) target = $region44
    $region43: #{multitower_edge_forward.1} parent=5 // pred_region
      %s229 = ssub.s32 %s12, 1
      %s230 = smul.u32 128, %s17
      %p231 = scmp.lt.s32.totalorder %s230, 511
      %s232 = scalar_select %p231, %s230, 511
      %s233 = smul.addr %s232, 8
      %s234 = scalar_lea.vmem %s0, %s233
      %p235 = pneg %p38
      %p236 = pneg %p35
      %s237 = smul.u32 128, %s17
      %p238 = scmp.lt.s32.totalorder %s237, 511
      %s239 = scalar_select %p238, %s237, 511
      %s240 = smul.addr %s239, 8
      %s241 = scalar_lea.vmem %s1, %s240
      %p242 = pneg %p64
      %p243 = pneg %p61
      %p244 = pneg %p85
      %p245 = pneg %p82
      %p246 = pneg %p106
      %p247 = pneg %p103
      %p248 = pneg %p127
      %p249 = pneg %p124
      %p250 = pneg %p148
      %p251 = pneg %p145
      %p252 = pneg %p174
      %p253 = pneg %p171
      %s254 = smul.u32 128, %s17
      %p255 = scmp.lt.s32.totalorder %s254, 511
      %s256 = scalar_select %p255, %s254, 511
      %s257 = smul.addr %s256, 8
      %s258 = scalar_lea.vmem %s6, %s257
      %s259 = smul.u32 128, %s17
      %p260 = scmp.lt.s32.totalorder %s259, 511
      %s261 = scalar_select %p260, %s259, 511
      %s262 = smul.addr %s261, 8
      %s263 = scalar_lea.vmem %s0, %s262
      %s264 = smul.u32 128, %s17
      %s265 = smul.u32 128, %s17
      %p266 = scmp.lt.s32.totalorder %s265, 511
      %s267 = scalar_select %p266, %s265, 511
      %s268 = smul.addr %s267, 8
      %s269 = scalar_lea.vmem %s1, %s268
      %s270 = smul.u32 128, %s17
      %s271 = smul.u32 128, %s17
      %p272 = scmp.lt.s32.totalorder %s271, 511
      %s273 = scalar_select %p272, %s271, 511
      %s274 = smul.addr %s273, 8
      %s275 = scalar_lea.vmem %s6, %s274
      %s276 = smul.u32 128, %s17
      %v278 = vld [vmem:[%s263] sm:$0xff]
      %v279 = vld [vmem:[%s263 + $0x8] sm:$0xff]
      %v280 = vld [vmem:[%s263 + $0x10] sm:$0xff]
      %v281 = vld [vmem:[%s263 + $0x18] sm:$0xff]
      %v282 = vld [vmem:[%s263 + $0x20] sm:$0xff]
      %v283 = vld [vmem:[%s263 + $0x28] sm:$0xff]
      %v284 = vld [vmem:[%s263 + $0x30] sm:$0xff]
      %v285 = vld [vmem:[%s263 + $0x38] sm:$0xff]
      %v286 = vld [vmem:[%s263 + $0x40] sm:$0xff]
      %v287 = vld [vmem:[%s263 + $0x48] sm:$0xff]
      %v288 = vld [vmem:[%s263 + $0x50] sm:$0xff]
      %v289 = vld [vmem:[%s263 + $0x58] sm:$0xff]
      %v290 = vld [vmem:[%s263 + $0x60] sm:$0xff]
      %v291 = vld [vmem:[%s263 + $0x68] sm:$0xff]
      %v292 = vld [vmem:[%s263 + $0x70] sm:$0xff]
      %v293 = vld [vmem:[%s263 + $0x78] sm:$0xff]
      %v294 = vld [vmem:[%s263 + $0x80] sm:$0xff]
      %v295 = vld [vmem:[%s263 + $0x88] sm:$0xff]
      %v296 = vld [vmem:[%s263 + $0x90] sm:$0xff]
      %v297 = vld [vmem:[%s263 + $0x98] sm:$0xff]
      %v298 = vld [vmem:[%s263 + $0xa0] sm:$0xff]
      %v299 = vld [vmem:[%s263 + $0xa8] sm:$0xff]
      %v300 = vld [vmem:[%s263 + $0xb0] sm:$0xff]
      %v301 = vld [vmem:[%s263 + $0xb8] sm:$0xff]
      %v302 = vld [vmem:[%s263 + $0xc0] sm:$0xff]
      %v303 = vld [vmem:[%s263 + $0xc8] sm:$0xff]
      %v304 = vld [vmem:[%s263 + $0xd0] sm:$0xff]
      %v305 = vld [vmem:[%s263 + $0xd8] sm:$0xff]
      %v306 = vld [vmem:[%s263 + $0xe0] sm:$0xff]
      %v307 = vld [vmem:[%s263 + $0xe8] sm:$0xff]
      %v308 = vld [vmem:[%s263 + $0xf0] sm:$0xff]
      %v309 = vld [vmem:[%s263 + $0xf8] sm:$0xff]
      %v310 = vld [vmem:[%s263 + $0x100] sm:$0xff]
      %v311 = vld [vmem:[%s263 + $0x108] sm:$0xff]
      %v312 = vld [vmem:[%s263 + $0x110] sm:$0xff]
      %v313 = vld [vmem:[%s263 + $0x118] sm:$0xff]
      %v314 = vld [vmem:[%s263 + $0x120] sm:$0xff]
      %v315 = vld [vmem:[%s263 + $0x128] sm:$0xff]
      %v316 = vld [vmem:[%s263 + $0x130] sm:$0xff]
      %v317 = vld [vmem:[%s263 + $0x138] sm:$0xff]
      %v318 = vld [vmem:[%s263 + $0x140] sm:$0xff]
      %v319 = vld [vmem:[%s263 + $0x148] sm:$0xff]
      %v320 = vld [vmem:[%s263 + $0x150] sm:$0xff]
      %v321 = vld [vmem:[%s263 + $0x158] sm:$0xff]
      %v322 = vld [vmem:[%s263 + $0x160] sm:$0xff]
      %v323 = vld [vmem:[%s263 + $0x168] sm:$0xff]
      %v324 = vld [vmem:[%s263 + $0x170] sm:$0xff]
      %v325 = vld [vmem:[%s263 + $0x178] sm:$0xff]
      %v326 = vld [vmem:[%s263 + $0x180] sm:$0xff]
      %v327 = vld [vmem:[%s263 + $0x188] sm:$0xff]
      %v328 = vld [vmem:[%s263 + $0x190] sm:$0xff]
      %v329 = vld [vmem:[%s263 + $0x198] sm:$0xff]
      %v330 = vld [vmem:[%s263 + $0x1a0] sm:$0xff]
      %v331 = vld [vmem:[%s263 + $0x1a8] sm:$0xff]
      %v332 = vld [vmem:[%s263 + $0x1b0] sm:$0xff]
      %v333 = vld [vmem:[%s263 + $0x1b8] sm:$0xff]
      %v334 = vld [vmem:[%s263 + $0x1c0] sm:$0xff]
      %v335 = vld [vmem:[%s263 + $0x1c8] sm:$0xff]
      %v336 = vld [vmem:[%s263 + $0x1d0] sm:$0xff]
      %v337 = vld [vmem:[%s263 + $0x1d8] sm:$0xff]
      %v338 = vld [vmem:[%s263 + $0x1e0] sm:$0xff]
      %v339 = vld [vmem:[%s263 + $0x1e8] sm:$0xff]
      %v340 = vld [vmem:[%s263 + $0x1f0] sm:$0xff]
      %v341 = vld [vmem:[%s263 + $0x1f8] sm:$0xff]
      %v342 = vld [vmem:[%s263 + $0x200] sm:$0xff]
      %v343 = vld [vmem:[%s263 + $0x208] sm:$0xff]
      %v344 = vld [vmem:[%s263 + $0x210] sm:$0xff]
      %v345 = vld [vmem:[%s263 + $0x218] sm:$0xff]
      %v346 = vld [vmem:[%s263 + $0x220] sm:$0xff]
      %v347 = vld [vmem:[%s263 + $0x228] sm:$0xff]
      %v348 = vld [vmem:[%s263 + $0x230] sm:$0xff]
      %v349 = vld [vmem:[%s263 + $0x238] sm:$0xff]
      %v350 = vld [vmem:[%s263 + $0x240] sm:$0xff]
      %v351 = vld [vmem:[%s263 + $0x248] sm:$0xff]
      %v352 = vld [vmem:[%s263 + $0x250] sm:$0xff]
      %v353 = vld [vmem:[%s263 + $0x258] sm:$0xff]
      %v354 = vld [vmem:[%s263 + $0x260] sm:$0xff]
      %v355 = vld [vmem:[%s263 + $0x268] sm:$0xff]
      %v356 = vld [vmem:[%s263 + $0x270] sm:$0xff]
      %v357 = vld [vmem:[%s263 + $0x278] sm:$0xff]
      %v358 = vld [vmem:[%s263 + $0x280] sm:$0xff]
      %v359 = vld [vmem:[%s263 + $0x288] sm:$0xff]
      %v360 = vld [vmem:[%s263 + $0x290] sm:$0xff]
      %v361 = vld [vmem:[%s263 + $0x298] sm:$0xff]
      %v362 = vld [vmem:[%s263 + $0x2a0] sm:$0xff]
      %v363 = vld [vmem:[%s263 + $0x2a8] sm:$0xff]
      %v364 = vld [vmem:[%s263 + $0x2b0] sm:$0xff]
      %v365 = vld [vmem:[%s263 + $0x2b8] sm:$0xff]
      %v366 = vld [vmem:[%s263 + $0x2c0] sm:$0xff]
      %v367 = vld [vmem:[%s263 + $0x2c8] sm:$0xff]
      %v368 = vld [vmem:[%s263 + $0x2d0] sm:$0xff]
      %v369 = vld [vmem:[%s263 + $0x2d8] sm:$0xff]
      %v370 = vld [vmem:[%s263 + $0x2e0] sm:$0xff]
      %v371 = vld [vmem:[%s263 + $0x2e8] sm:$0xff]
      %v372 = vld [vmem:[%s263 + $0x2f0] sm:$0xff]
      %v373 = vld [vmem:[%s263 + $0x2f8] sm:$0xff]
      %v374 = vld [vmem:[%s263 + $0x300] sm:$0xff]
      %v375 = vld [vmem:[%s263 + $0x308] sm:$0xff]
      %v376 = vld [vmem:[%s263 + $0x310] sm:$0xff]
      %v377 = vld [vmem:[%s263 + $0x318] sm:$0xff]
      %v378 = vld [vmem:[%s263 + $0x320] sm:$0xff]
      %v379 = vld [vmem:[%s263 + $0x328] sm:$0xff]
      %v380 = vld [vmem:[%s263 + $0x330] sm:$0xff]
      %v381 = vld [vmem:[%s263 + $0x338] sm:$0xff]
      %v382 = vld [vmem:[%s263 + $0x340] sm:$0xff]
      %v383 = vld [vmem:[%s263 + $0x348] sm:$0xff]
      %v384 = vld [vmem:[%s263 + $0x350] sm:$0xff]
      %v385 = vld [vmem:[%s263 + $0x358] sm:$0xff]
      %v386 = vld [vmem:[%s263 + $0x360] sm:$0xff]
      %v387 = vld [vmem:[%s263 + $0x368] sm:$0xff]
      %v388 = vld [vmem:[%s263 + $0x370] sm:$0xff]
      %v389 = vld [vmem:[%s263 + $0x378] sm:$0xff]
      %v390 = vld [vmem:[%s263 + $0x380] sm:$0xff]
      %v391 = vld [vmem:[%s263 + $0x388] sm:$0xff]
      %v392 = vld [vmem:[%s263 + $0x390] sm:$0xff]
      %v393 = vld [vmem:[%s263 + $0x398] sm:$0xff]
      %v394 = vld [vmem:[%s263 + $0x3a0] sm:$0xff]
      %v395 = vld [vmem:[%s263 + $0x3a8] sm:$0xff]
      %v396 = vld [vmem:[%s263 + $0x3b0] sm:$0xff]
      %v397 = vld [vmem:[%s263 + $0x3b8] sm:$0xff]
      %v398 = vld [vmem:[%s263 + $0x3c0] sm:$0xff]
      %v399 = vld [vmem:[%s263 + $0x3c8] sm:$0xff]
      %v400 = vld [vmem:[%s263 + $0x3d0] sm:$0xff]
      %v401 = vld [vmem:[%s263 + $0x3d8] sm:$0xff]
      %v402 = vld [vmem:[%s263 + $0x3e0] sm:$0xff]
      %v403 = vld [vmem:[%s263 + $0x3e8] sm:$0xff]
      %v404 = vld [vmem:[%s263 + $0x3f0] sm:$0xff]
      %v405 = vld [vmem:[%s263 + $0x3f8] sm:$0xff]
      %v406 = vpack.c.bf16 %v279, %v278
      %v407 = vpack.c.bf16 %v281, %v280
      %v408 = vpack.c.bf16 %v283, %v282
      %v409 = vpack.c.bf16 %v285, %v284
      %v410 = vpack.c.bf16 %v287, %v286
      %v411 = vpack.c.bf16 %v289, %v288
      %v412 = vpack.c.bf16 %v291, %v290
      %v413 = vpack.c.bf16 %v293, %v292
      %v414 = vpack.c.bf16 %v295, %v294
      %v415 = vpack.c.bf16 %v297, %v296
      %v416 = vpack.c.bf16 %v299, %v298
      %v417 = vpack.c.bf16 %v301, %v300
      %v418 = vpack.c.bf16 %v303, %v302
      %v419 = vpack.c.bf16 %v305, %v304
      %v420 = vpack.c.bf16 %v307, %v306
      %v421 = vpack.c.bf16 %v309, %v308
      %v422 = vpack.c.bf16 %v311, %v310
      %v423 = vpack.c.bf16 %v313, %v312
      %v424 = vpack.c.bf16 %v315, %v314
      %v425 = vpack.c.bf16 %v317, %v316
      %v426 = vpack.c.bf16 %v319, %v318
      %v427 = vpack.c.bf16 %v321, %v320
      %v428 = vpack.c.bf16 %v323, %v322
      %v429 = vpack.c.bf16 %v325, %v324
      %v430 = vpack.c.bf16 %v327, %v326
      %v431 = vpack.c.bf16 %v329, %v328
      %v432 = vpack.c.bf16 %v331, %v330
      %v433 = vpack.c.bf16 %v333, %v332
      %v434 = vpack.c.bf16 %v335, %v334
      %v435 = vpack.c.bf16 %v337, %v336
      %v436 = vpack.c.bf16 %v339, %v338
      %v437 = vpack.c.bf16 %v341, %v340
      %v438 = vpack.c.bf16 %v343, %v342
      %v439 = vpack.c.bf16 %v345, %v344
      %v440 = vpack.c.bf16 %v347, %v346
      %v441 = vpack.c.bf16 %v349, %v348
      %v442 = vpack.c.bf16 %v351, %v350
      %v443 = vpack.c.bf16 %v353, %v352
      %v444 = vpack.c.bf16 %v355, %v354
      %v445 = vpack.c.bf16 %v357, %v356
      %v446 = vpack.c.bf16 %v359, %v358
      %v447 = vpack.c.bf16 %v361, %v360
      %v448 = vpack.c.bf16 %v363, %v362
      %v449 = vpack.c.bf16 %v365, %v364
      %v450 = vpack.c.bf16 %v367, %v366
      %v451 = vpack.c.bf16 %v369, %v368
      %v452 = vpack.c.bf16 %v371, %v370
      %v453 = vpack.c.bf16 %v373, %v372
      %v454 = vpack.c.bf16 %v375, %v374
      %v455 = vpack.c.bf16 %v377, %v376
      %v456 = vpack.c.bf16 %v379, %v378
      %v457 = vpack.c.bf16 %v381, %v380
      %v458 = vpack.c.bf16 %v383, %v382
      %v459 = vpack.c.bf16 %v385, %v384
      %v460 = vpack.c.bf16 %v387, %v386
      %v461 = vpack.c.bf16 %v389, %v388
      %v462 = vpack.c.bf16 %v391, %v390
      %v463 = vpack.c.bf16 %v393, %v392
      %v464 = vpack.c.bf16 %v395, %v394
      %v465 = vpack.c.bf16 %v397, %v396
      %v466 = vpack.c.bf16 %v399, %v398
      %v467 = vpack.c.bf16 %v401, %v400
      %v468 = vpack.c.bf16 %v403, %v402
      %v469 = vpack.c.bf16 %v405, %v404
      %v470 = vld [vmem:[%s2] sm:$0xf]
      %v471 = vld [vmem:[%s2 + $0x4] sm:$0xf]
      %v472 = vld [vmem:[%s3] sm:$0x1]
      %v474 = vlaneseq
      %v475 = vshrl.u32 %v474, 7
      %v476 = vsub.s32 0, %v475
      %v477 = vrot.slane %v472, %v476
      %v481 = vunpack.c.l.b16 %v470
      %v482 = vunpack.c.l.b16 %v471
      %v483 = vpack.c.b16 %v482, %v481
      %vm485 = vcmask 130048
      %v487 = vsel %vm485, %v406, 0
      %v490 = vsel %vm485, %v407, 0
      %v493 = vsel %vm485, %v408, 0
      %v496 = vsel %vm485, %v409, 0
      %v499 = vsel %vm485, %v410, 0
      %v502 = vsel %vm485, %v411, 0
      %v505 = vsel %vm485, %v412, 0
      %v508 = vsel %vm485, %v413, 0
      %v511 = vsel %vm485, %v414, 0
      %v514 = vsel %vm485, %v415, 0
      %v517 = vsel %vm485, %v416, 0
      %v520 = vsel %vm485, %v417, 0
      %v523 = vsel %vm485, %v418, 0
      %v526 = vsel %vm485, %v419, 0
      %v529 = vsel %vm485, %v420, 0
      %v532 = vsel %vm485, %v421, 0
      %v535 = vsel %vm485, %v422, 0
      %v538 = vsel %vm485, %v423, 0
      %v541 = vsel %vm485, %v424, 0
      %v544 = vsel %vm485, %v425, 0
      %v547 = vsel %vm485, %v426, 0
      %v550 = vsel %vm485, %v427, 0
      %v553 = vsel %vm485, %v428, 0
      %v556 = vsel %vm485, %v429, 0
      %v559 = vsel %vm485, %v430, 0
      %v562 = vsel %vm485, %v431, 0
      %v565 = vsel %vm485, %v432, 0
      %v568 = vsel %vm485, %v433, 0
      %v571 = vsel %vm485, %v434, 0
      %v574 = vsel %vm485, %v435, 0
      %v577 = vsel %vm485, %v436, 0
      %v580 = vsel %vm485, %v437, 0
      %v583 = vsel %vm485, %v438, 0
      %v586 = vsel %vm485, %v439, 0
      %v589 = vsel %vm485, %v440, 0
      %v592 = vsel %vm485, %v441, 0
      %v595 = vsel %vm485, %v442, 0
      %v598 = vsel %vm485, %v443, 0
      %v601 = vsel %vm485, %v444, 0
      %v604 = vsel %vm485, %v445, 0
      %v607 = vsel %vm485, %v446, 0
      %v610 = vsel %vm485, %v447, 0
      %v613 = vsel %vm485, %v448, 0
      %v616 = vsel %vm485, %v449, 0
      %v619 = vsel %vm485, %v450, 0
      %v622 = vsel %vm485, %v451, 0
      %v625 = vsel %vm485, %v452, 0
      %v628 = vsel %vm485, %v453, 0
      %v631 = vsel %vm485, %v454, 0
      %v634 = vsel %vm485, %v455, 0
      %v637 = vsel %vm485, %v456, 0
      %v640 = vsel %vm485, %v457, 0
      %v643 = vsel %vm485, %v458, 0
      %v646 = vsel %vm485, %v459, 0
      %v649 = vsel %vm485, %v460, 0
      %v652 = vsel %vm485, %v461, 0
      %v655 = vsel %vm485, %v462, 0
      %v658 = vsel %vm485, %v463, 0
      %v661 = vsel %vm485, %v464, 0
      %v664 = vsel %vm485, %v465, 0
      %v667 = vsel %vm485, %v466, 0
      %v670 = vsel %vm485, %v467, 0
      %v673 = vsel %vm485, %v468, 0
      %v676 = vsel %vm485, %v469, 0
      %678 = vmatprep.subr.bf16.mxu0 0
      %679 = vmatpush1.bf16.msra.mxu0 %v483
      %680 = vmatprep.subr.bf16.mxu0 0
      %681 = vmatpush1.bf16.msra.mxu0 0
      %682 = vmatprep.subr.bf16.mxu0 0
      %683 = vmatpush1.bf16.msra.mxu0 0
      %684 = vmatprep.subr.bf16.mxu0 0
      %685 = vmatpush1.bf16.msra.mxu0 0
      %686 = vmatprep.subr.bf16.mxu0 0
      %687 = vmatpush1.bf16.msra.mxu0 0
      %688 = vmatprep.subr.bf16.mxu0 0
      %689 = vmatpush1.bf16.msra.mxu0 0
      %690 = vmatprep.subr.bf16.mxu0 0
      %691 = vmatpush1.bf16.msra.mxu0 0
      %692 = vmatprep.subr.bf16.mxu0 0
      %693 = vmatpush1.bf16.msra.mxu0 0
      %694 = vmatprep.subr.bf16.mxu0 0
      %695 = vmatpush1.bf16.msra.mxu0 0
      %696 = vmatprep.subr.bf16.mxu0 0
      %697 = vmatpush1.bf16.msra.mxu0 0
      %698 = vmatprep.subr.bf16.mxu0 0
      %699 = vmatpush1.bf16.msra.mxu0 0
      %700 = vmatprep.subr.bf16.mxu0 0
      %701 = vmatpush1.bf16.msra.mxu0 0
      %702 = vmatprep.subr.bf16.mxu0 0
      %703 = vmatpush1.bf16.msra.mxu0 0
      %704 = vmatprep.subr.bf16.mxu0 0
      %705 = vmatpush1.bf16.msra.mxu0 0
      %706 = vmatprep.subr.bf16.mxu0 0
      %707 = vmatpush1.bf16.msra.mxu0 0
      %708 = vmatprep.subr.bf16.mxu0 0
      %709 = vmatpush1.bf16.msra.mxu0 0
      %710 = vmatprep.mubr.bf16.mxu0 0
      %711 = vmatmul.mubr.bf16.gmra.mrb[0].mxu0 %v487
      %v712 = vpop.f32.mrb[0].mxu0
      %v713 = vadd.f32 %v477, %v712
      %v714 = vpop.f32.mrb[0].mxu0
      %v715 = vpop.f32.mrb[0].mxu0
      %v716 = vadd.f32 %v477, %v715
      %v717 = vpop.f32.mrb[0].mxu0
      %718 = vmatprep.mubr.bf16.mxu0 0
      %719 = vmatmul.mubr.bf16.gmra.mrb[0].mxu0 %v490
      %v720 = vpop.f32.mrb[0].mxu0
      %v721 = vadd.f32 %v477, %v720
      %v722 = vpop.f32.mrb[0].mxu0
      %v723 = vpop.f32.mrb[0].mxu0
      %v724 = vadd.f32 %v477, %v723
      %v725 = vpop.f32.mrb[0].mxu0
      %726 = vmatprep.mubr.bf16.mxu0 0
      %727 = vmatmul.mubr.bf16.gmra.mrb[0].mxu0 %v493
      %v728 = vpop.f32.mrb[0].mxu0
      %v729 = vadd.f32 %v477, %v728
      %v730 = vpop.f32.mrb[0].mxu0
      %v731 = vpop.f32.mrb[0].mxu0
      %v732 = vadd.f32 %v477, %v731
      %v733 = vpop.f32.mrb[0].mxu0
      %734 = vmatprep.mubr.bf16.mxu0 0
      %735 = vmatmul.mubr.bf16.gmra.mrb[0].mxu0 %v496
      %v736 = vpop.f32.mrb[0].mxu0
      %v737 = vadd.f32 %v477, %v736
      %v738 = vpop.f32.mrb[0].mxu0
      %v739 = vpop.f32.mrb[0].mxu0
      %v740 = vadd.f32 %v477, %v739
      %v741 = vpop.f32.mrb[0].mxu0
      %742 = vmatprep.mubr.bf16.mxu0 0
      %743 = vmatmul.mubr.bf16.gmra.mrb[0].mxu0 %v499
      %v744 = vpop.f32.mrb[0].mxu0
      %v745 = vadd.f32 %v477, %v744
      %v746 = vpop.f32.mrb[0].mxu0
      %v747 = vpop.f32.mrb[0].mxu0
      %v748 = vadd.f32 %v477, %v747
      %v749 = vpop.f32.mrb[0].mxu0
      %750 = vmatprep.mubr.bf16.mxu0 0
      %751 = vmatmul.mubr.bf16.gmra.mrb[0].mxu0 %v502
      %v752 = vpop.f32.mrb[0].mxu0
      %v753 = vadd.f32 %v477, %v752
      %v754 = vpop.f32.mrb[0].mxu0
      %v755 = vpop.f32.mrb[0].mxu0
      %v756 = vadd.f32 %v477, %v755
      %v757 = vpop.f32.mrb[0].mxu0
      %758 = vmatprep.mubr.bf16.mxu0 0
      %759 = vmatmul.mubr.bf16.gmra.mrb[0].mxu0 %v505
      %v760 = vpop.f32.mrb[0].mxu0
      %v761 = vadd.f32 %v477, %v760
      %v762 = vpop.f32.mrb[0].mxu0
      %v763 = vpop.f32.mrb[0].mxu0
      %v764 = vadd.f32 %v477, %v763
      %v765 = vpop.f32.mrb[0].mxu0
      %766 = vmatprep.mubr.bf16.mxu0 0
      %767 = vmatmul.mubr.bf16.gmra.mrb[0].mxu0 %v508
      %v768 = vpop.f32.mrb[0].mxu0
      %v769 = vadd.f32 %v477, %v768
      %v770 = vpop.f32.mrb[0].mxu0
      %v771 = vpop.f32.mrb[0].mxu0
      %v772 = vadd.f32 %v477, %v771
      %v773 = vpop.f32.mrb[0].mxu0
      %774 = vmatprep.mubr.bf16.mxu0 0
      %775 = vmatmul.mubr.bf16.gmra.mrb[0].mxu0 %v511
      %v776 = vpop.f32.mrb[0].mxu0
      %v777 = vadd.f32 %v477, %v776
      %v778 = vpop.f32.mrb[0].mxu0
      %v779 = vpop.f32.mrb[0].mxu0
      %v780 = vadd.f32 %v477, %v779
      %v781 = vpop.f32.mrb[0].mxu0
      %782 = vmatprep.mubr.bf16.mxu0 0
      %783 = vmatmul.mubr.bf16.gmra.mrb[0].mxu0 %v514
      %v784 = vpop.f32.mrb[0].mxu0
      %v785 = vadd.f32 %v477, %v784
      %v786 = vpop.f32.mrb[0].mxu0
      %v787 = vpop.f32.mrb[0].mxu0
      %v788 = vadd.f32 %v477, %v787
      %v789 = vpop.f32.mrb[0].mxu0
      %790 = vmatprep.mubr.bf16.mxu0 0
      %791 = vmatmul.mubr.bf16.gmra.mrb[0].mxu0 %v517
      %v792 = vpop.f32.mrb[0].mxu0
      %v793 = vadd.f32 %v477, %v792
      %v794 = vpop.f32.mrb[0].mxu0
      %v795 = vpop.f32.mrb[0].mxu0
      %v796 = vadd.f32 %v477, %v795
      %v797 = vpop.f32.mrb[0].mxu0
      %798 = vmatprep.mubr.bf16.mxu0 0
      %799 = vmatmul.mubr.bf16.gmra.mrb[0].mxu0 %v520
      %v800 = vpop.f32.mrb[0].mxu0
      %v801 = vadd.f32 %v477, %v800
      %v802 = vpop.f32.mrb[0].mxu0
      %v803 = vpop.f32.mrb[0].mxu0
      %v804 = vadd.f32 %v477, %v803
      %v805 = vpop.f32.mrb[0].mxu0
      %806 = vmatprep.mubr.bf16.mxu0 0
      %807 = vmatmul.mubr.bf16.gmra.mrb[0].mxu0 %v523
      %v808 = vpop.f32.mrb[0].mxu0
      %v809 = vadd.f32 %v477, %v808
      %v810 = vpop.f32.mrb[0].mxu0
      %v811 = vpop.f32.mrb[0].mxu0
      %v812 = vadd.f32 %v477, %v811
      %v813 = vpop.f32.mrb[0].mxu0
      %814 = vmatprep.mubr.bf16.mxu0 0
      %815 = vmatmul.mubr.bf16.gmra.mrb[0].mxu0 %v526
      %v816 = vpop.f32.mrb[0].mxu0
      %v817 = vadd.f32 %v477, %v816
      %v818 = vpop.f32.mrb[0].mxu0
      %v819 = vpop.f32.mrb[0].mxu0
      %v820 = vadd.f32 %v477, %v819
      %v821 = vpop.f32.mrb[0].mxu0
      %822 = vmatprep.mubr.bf16.mxu0 0
      %823 = vmatmul.mubr.bf16.gmra.mrb[0].mxu0 %v529
      %v824 = vpop.f32.mrb[0].mxu0
      %v825 = vadd.f32 %v477, %v824
      %v826 = vpop.f32.mrb[0].mxu0
      %v827 = vpop.f32.mrb[0].mxu0
      %v828 = vadd.f32 %v477, %v827
      %v829 = vpop.f32.mrb[0].mxu0
      %830 = vmatprep.mubr.bf16.mxu0 0
      %831 = vmatmul.mubr.bf16.gmra.mrb[0].mxu0 %v532
      %v832 = vpop.f32.mrb[0].mxu0
      %v833 = vadd.f32 %v477, %v832
      %v834 = vpop.f32.mrb[0].mxu0
      %v835 = vpop.f32.mrb[0].mxu0
      %v836 = vadd.f32 %v477, %v835
      %v837 = vpop.f32.mrb[0].mxu0
      %838 = vmatprep.mubr.bf16.mxu0 0
      %839 = vmatmul.mubr.bf16.gmra.mrb[0].mxu0 %v535
      %v840 = vpop.f32.mrb[0].mxu0
      %v841 = vadd.f32 %v477, %v840
      %v842 = vpop.f32.mrb[0].mxu0
      %v843 = vpop.f32.mrb[0].mxu0
      %v844 = vadd.f32 %v477, %v843
      %v845 = vpop.f32.mrb[0].mxu0
      %846 = vmatprep.mubr.bf16.mxu0 0
      %847 = vmatmul.mubr.bf16.gmra.mrb[0].mxu0 %v538
      %v848 = vpop.f32.mrb[0].mxu0
      %v849 = vadd.f32 %v477, %v848
      %v850 = vpop.f32.mrb[0].mxu0
      %v851 = vpop.f32.mrb[0].mxu0
      %v852 = vadd.f32 %v477, %v851
      %v853 = vpop.f32.mrb[0].mxu0
      %854 = vmatprep.mubr.bf16.mxu0 0
      %855 = vmatmul.mubr.bf16.gmra.mrb[0].mxu0 %v541
      %v856 = vpop.f32.mrb[0].mxu0
      %v857 = vadd.f32 %v477, %v856
      %v858 = vpop.f32.mrb[0].mxu0
      %v859 = vpop.f32.mrb[0].mxu0
      %v860 = vadd.f32 %v477, %v859
      %v861 = vpop.f32.mrb[0].mxu0
      %862 = vmatprep.mubr.bf16.mxu0 0
      %863 = vmatmul.mubr.bf16.gmra.mrb[0].mxu0 %v544
      %v864 = vpop.f32.mrb[0].mxu0
      %v865 = vadd.f32 %v477, %v864
      %v866 = vpop.f32.mrb[0].mxu0
      %v867 = vpop.f32.mrb[0].mxu0
      %v868 = vadd.f32 %v477, %v867
      %v869 = vpop.f32.mrb[0].mxu0
      %870 = vmatprep.mubr.bf16.mxu0 0
      %871 = vmatmul.mubr.bf16.gmra.mrb[0].mxu0 %v547
      %v872 = vpop.f32.mrb[0].mxu0
      %v873 = vadd.f32 %v477, %v872
      %v874 = vpop.f32.mrb[0].mxu0
      %v875 = vpop.f32.mrb[0].mxu0
      %v876 = vadd.f32 %v477, %v875
      %v877 = vpop.f32.mrb[0].mxu0
      %878 = vmatprep.mubr.bf16.mxu0 0
      %879 = vmatmul.mubr.bf16.gmra.mrb[0].mxu0 %v550
      %v880 = vpop.f32.mrb[0].mxu0
      %v881 = vadd.f32 %v477, %v880
      %v882 = vpop.f32.mrb[0].mxu0
      %v883 = vpop.f32.mrb[0].mxu0
      %v884 = vadd.f32 %v477, %v883
      %v885 = vpop.f32.mrb[0].mxu0
      %886 = vmatprep.mubr.bf16.mxu0 0
      %887 = vmatmul.mubr.bf16.gmra.mrb[0].mxu0 %v553
      %v888 = vpop.f32.mrb[0].mxu0
      %v889 = vadd.f32 %v477, %v888
      %v890 = vpop.f32.mrb[0].mxu0
      %v891 = vpop.f32.mrb[0].mxu0
      %v892 = vadd.f32 %v477, %v891
      %v893 = vpop.f32.mrb[0].mxu0
      %894 = vmatprep.mubr.bf16.mxu0 0
      %895 = vmatmul.mubr.bf16.gmra.mrb[0].mxu0 %v556
      %v896 = vpop.f32.mrb[0].mxu0
      %v897 = vadd.f32 %v477, %v896
      %v898 = vpop.f32.mrb[0].mxu0
      %v899 = vpop.f32.mrb[0].mxu0
      %v900 = vadd.f32 %v477, %v899
      %v901 = vpop.f32.mrb[0].mxu0
      %902 = vmatprep.mubr.bf16.mxu0 0
      %903 = vmatmul.mubr.bf16.gmra.mrb[0].mxu0 %v559
      %v904 = vpop.f32.mrb[0].mxu0
      %v905 = vadd.f32 %v477, %v904
      %v906 = vpop.f32.mrb[0].mxu0
      %v907 = vpop.f32.mrb[0].mxu0
      %v908 = vadd.f32 %v477, %v907
      %v909 = vpop.f32.mrb[0].mxu0
      %910 = vmatprep.mubr.bf16.mxu0 0
      %911 = vmatmul.mubr.bf16.gmra.mrb[0].mxu0 %v562
      %v912 = vpop.f32.mrb[0].mxu0
      %v913 = vadd.f32 %v477, %v912
      %v914 = vpop.f32.mrb[0].mxu0
      %v915 = vpop.f32.mrb[0].mxu0
      %v916 = vadd.f32 %v477, %v915
      %v917 = vpop.f32.mrb[0].mxu0
      %918 = vmatprep.mubr.bf16.mxu0 0
      %919 = vmatmul.mubr.bf16.gmra.mrb[0].mxu0 %v565
      %v920 = vpop.f32.mrb[0].mxu0
      %v921 = vadd.f32 %v477, %v920
      %v922 = vpop.f32.mrb[0].mxu0
      %v923 = vpop.f32.mrb[0].mxu0
      %v924 = vadd.f32 %v477, %v923
      %v925 = vpop.f32.mrb[0].mxu0
      %926 = vmatprep.mubr.bf16.mxu0 0
      %927 = vmatmul.mubr.bf16.gmra.mrb[0].mxu0 %v568
      %v928 = vpop.f32.mrb[0].mxu0
      %v929 = vadd.f32 %v477, %v928
      %v930 = vpop.f32.mrb[0].mxu0
      %v931 = vpop.f32.mrb[0].mxu0
      %v932 = vadd.f32 %v477, %v931
      %v933 = vpop.f32.mrb[0].mxu0
      %934 = vmatprep.mubr.bf16.mxu0 0
      %935 = vmatmul.mubr.bf16.gmra.mrb[0].mxu0 %v571
      %v936 = vpop.f32.mrb[0].mxu0
      %v937 = vadd.f32 %v477, %v936
      %v938 = vpop.f32.mrb[0].mxu0
      %v939 = vpop.f32.mrb[0].mxu0
      %v940 = vadd.f32 %v477, %v939
      %v941 = vpop.f32.mrb[0].mxu0
      %942 = vmatprep.mubr.bf16.mxu0 0
      %943 = vmatmul.mubr.bf16.gmra.mrb[0].mxu0 %v574
      %v944 = vpop.f32.mrb[0].mxu0
      %v945 = vadd.f32 %v477, %v944
      %v946 = vpop.f32.mrb[0].mxu0
      %v947 = vpop.f32.mrb[0].mxu0
      %v948 = vadd.f32 %v477, %v947
      %v949 = vpop.f32.mrb[0].mxu0
      %950 = vmatprep.mubr.bf16.mxu0 0
      %951 = vmatmul.mubr.bf16.gmra.mrb[0].mxu0 %v577
      %v952 = vpop.f32.mrb[0].mxu0
      %v953 = vadd.f32 %v477, %v952
      %v954 = vpop.f32.mrb[0].mxu0
      %v955 = vpop.f32.mrb[0].mxu0
      %v956 = vadd.f32 %v477, %v955
      %v957 = vpop.f32.mrb[0].mxu0
      %958 = vmatprep.mubr.bf16.mxu0 0
      %959 = vmatmul.mubr.bf16.gmra.mrb[0].mxu0 %v580
      %v960 = vpop.f32.mrb[0].mxu0
      %v961 = vadd.f32 %v477, %v960
      %v962 = vpop.f32.mrb[0].mxu0
      %v963 = vpop.f32.mrb[0].mxu0
      %v964 = vadd.f32 %v477, %v963
      %v965 = vpop.f32.mrb[0].mxu0
      %966 = vmatprep.mubr.bf16.mxu0 0
      %967 = vmatmul.mubr.bf16.gmra.mrb[0].mxu0 %v583
      %v968 = vpop.f32.mrb[0].mxu0
      %v969 = vadd.f32 %v477, %v968
      %v970 = vpop.f32.mrb[0].mxu0
      %v971 = vpop.f32.mrb[0].mxu0
      %v972 = vadd.f32 %v477, %v971
      %v973 = vpop.f32.mrb[0].mxu0
      %974 = vmatprep.mubr.bf16.mxu0 0
      %975 = vmatmul.mubr.bf16.gmra.mrb[0].mxu0 %v586
      %v976 = vpop.f32.mrb[0].mxu0
      %v977 = vadd.f32 %v477, %v976
      %v978 = vpop.f32.mrb[0].mxu0
      %v979 = vpop.f32.mrb[0].mxu0
      %v980 = vadd.f32 %v477, %v979
      %v981 = vpop.f32.mrb[0].mxu0
      %982 = vmatprep.mubr.bf16.mxu0 0
      %983 = vmatmul.mubr.bf16.gmra.mrb[0].mxu0 %v589
      %v984 = vpop.f32.mrb[0].mxu0
      %v985 = vadd.f32 %v477, %v984
      %v986 = vpop.f32.mrb[0].mxu0
      %v987 = vpop.f32.mrb[0].mxu0
      %v988 = vadd.f32 %v477, %v987
      %v989 = vpop.f32.mrb[0].mxu0
      %990 = vmatprep.mubr.bf16.mxu0 0
      %991 = vmatmul.mubr.bf16.gmra.mrb[0].mxu0 %v592
      %v992 = vpop.f32.mrb[0].mxu0
      %v993 = vadd.f32 %v477, %v992
      %v994 = vpop.f32.mrb[0].mxu0
      %v995 = vpop.f32.mrb[0].mxu0
      %v996 = vadd.f32 %v477, %v995
      %v997 = vpop.f32.mrb[0].mxu0
      %998 = vmatprep.mubr.bf16.mxu0 0
      %999 = vmatmul.mubr.bf16.gmra.mrb[0].mxu0 %v595
      %v1000 = vpop.f32.mrb[0].mxu0
      %v1001 = vadd.f32 %v477, %v1000
      %v1002 = vpop.f32.mrb[0].mxu0
      %v1003 = vpop.f32.mrb[0].mxu0
      %v1004 = vadd.f32 %v477, %v1003
      %v1005 = vpop.f32.mrb[0].mxu0
      %1006 = vmatprep.mubr.bf16.mxu0 0
      %1007 = vmatmul.mubr.bf16.gmra.mrb[0].mxu0 %v598
      %v1008 = vpop.f32.mrb[0].mxu0
      %v1009 = vadd.f32 %v477, %v1008
      %v1010 = vpop.f32.mrb[0].mxu0
      %v1011 = vpop.f32.mrb[0].mxu0
      %v1012 = vadd.f32 %v477, %v1011
      %v1013 = vpop.f32.mrb[0].mxu0
      %1014 = vmatprep.mubr.bf16.mxu0 0
      %1015 = vmatmul.mubr.bf16.gmra.mrb[0].mxu0 %v601
      %v1016 = vpop.f32.mrb[0].mxu0
      %v1017 = vadd.f32 %v477, %v1016
      %v1018 = vpop.f32.mrb[0].mxu0
      %v1019 = vpop.f32.mrb[0].mxu0
      %v1020 = vadd.f32 %v477, %v1019
      %v1021 = vpop.f32.mrb[0].mxu0
      %1022 = vmatprep.mubr.bf16.mxu0 0
      %1023 = vmatmul.mubr.bf16.gmra.mrb[0].mxu0 %v604
      %v1024 = vpop.f32.mrb[0].mxu0
      %v1025 = vadd.f32 %v477, %v1024
      %v1026 = vpop.f32.mrb[0].mxu0
      %v1027 = vpop.f32.mrb[0].mxu0
      %v1028 = vadd.f32 %v477, %v1027
      %v1029 = vpop.f32.mrb[0].mxu0
      %1030 = vmatprep.mubr.bf16.mxu0 0
      %1031 = vmatmul.mubr.bf16.gmra.mrb[0].mxu0 %v607
      %v1032 = vpop.f32.mrb[0].mxu0
      %v1033 = vadd.f32 %v477, %v1032
      %v1034 = vpop.f32.mrb[0].mxu0
      %v1035 = vpop.f32.mrb[0].mxu0
      %v1036 = vadd.f32 %v477, %v1035
      %v1037 = vpop.f32.mrb[0].mxu0
      %1038 = vmatprep.mubr.bf16.mxu0 0
      %1039 = vmatmul.mubr.bf16.gmra.mrb[0].mxu0 %v610
      %v1040 = vpop.f32.mrb[0].mxu0
      %v1041 = vadd.f32 %v477, %v1040
      %v1042 = vpop.f32.mrb[0].mxu0
      %v1043 = vpop.f32.mrb[0].mxu0
      %v1044 = vadd.f32 %v477, %v1043
      %v1045 = vpop.f32.mrb[0].mxu0
      %1046 = vmatprep.mubr.bf16.mxu0 0
      %1047 = vmatmul.mubr.bf16.gmra.mrb[0].mxu0 %v613
      %v1048 = vpop.f32.mrb[0].mxu0
      %v1049 = vadd.f32 %v477, %v1048
      %v1050 = vpop.f32.mrb[0].mxu0
      %v1051 = vpop.f32.mrb[0].mxu0
      %v1052 = vadd.f32 %v477, %v1051
      %v1053 = vpop.f32.mrb[0].mxu0
      %1054 = vmatprep.mubr.bf16.mxu0 0
      %1055 = vmatmul.mubr.bf16.gmra.mrb[0].mxu0 %v616
      %v1056 = vpop.f32.mrb[0].mxu0
      %v1057 = vadd.f32 %v477, %v1056
      %v1058 = vpop.f32.mrb[0].mxu0
      %v1059 = vpop.f32.mrb[0].mxu0
      %v1060 = vadd.f32 %v477, %v1059
      %v1061 = vpop.f32.mrb[0].mxu0
      %1062 = vmatprep.mubr.bf16.mxu0 0
      %1063 = vmatmul.mubr.bf16.gmra.mrb[0].mxu0 %v619
      %v1064 = vpop.f32.mrb[0].mxu0
      %v1065 = vadd.f32 %v477, %v1064
      %v1066 = vpop.f32.mrb[0].mxu0
      %v1067 = vpop.f32.mrb[0].mxu0
      %v1068 = vadd.f32 %v477, %v1067
      %v1069 = vpop.f32.mrb[0].mxu0
      %1070 = vmatprep.mubr.bf16.mxu0 0
      %1071 = vmatmul.mubr.bf16.gmra.mrb[0].mxu0 %v622
      %v1072 = vpop.f32.mrb[0].mxu0
      %v1073 = vadd.f32 %v477, %v1072
      %v1074 = vpop.f32.mrb[0].mxu0
      %v1075 = vpop.f32.mrb[0].mxu0
      %v1076 = vadd.f32 %v477, %v1075
      %v1077 = vpop.f32.mrb[0].mxu0
      %1078 = vmatprep.mubr.bf16.mxu0 0
      %1079 = vmatmul.mubr.bf16.gmra.mrb[0].mxu0 %v625
      %v1080 = vpop.f32.mrb[0].mxu0
      %v1081 = vadd.f32 %v477, %v1080
      %v1082 = vpop.f32.mrb[0].mxu0
      %v1083 = vpop.f32.mrb[0].mxu0
      %v1084 = vadd.f32 %v477, %v1083
      %v1085 = vpop.f32.mrb[0].mxu0
      %1086 = vmatprep.mubr.bf16.mxu0 0
      %1087 = vmatmul.mubr.bf16.gmra.mrb[0].mxu0 %v628
      %v1088 = vpop.f32.mrb[0].mxu0
      %v1089 = vadd.f32 %v477, %v1088
      %v1090 = vpop.f32.mrb[0].mxu0
      %v1091 = vpop.f32.mrb[0].mxu0
      %v1092 = vadd.f32 %v477, %v1091
      %v1093 = vpop.f32.mrb[0].mxu0
      %1094 = vmatprep.mubr.bf16.mxu0 0
      %1095 = vmatmul.mubr.bf16.gmra.mrb[0].mxu0 %v631
      %v1096 = vpop.f32.mrb[0].mxu0
      %v1097 = vadd.f32 %v477, %v1096
      %v1098 = vpop.f32.mrb[0].mxu0
      %v1099 = vpop.f32.mrb[0].mxu0
      %v1100 = vadd.f32 %v477, %v1099
      %v1101 = vpop.f32.mrb[0].mxu0
      %1102 = vmatprep.mubr.bf16.mxu0 0
      %1103 = vmatmul.mubr.bf16.gmra.mrb[0].mxu0 %v634
      %v1104 = vpop.f32.mrb[0].mxu0
      %v1105 = vadd.f32 %v477, %v1104
      %v1106 = vpop.f32.mrb[0].mxu0
      %v1107 = vpop.f32.mrb[0].mxu0
      %v1108 = vadd.f32 %v477, %v1107
      %v1109 = vpop.f32.mrb[0].mxu0
      %1110 = vmatprep.mubr.bf16.mxu0 0
      %1111 = vmatmul.mubr.bf16.gmra.mrb[0].mxu0 %v637
      %v1112 = vpop.f32.mrb[0].mxu0
      %v1113 = vadd.f32 %v477, %v1112
      %v1114 = vpop.f32.mrb[0].mxu0
      %v1115 = vpop.f32.mrb[0].mxu0
      %v1116 = vadd.f32 %v477, %v1115
      %v1117 = vpop.f32.mrb[0].mxu0
      %1118 = vmatprep.mubr.bf16.mxu0 0
      %1119 = vmatmul.mubr.bf16.gmra.mrb[0].mxu0 %v640
      %v1120 = vpop.f32.mrb[0].mxu0
      %v1121 = vadd.f32 %v477, %v1120
      %v1122 = vpop.f32.mrb[0].mxu0
      %v1123 = vpop.f32.mrb[0].mxu0
      %v1124 = vadd.f32 %v477, %v1123
      %v1125 = vpop.f32.mrb[0].mxu0
      %1126 = vmatprep.mubr.bf16.mxu0 0
      %1127 = vmatmul.mubr.bf16.gmra.mrb[0].mxu0 %v643
      %v1128 = vpop.f32.mrb[0].mxu0
      %v1129 = vadd.f32 %v477, %v1128
      %v1130 = vpop.f32.mrb[0].mxu0
      %v1131 = vpop.f32.mrb[0].mxu0
      %v1132 = vadd.f32 %v477, %v1131
      %v1133 = vpop.f32.mrb[0].mxu0
      %1134 = vmatprep.mubr.bf16.mxu0 0
      %1135 = vmatmul.mubr.bf16.gmra.mrb[0].mxu0 %v646
      %v1136 = vpop.f32.mrb[0].mxu0
      %v1137 = vadd.f32 %v477, %v1136
      %v1138 = vpop.f32.mrb[0].mxu0
      %v1139 = vpop.f32.mrb[0].mxu0
      %v1140 = vadd.f32 %v477, %v1139
      %v1141 = vpop.f32.mrb[0].mxu0
      %1142 = vmatprep.mubr.bf16.mxu0 0
      %1143 = vmatmul.mubr.bf16.gmra.mrb[0].mxu0 %v649
      %v1144 = vpop.f32.mrb[0].mxu0
      %v1145 = vadd.f32 %v477, %v1144
      %v1146 = vpop.f32.mrb[0].mxu0
      %v1147 = vpop.f32.mrb[0].mxu0
      %v1148 = vadd.f32 %v477, %v1147
      %v1149 = vpop.f32.mrb[0].mxu0
      %1150 = vmatprep.mubr.bf16.mxu0 0
      %1151 = vmatmul.mubr.bf16.gmra.mrb[0].mxu0 %v652
      %v1152 = vpop.f32.mrb[0].mxu0
      %v1153 = vadd.f32 %v477, %v1152
      %v1154 = vpop.f32.mrb[0].mxu0
      %v1155 = vpop.f32.mrb[0].mxu0
      %v1156 = vadd.f32 %v477, %v1155
      %v1157 = vpop.f32.mrb[0].mxu0
      %1158 = vmatprep.mubr.bf16.mxu0 0
      %1159 = vmatmul.mubr.bf16.gmra.mrb[0].mxu0 %v655
      %v1160 = vpop.f32.mrb[0].mxu0
      %v1161 = vadd.f32 %v477, %v1160
      %v1162 = vpop.f32.mrb[0].mxu0
      %v1163 = vpop.f32.mrb[0].mxu0
      %v1164 = vadd.f32 %v477, %v1163
      %v1165 = vpop.f32.mrb[0].mxu0
      %1166 = vmatprep.mubr.bf16.mxu0 0
      %1167 = vmatmul.mubr.bf16.gmra.mrb[0].mxu0 %v658
      %v1168 = vpop.f32.mrb[0].mxu0
      %v1169 = vadd.f32 %v477, %v1168
      %v1170 = vpop.f32.mrb[0].mxu0
      %v1171 = vpop.f32.mrb[0].mxu0
      %v1172 = vadd.f32 %v477, %v1171
      %v1173 = vpop.f32.mrb[0].mxu0
      %1174 = vmatprep.mubr.bf16.mxu0 0
      %1175 = vmatmul.mubr.bf16.gmra.mrb[0].mxu0 %v661
      %v1176 = vpop.f32.mrb[0].mxu0
      %v1177 = vadd.f32 %v477, %v1176
      %v1178 = vpop.f32.mrb[0].mxu0
      %v1179 = vpop.f32.mrb[0].mxu0
      %v1180 = vadd.f32 %v477, %v1179
      %v1181 = vpop.f32.mrb[0].mxu0
      %1182 = vmatprep.mubr.bf16.mxu0 0
      %1183 = vmatmul.mubr.bf16.gmra.mrb[0].mxu0 %v664
      %v1184 = vpop.f32.mrb[0].mxu0
      %v1185 = vadd.f32 %v477, %v1184
      %v1186 = vpop.f32.mrb[0].mxu0
      %v1187 = vpop.f32.mrb[0].mxu0
      %v1188 = vadd.f32 %v477, %v1187
      %v1189 = vpop.f32.mrb[0].mxu0
      %1190 = vmatprep.mubr.bf16.mxu0 0
      %1191 = vmatmul.mubr.bf16.gmra.mrb[0].mxu0 %v667
      %v1192 = vpop.f32.mrb[0].mxu0
      %v1193 = vadd.f32 %v477, %v1192
      %v1194 = vpop.f32.mrb[0].mxu0
      %v1195 = vpop.f32.mrb[0].mxu0
      %v1196 = vadd.f32 %v477, %v1195
      %v1197 = vpop.f32.mrb[0].mxu0
      %1198 = vmatprep.mubr.bf16.mxu0 0
      %1199 = vmatmul.mubr.bf16.gmra.mrb[0].mxu0 %v670
      %v1200 = vpop.f32.mrb[0].mxu0
      %v1201 = vadd.f32 %v477, %v1200
      %v1202 = vpop.f32.mrb[0].mxu0
      %v1203 = vpop.f32.mrb[0].mxu0
      %v1204 = vadd.f32 %v477, %v1203
      %v1205 = vpop.f32.mrb[0].mxu0
      %1206 = vmatprep.mubr.bf16.mxu0 0
      %1207 = vmatmul.mubr.bf16.gmra.mrb[0].mxu0 %v673
      %v1208 = vpop.f32.mrb[0].mxu0
      %v1209 = vadd.f32 %v477, %v1208
      %v1210 = vpop.f32.mrb[0].mxu0
      %v1211 = vpop.f32.mrb[0].mxu0
      %v1212 = vadd.f32 %v477, %v1211
      %v1213 = vpop.f32.mrb[0].mxu0
      %1214 = vmatprep.mubr.bf16.mxu0 0
      %1215 = vmatmul.mubr.bf16.gmra.mrb[0].mxu0 %v676
      %v1216 = vpop.f32.mrb[0].mxu0
      %v1217 = vadd.f32 %v477, %v1216
      %v1218 = vpop.f32.mrb[0].mxu0
      %v1219 = vpop.f32.mrb[0].mxu0
      %v1220 = vadd.f32 %v477, %v1219
      %v1221 = vpop.f32.mrb[0].mxu0
      %1222 = vdwg.mxu0
      %v1223 = vmax.f32 %v713, 0.0
      %v1224 = vmax.f32 %v716, 0.0
      %v1225 = vmax.f32 %v721, 0.0
      %v1226 = vmax.f32 %v724, 0.0
      %v1227 = vmax.f32 %v729, 0.0
      %v1228 = vmax.f32 %v732, 0.0
      %v1229 = vmax.f32 %v737, 0.0
      %v1230 = vmax.f32 %v740, 0.0
      %v1231 = vmax.f32 %v745, 0.0
      %v1232 = vmax.f32 %v748, 0.0
      %v1233 = vmax.f32 %v753, 0.0
      %v1234 = vmax.f32 %v756, 0.0
      %v1235 = vmax.f32 %v761, 0.0
      %v1236 = vmax.f32 %v764, 0.0
      %v1237 = vmax.f32 %v769, 0.0
      %v1238 = vmax.f32 %v772, 0.0
      %v1239 = vmax.f32 %v777, 0.0
      %v1240 = vmax.f32 %v780, 0.0
      %v1241 = vmax.f32 %v785, 0.0
      %v1242 = vmax.f32 %v788, 0.0
      %v1243 = vmax.f32 %v793, 0.0
      %v1244 = vmax.f32 %v796, 0.0
      %v1245 = vmax.f32 %v801, 0.0
      %v1246 = vmax.f32 %v804, 0.0
      %v1247 = vmax.f32 %v809, 0.0
      %v1248 = vmax.f32 %v812, 0.0
      %v1249 = vmax.f32 %v817, 0.0
      %v1250 = vmax.f32 %v820, 0.0
      %v1251 = vmax.f32 %v825, 0.0
      %v1252 = vmax.f32 %v828, 0.0
      %v1253 = vmax.f32 %v833, 0.0
      %v1254 = vmax.f32 %v836, 0.0
      %v1255 = vmax.f32 %v841, 0.0
      %v1256 = vmax.f32 %v844, 0.0
      %v1257 = vmax.f32 %v849, 0.0
      %v1258 = vmax.f32 %v852, 0.0
      %v1259 = vmax.f32 %v857, 0.0
      %v1260 = vmax.f32 %v860, 0.0
      %v1261 = vmax.f32 %v865, 0.0
      %v1262 = vmax.f32 %v868, 0.0
      %v1263 = vmax.f32 %v873, 0.0
      %v1264 = vmax.f32 %v876, 0.0
      %v1265 = vmax.f32 %v881, 0.0
      %v1266 = vmax.f32 %v884, 0.0
      %v1267 = vmax.f32 %v889, 0.0
      %v1268 = vmax.f32 %v892, 0.0
      %v1269 = vmax.f32 %v897, 0.0
      %v1270 = vmax.f32 %v900, 0.0
      %v1271 = vmax.f32 %v905, 0.0
      %v1272 = vmax.f32 %v908, 0.0
      %v1273 = vmax.f32 %v913, 0.0
      %v1274 = vmax.f32 %v916, 0.0
      %v1275 = vmax.f32 %v921, 0.0
      %v1276 = vmax.f32 %v924, 0.0
      %v1277 = vmax.f32 %v929, 0.0
      %v1278 = vmax.f32 %v932, 0.0
      %v1279 = vmax.f32 %v937, 0.0
      %v1280 = vmax.f32 %v940, 0.0
      %v1281 = vmax.f32 %v945, 0.0
      %v1282 = vmax.f32 %v948, 0.0
      %v1283 = vmax.f32 %v953, 0.0
      %v1284 = vmax.f32 %v956, 0.0
      %v1285 = vmax.f32 %v961, 0.0
      %v1286 = vmax.f32 %v964, 0.0
      %v1287 = vmax.f32 %v969, 0.0
      %v1288 = vmax.f32 %v972, 0.0
      %v1289 = vmax.f32 %v977, 0.0
      %v1290 = vmax.f32 %v980, 0.0
      %v1291 = vmax.f32 %v985, 0.0
      %v1292 = vmax.f32 %v988, 0.0
      %v1293 = vmax.f32 %v993, 0.0
      %v1294 = vmax.f32 %v996, 0.0
      %v1295 = vmax.f32 %v1001, 0.0
      %v1296 = vmax.f32 %v1004, 0.0
      %v1297 = vmax.f32 %v1009, 0.0
      %v1298 = vmax.f32 %v1012, 0.0
      %v1299 = vmax.f32 %v1017, 0.0
      %v1300 = vmax.f32 %v1020, 0.0
      %v1301 = vmax.f32 %v1025, 0.0
      %v1302 = vmax.f32 %v1028, 0.0
      %v1303 = vmax.f32 %v1033, 0.0
      %v1304 = vmax.f32 %v1036, 0.0
      %v1305 = vmax.f32 %v1041, 0.0
      %v1306 = vmax.f32 %v1044, 0.0
      %v1307 = vmax.f32 %v1049, 0.0
      %v1308 = vmax.f32 %v1052, 0.0
      %v1309 = vmax.f32 %v1057, 0.0
      %v1310 = vmax.f32 %v1060, 0.0
      %v1311 = vmax.f32 %v1065, 0.0
      %v1312 = vmax.f32 %v1068, 0.0
      %v1313 = vmax.f32 %v1073, 0.0
      %v1314 = vmax.f32 %v1076, 0.0
      %v1315 = vmax.f32 %v1081, 0.0
      %v1316 = vmax.f32 %v1084, 0.0
      %v1317 = vmax.f32 %v1089, 0.0
      %v1318 = vmax.f32 %v1092, 0.0
      %v1319 = vmax.f32 %v1097, 0.0
      %v1320 = vmax.f32 %v1100, 0.0
      %v1321 = vmax.f32 %v1105, 0.0
      %v1322 = vmax.f32 %v1108, 0.0
      %v1323 = vmax.f32 %v1113, 0.0
      %v1324 = vmax.f32 %v1116, 0.0
      %v1325 = vmax.f32 %v1121, 0.0
      %v1326 = vmax.f32 %v1124, 0.0
      %v1327 = vmax.f32 %v1129, 0.0
      %v1328 = vmax.f32 %v1132, 0.0
      %v1329 = vmax.f32 %v1137, 0.0
      %v1330 = vmax.f32 %v1140, 0.0
      %v1331 = vmax.f32 %v1145, 0.0
      %v1332 = vmax.f32 %v1148, 0.0
      %v1333 = vmax.f32 %v1153, 0.0
      %v1334 = vmax.f32 %v1156, 0.0
      %v1335 = vmax.f32 %v1161, 0.0
      %v1336 = vmax.f32 %v1164, 0.0
      %v1337 = vmax.f32 %v1169, 0.0
      %v1338 = vmax.f32 %v1172, 0.0
      %v1339 = vmax.f32 %v1177, 0.0
      %v1340 = vmax.f32 %v1180, 0.0
      %v1341 = vmax.f32 %v1185, 0.0
      %v1342 = vmax.f32 %v1188, 0.0
      %v1343 = vmax.f32 %v1193, 0.0
      %v1344 = vmax.f32 %v1196, 0.0
      %v1345 = vmax.f32 %v1201, 0.0
      %v1346 = vmax.f32 %v1204, 0.0
      %v1347 = vmax.f32 %v1209, 0.0
      %v1348 = vmax.f32 %v1212, 0.0
      %v1349 = vmax.f32 %v1217, 0.0
      %v1350 = vmax.f32 %v1220, 0.0
      %v1351 = vlaneseq
      %v1352 = vand.u32 %v1351, 127
      %v1353 = vld [vmem:[%s269] sm:$0xff]
      %v1354 = vld [vmem:[%s269 + $0x8] sm:$0xff]
      %v1355 = vld [vmem:[%s269 + $0x10] sm:$0xff]
      %v1356 = vld [vmem:[%s269 + $0x18] sm:$0xff]
      %v1357 = vld [vmem:[%s269 + $0x20] sm:$0xff]
      %v1358 = vld [vmem:[%s269 + $0x28] sm:$0xff]
      %v1359 = vld [vmem:[%s269 + $0x30] sm:$0xff]
      %v1360 = vld [vmem:[%s269 + $0x38] sm:$0xff]
      %v1361 = vld [vmem:[%s269 + $0x40] sm:$0xff]
      %v1362 = vld [vmem:[%s269 + $0x48] sm:$0xff]
      %v1363 = vld [vmem:[%s269 + $0x50] sm:$0xff]
      %v1364 = vld [vmem:[%s269 + $0x58] sm:$0xff]
      %v1365 = vld [vmem:[%s269 + $0x60] sm:$0xff]
      %v1366 = vld [vmem:[%s269 + $0x68] sm:$0xff]
      %v1367 = vld [vmem:[%s269 + $0x70] sm:$0xff]
      %v1368 = vld [vmem:[%s269 + $0x78] sm:$0xff]
      %v1369 = vld [vmem:[%s269 + $0x80] sm:$0xff]
      %v1370 = vld [vmem:[%s269 + $0x88] sm:$0xff]
      %v1371 = vld [vmem:[%s269 + $0x90] sm:$0xff]
      %v1372 = vld [vmem:[%s269 + $0x98] sm:$0xff]
      %v1373 = vld [vmem:[%s269 + $0xa0] sm:$0xff]
      %v1374 = vld [vmem:[%s269 + $0xa8] sm:$0xff]
      %v1375 = vld [vmem:[%s269 + $0xb0] sm:$0xff]
      %v1376 = vld [vmem:[%s269 + $0xb8] sm:$0xff]
      %v1377 = vld [vmem:[%s269 + $0xc0] sm:$0xff]
      %v1378 = vld [vmem:[%s269 + $0xc8] sm:$0xff]
      %v1379 = vld [vmem:[%s269 + $0xd0] sm:$0xff]
      %v1380 = vld [vmem:[%s269 + $0xd8] sm:$0xff]
      %v1381 = vld [vmem:[%s269 + $0xe0] sm:$0xff]
      %v1382 = vld [vmem:[%s269 + $0xe8] sm:$0xff]
      %v1383 = vld [vmem:[%s269 + $0xf0] sm:$0xff]
      %v1384 = vld [vmem:[%s269 + $0xf8] sm:$0xff]
      %v1385 = vld [vmem:[%s269 + $0x100] sm:$0xff]
      %v1386 = vld [vmem:[%s269 + $0x108] sm:$0xff]
      %v1387 = vld [vmem:[%s269 + $0x110] sm:$0xff]
      %v1388 = vld [vmem:[%s269 + $0x118] sm:$0xff]
      %v1389 = vld [vmem:[%s269 + $0x120] sm:$0xff]
      %v1390 = vld [vmem:[%s269 + $0x128] sm:$0xff]
      %v1391 = vld [vmem:[%s269 + $0x130] sm:$0xff]
      %v1392 = vld [vmem:[%s269 + $0x138] sm:$0xff]
      %v1393 = vld [vmem:[%s269 + $0x140] sm:$0xff]
      %v1394 = vld [vmem:[%s269 + $0x148] sm:$0xff]
      %v1395 = vld [vmem:[%s269 + $0x150] sm:$0xff]
      %v1396 = vld [vmem:[%s269 + $0x158] sm:$0xff]
      %v1397 = vld [vmem:[%s269 + $0x160] sm:$0xff]
      %v1398 = vld [vmem:[%s269 + $0x168] sm:$0xff]
      %v1399 = vld [vmem:[%s269 + $0x170] sm:$0xff]
      %v1400 = vld [vmem:[%s269 + $0x178] sm:$0xff]
      %v1401 = vld [vmem:[%s269 + $0x180] sm:$0xff]
      %v1402 = vld [vmem:[%s269 + $0x188] sm:$0xff]
      %v1403 = vld [vmem:[%s269 + $0x190] sm:$0xff]
      %v1404 = vld [vmem:[%s269 + $0x198] sm:$0xff]
      %v1405 = vld [vmem:[%s269 + $0x1a0] sm:$0xff]
      %v1406 = vld [vmem:[%s269 + $0x1a8] sm:$0xff]
      %v1407 = vld [vmem:[%s269 + $0x1b0] sm:$0xff]
      %v1408 = vld [vmem:[%s269 + $0x1b8] sm:$0xff]
      %v1409 = vld [vmem:[%s269 + $0x1c0] sm:$0xff]
      %v1410 = vld [vmem:[%s269 + $0x1c8] sm:$0xff]
      %v1411 = vld [vmem:[%s269 + $0x1d0] sm:$0xff]
      %v1412 = vld [vmem:[%s269 + $0x1d8] sm:$0xff]
      %v1413 = vld [vmem:[%s269 + $0x1e0] sm:$0xff]
      %v1414 = vld [vmem:[%s269 + $0x1e8] sm:$0xff]
      %v1415 = vld [vmem:[%s269 + $0x1f0] sm:$0xff]
      %v1416 = vld [vmem:[%s269 + $0x1f8] sm:$0xff]
      %v1417 = vld [vmem:[%s269 + $0x200] sm:$0xff]
      %v1418 = vld [vmem:[%s269 + $0x208] sm:$0xff]
      %v1419 = vld [vmem:[%s269 + $0x210] sm:$0xff]
      %v1420 = vld [vmem:[%s269 + $0x218] sm:$0xff]
      %v1421 = vld [vmem:[%s269 + $0x220] sm:$0xff]
      %v1422 = vld [vmem:[%s269 + $0x228] sm:$0xff]
      %v1423 = vld [vmem:[%s269 + $0x230] sm:$0xff]
      %v1424 = vld [vmem:[%s269 + $0x238] sm:$0xff]
      %v1425 = vld [vmem:[%s269 + $0x240] sm:$0xff]
      %v1426 = vld [vmem:[%s269 + $0x248] sm:$0xff]
      %v1427 = vld [vmem:[%s269 + $0x250] sm:$0xff]
      %v1428 = vld [vmem:[%s269 + $0x258] sm:$0xff]
      %v1429 = vld [vmem:[%s269 + $0x260] sm:$0xff]
      %v1430 = vld [vmem:[%s269 + $0x268] sm:$0xff]
      %v1431 = vld [vmem:[%s269 + $0x270] sm:$0xff]
      %v1432 = vld [vmem:[%s269 + $0x278] sm:$0xff]
      %v1433 = vld [vmem:[%s269 + $0x280] sm:$0xff]
      %v1434 = vld [vmem:[%s269 + $0x288] sm:$0xff]
      %v1435 = vld [vmem:[%s269 + $0x290] sm:$0xff]
      %v1436 = vld [vmem:[%s269 + $0x298] sm:$0xff]
      %v1437 = vld [vmem:[%s269 + $0x2a0] sm:$0xff]
      %v1438 = vld [vmem:[%s269 + $0x2a8] sm:$0xff]
      %v1439 = vld [vmem:[%s269 + $0x2b0] sm:$0xff]
      %v1440 = vld [vmem:[%s269 + $0x2b8] sm:$0xff]
      %v1441 = vld [vmem:[%s269 + $0x2c0] sm:$0xff]
      %v1442 = vld [vmem:[%s269 + $0x2c8] sm:$0xff]
      %v1443 = vld [vmem:[%s269 + $0x2d0] sm:$0xff]
      %v1444 = vld [vmem:[%s269 + $0x2d8] sm:$0xff]
      %v1445 = vld [vmem:[%s269 + $0x2e0] sm:$0xff]
      %v1446 = vld [vmem:[%s269 + $0x2e8] sm:$0xff]
      %v1447 = vld [vmem:[%s269 + $0x2f0] sm:$0xff]
      %v1448 = vld [vmem:[%s269 + $0x2f8] sm:$0xff]
      %v1449 = vld [vmem:[%s269 + $0x300] sm:$0xff]
      %v1450 = vld [vmem:[%s269 + $0x308] sm:$0xff]
      %v1451 = vld [vmem:[%s269 + $0x310] sm:$0xff]
      %v1452 = vld [vmem:[%s269 + $0x318] sm:$0xff]
      %v1453 = vld [vmem:[%s269 + $0x320] sm:$0xff]
      %v1454 = vld [vmem:[%s269 + $0x328] sm:$0xff]
      %v1455 = vld [vmem:[%s269 + $0x330] sm:$0xff]
      %v1456 = vld [vmem:[%s269 + $0x338] sm:$0xff]
      %v1457 = vld [vmem:[%s269 + $0x340] sm:$0xff]
      %v1458 = vld [vmem:[%s269 + $0x348] sm:$0xff]
      %v1459 = vld [vmem:[%s269 + $0x350] sm:$0xff]
      %v1460 = vld [vmem:[%s269 + $0x358] sm:$0xff]
      %v1461 = vld [vmem:[%s269 + $0x360] sm:$0xff]
      %v1462 = vld [vmem:[%s269 + $0x368] sm:$0xff]
      %v1463 = vld [vmem:[%s269 + $0x370] sm:$0xff]
      %v1464 = vld [vmem:[%s269 + $0x378] sm:$0xff]
      %v1465 = vld [vmem:[%s269 + $0x380] sm:$0xff]
      %v1466 = vld [vmem:[%s269 + $0x388] sm:$0xff]
      %v1467 = vld [vmem:[%s269 + $0x390] sm:$0xff]
      %v1468 = vld [vmem:[%s269 + $0x398] sm:$0xff]
      %v1469 = vld [vmem:[%s269 + $0x3a0] sm:$0xff]
      %v1470 = vld [vmem:[%s269 + $0x3a8] sm:$0xff]
      %v1471 = vld [vmem:[%s269 + $0x3b0] sm:$0xff]
      %v1472 = vld [vmem:[%s269 + $0x3b8] sm:$0xff]
      %v1473 = vld [vmem:[%s269 + $0x3c0] sm:$0xff]
      %v1474 = vld [vmem:[%s269 + $0x3c8] sm:$0xff]
      %v1475 = vld [vmem:[%s269 + $0x3d0] sm:$0xff]
      %v1476 = vld [vmem:[%s269 + $0x3d8] sm:$0xff]
      %v1477 = vld [vmem:[%s269 + $0x3e0] sm:$0xff]
      %v1478 = vld [vmem:[%s269 + $0x3e8] sm:$0xff]
      %v1479 = vld [vmem:[%s269 + $0x3f0] sm:$0xff]
      %v1480 = vld [vmem:[%s269 + $0x3f8] sm:$0xff]
      %1481 = vset.pattern.permute.xlu0 0
      %1482 = vperm.xlu0 %1481, %v1353
      %v1483 = vpop.permute.xlu0 %1482
      %1484 = vset.pattern.permute.xlu0 0
      %1485 = vperm.xlu0 %1484, %v1354
      %v1486 = vpop.permute.xlu0 %1485
      %1487 = vset.pattern.permute.xlu0 0
      %1488 = vperm.xlu0 %1487, %v1355
      %v1489 = vpop.permute.xlu0 %1488
      %1490 = vset.pattern.permute.xlu0 0
      %1491 = vperm.xlu0 %1490, %v1356
      %v1492 = vpop.permute.xlu0 %1491
      %1493 = vset.pattern.permute.xlu0 0
      %1494 = vperm.xlu0 %1493, %v1357
      %v1495 = vpop.permute.xlu0 %1494
      %1496 = vset.pattern.permute.xlu0 0
      %1497 = vperm.xlu0 %1496, %v1358
      %v1498 = vpop.permute.xlu0 %1497
      %1499 = vset.pattern.permute.xlu0 0
      %1500 = vperm.xlu0 %1499, %v1359
      %v1501 = vpop.permute.xlu0 %1500
      %1502 = vset.pattern.permute.xlu0 0
      %1503 = vperm.xlu0 %1502, %v1360
      %v1504 = vpop.permute.xlu0 %1503
      %1505 = vset.pattern.permute.xlu0 0
      %1506 = vperm.xlu0 %1505, %v1361
      %v1507 = vpop.permute.xlu0 %1506
      %1508 = vset.pattern.permute.xlu0 0
      %1509 = vperm.xlu0 %1508, %v1362
      %v1510 = vpop.permute.xlu0 %1509
      %1511 = vset.pattern.permute.xlu0 0
      %1512 = vperm.xlu0 %1511, %v1363
      %v1513 = vpop.permute.xlu0 %1512
      %1514 = vset.pattern.permute.xlu0 0
      %1515 = vperm.xlu0 %1514, %v1364
      %v1516 = vpop.permute.xlu0 %1515
      %1517 = vset.pattern.permute.xlu0 0
      %1518 = vperm.xlu0 %1517, %v1365
      %v1519 = vpop.permute.xlu0 %1518
      %1520 = vset.pattern.permute.xlu0 0
      %1521 = vperm.xlu0 %1520, %v1366
      %v1522 = vpop.permute.xlu0 %1521
      %1523 = vset.pattern.permute.xlu0 0
      %1524 = vperm.xlu0 %1523, %v1367
      %v1525 = vpop.permute.xlu0 %1524
      %1526 = vset.pattern.permute.xlu0 0
      %1527 = vperm.xlu0 %1526, %v1368
      %v1528 = vpop.permute.xlu0 %1527
      %1529 = vset.pattern.permute.xlu0 0
      %1530 = vperm.xlu0 %1529, %v1369
      %v1531 = vpop.permute.xlu0 %1530
      %1532 = vset.pattern.permute.xlu0 0
      %1533 = vperm.xlu0 %1532, %v1370
      %v1534 = vpop.permute.xlu0 %1533
      %1535 = vset.pattern.permute.xlu0 0
      %1536 = vperm.xlu0 %1535, %v1371
      %v1537 = vpop.permute.xlu0 %1536
      %1538 = vset.pattern.permute.xlu0 0
      %1539 = vperm.xlu0 %1538, %v1372
      %v1540 = vpop.permute.xlu0 %1539
      %1541 = vset.pattern.permute.xlu0 0
      %1542 = vperm.xlu0 %1541, %v1373
      %v1543 = vpop.permute.xlu0 %1542
      %1544 = vset.pattern.permute.xlu0 0
      %1545 = vperm.xlu0 %1544, %v1374
      %v1546 = vpop.permute.xlu0 %1545
      %1547 = vset.pattern.permute.xlu0 0
      %1548 = vperm.xlu0 %1547, %v1375
      %v1549 = vpop.permute.xlu0 %1548
      %1550 = vset.pattern.permute.xlu0 0
      %1551 = vperm.xlu0 %1550, %v1376
      %v1552 = vpop.permute.xlu0 %1551
      %1553 = vset.pattern.permute.xlu0 0
      %1554 = vperm.xlu0 %1553, %v1377
      %v1555 = vpop.permute.xlu0 %1554
      %1556 = vset.pattern.permute.xlu0 0
      %1557 = vperm.xlu0 %1556, %v1378
      %v1558 = vpop.permute.xlu0 %1557
      %1559 = vset.pattern.permute.xlu0 0
      %1560 = vperm.xlu0 %1559, %v1379
      %v1561 = vpop.permute.xlu0 %1560
      %1562 = vset.pattern.permute.xlu0 0
      %1563 = vperm.xlu0 %1562, %v1380
      %v1564 = vpop.permute.xlu0 %1563
      %1565 = vset.pattern.permute.xlu0 0
      %1566 = vperm.xlu0 %1565, %v1381
      %v1567 = vpop.permute.xlu0 %1566
      %1568 = vset.pattern.permute.xlu0 0
      %1569 = vperm.xlu0 %1568, %v1382
      %v1570 = vpop.permute.xlu0 %1569
      %1571 = vset.pattern.permute.xlu0 0
      %1572 = vperm.xlu0 %1571, %v1383
      %v1573 = vpop.permute.xlu0 %1572
      %1574 = vset.pattern.permute.xlu0 0
      %1575 = vperm.xlu0 %1574, %v1384
      %v1576 = vpop.permute.xlu0 %1575
      %1577 = vset.pattern.permute.xlu0 0
      %1578 = vperm.xlu0 %1577, %v1385
      %v1579 = vpop.permute.xlu0 %1578
      %1580 = vset.pattern.permute.xlu0 0
      %1581 = vperm.xlu0 %1580, %v1386
      %v1582 = vpop.permute.xlu0 %1581
      %1583 = vset.pattern.permute.xlu0 0
      %1584 = vperm.xlu0 %1583, %v1387
      %v1585 = vpop.permute.xlu0 %1584
      %1586 = vset.pattern.permute.xlu0 0
      %1587 = vperm.xlu0 %1586, %v1388
      %v1588 = vpop.permute.xlu0 %1587
      %1589 = vset.pattern.permute.xlu0 0
      %1590 = vperm.xlu0 %1589, %v1389
      %v1591 = vpop.permute.xlu0 %1590
      %1592 = vset.pattern.permute.xlu0 0
      %1593 = vperm.xlu0 %1592, %v1390
      %v1594 = vpop.permute.xlu0 %1593
      %1595 = vset.pattern.permute.xlu0 0
      %1596 = vperm.xlu0 %1595, %v1391
      %v1597 = vpop.permute.xlu0 %1596
      %1598 = vset.pattern.permute.xlu0 0
      %1599 = vperm.xlu0 %1598, %v1392
      %v1600 = vpop.permute.xlu0 %1599
      %1601 = vset.pattern.permute.xlu0 0
      %1602 = vperm.xlu0 %1601, %v1393
      %v1603 = vpop.permute.xlu0 %1602
      %1604 = vset.pattern.permute.xlu0 0
      %1605 = vperm.xlu0 %1604, %v1394
      %v1606 = vpop.permute.xlu0 %1605
      %1607 = vset.pattern.permute.xlu0 0
      %1608 = vperm.xlu0 %1607, %v1395
      %v1609 = vpop.permute.xlu0 %1608
      %1610 = vset.pattern.permute.xlu0 0
      %1611 = vperm.xlu0 %1610, %v1396
      %v1612 = vpop.permute.xlu0 %1611
      %1613 = vset.pattern.permute.xlu0 0
      %1614 = vperm.xlu0 %1613, %v1397
      %v1615 = vpop.permute.xlu0 %1614
      %1616 = vset.pattern.permute.xlu0 0
      %1617 = vperm.xlu0 %1616, %v1398
      %v1618 = vpop.permute.xlu0 %1617
      %1619 = vset.pattern.permute.xlu0 0
      %1620 = vperm.xlu0 %1619, %v1399
      %v1621 = vpop.permute.xlu0 %1620
      %1622 = vset.pattern.permute.xlu0 0
      %1623 = vperm.xlu0 %1622, %v1400
      %v1624 = vpop.permute.xlu0 %1623
      %1625 = vset.pattern.permute.xlu0 0
      %1626 = vperm.xlu0 %1625, %v1401
      %v1627 = vpop.permute.xlu0 %1626
      %1628 = vset.pattern.permute.xlu0 0
      %1629 = vperm.xlu0 %1628, %v1402
      %v1630 = vpop.permute.xlu0 %1629
      %1631 = vset.pattern.permute.xlu0 0
      %1632 = vperm.xlu0 %1631, %v1403
      %v1633 = vpop.permute.xlu0 %1632
      %1634 = vset.pattern.permute.xlu0 0
      %1635 = vperm.xlu0 %1634, %v1404
      %v1636 = vpop.permute.xlu0 %1635
      %1637 = vset.pattern.permute.xlu0 0
      %1638 = vperm.xlu0 %1637, %v1405
      %v1639 = vpop.permute.xlu0 %1638
      %1640 = vset.pattern.permute.xlu0 0
      %1641 = vperm.xlu0 %1640, %v1406
      %v1642 = vpop.permute.xlu0 %1641
      %1643 = vset.pattern.permute.xlu0 0
      %1644 = vperm.xlu0 %1643, %v1407
      %v1645 = vpop.permute.xlu0 %1644
      %1646 = vset.pattern.permute.xlu0 0
      %1647 = vperm.xlu0 %1646, %v1408
      %v1648 = vpop.permute.xlu0 %1647
      %1649 = vset.pattern.permute.xlu0 0
      %1650 = vperm.xlu0 %1649, %v1409
      %v1651 = vpop.permute.xlu0 %1650
      %1652 = vset.pattern.permute.xlu0 0
      %1653 = vperm.xlu0 %1652, %v1410
      %v1654 = vpop.permute.xlu0 %1653
      %1655 = vset.pattern.permute.xlu0 0
      %1656 = vperm.xlu0 %1655, %v1411
      %v1657 = vpop.permute.xlu0 %1656
      %1658 = vset.pattern.permute.xlu0 0
      %1659 = vperm.xlu0 %1658, %v1412
      %v1660 = vpop.permute.xlu0 %1659
      %1661 = vset.pattern.permute.xlu0 0
      %1662 = vperm.xlu0 %1661, %v1413
      %v1663 = vpop.permute.xlu0 %1662
      %1664 = vset.pattern.permute.xlu0 0
      %1665 = vperm.xlu0 %1664, %v1414
      %v1666 = vpop.permute.xlu0 %1665
      %1667 = vset.pattern.permute.xlu0 0
      %1668 = vperm.xlu0 %1667, %v1415
      %v1669 = vpop.permute.xlu0 %1668
      %1670 = vset.pattern.permute.xlu0 0
      %1671 = vperm.xlu0 %1670, %v1416
      %v1672 = vpop.permute.xlu0 %1671
      %1673 = vset.pattern.permute.xlu0 0
      %1674 = vperm.xlu0 %1673, %v1417
      %v1675 = vpop.permute.xlu0 %1674
      %1676 = vset.pattern.permute.xlu0 0
      %1677 = vperm.xlu0 %1676, %v1418
      %v1678 = vpop.permute.xlu0 %1677
      %1679 = vset.pattern.permute.xlu0 0
      %1680 = vperm.xlu0 %1679, %v1419
      %v1681 = vpop.permute.xlu0 %1680
      %1682 = vset.pattern.permute.xlu0 0
      %1683 = vperm.xlu0 %1682, %v1420
      %v1684 = vpop.permute.xlu0 %1683
      %1685 = vset.pattern.permute.xlu0 0
      %1686 = vperm.xlu0 %1685, %v1421
      %v1687 = vpop.permute.xlu0 %1686
      %1688 = vset.pattern.permute.xlu0 0
      %1689 = vperm.xlu0 %1688, %v1422
      %v1690 = vpop.permute.xlu0 %1689
      %1691 = vset.pattern.permute.xlu0 0
      %1692 = vperm.xlu0 %1691, %v1423
      %v1693 = vpop.permute.xlu0 %1692
      %1694 = vset.pattern.permute.xlu0 0
      %1695 = vperm.xlu0 %1694, %v1424
      %v1696 = vpop.permute.xlu0 %1695
      %1697 = vset.pattern.permute.xlu0 0
      %1698 = vperm.xlu0 %1697, %v1425
      %v1699 = vpop.permute.xlu0 %1698
      %1700 = vset.pattern.permute.xlu0 0
      %1701 = vperm.xlu0 %1700, %v1426
      %v1702 = vpop.permute.xlu0 %1701
      %1703 = vset.pattern.permute.xlu0 0
      %1704 = vperm.xlu0 %1703, %v1427
      %v1705 = vpop.permute.xlu0 %1704
      %1706 = vset.pattern.permute.xlu0 0
      %1707 = vperm.xlu0 %1706, %v1428
      %v1708 = vpop.permute.xlu0 %1707
      %1709 = vset.pattern.permute.xlu0 0
      %1710 = vperm.xlu0 %1709, %v1429
      %v1711 = vpop.permute.xlu0 %1710
      %1712 = vset.pattern.permute.xlu0 0
      %1713 = vperm.xlu0 %1712, %v1430
      %v1714 = vpop.permute.xlu0 %1713
      %1715 = vset.pattern.permute.xlu0 0
      %1716 = vperm.xlu0 %1715, %v1431
      %v1717 = vpop.permute.xlu0 %1716
      %1718 = vset.pattern.permute.xlu0 0
      %1719 = vperm.xlu0 %1718, %v1432
      %v1720 = vpop.permute.xlu0 %1719
      %1721 = vset.pattern.permute.xlu0 0
      %1722 = vperm.xlu0 %1721, %v1433
      %v1723 = vpop.permute.xlu0 %1722
      %1724 = vset.pattern.permute.xlu0 0
      %1725 = vperm.xlu0 %1724, %v1434
      %v1726 = vpop.permute.xlu0 %1725
      %1727 = vset.pattern.permute.xlu0 0
      %1728 = vperm.xlu0 %1727, %v1435
      %v1729 = vpop.permute.xlu0 %1728
      %1730 = vset.pattern.permute.xlu0 0
      %1731 = vperm.xlu0 %1730, %v1436
      %v1732 = vpop.permute.xlu0 %1731
      %1733 = vset.pattern.permute.xlu0 0
      %1734 = vperm.xlu0 %1733, %v1437
      %v1735 = vpop.permute.xlu0 %1734
      %1736 = vset.pattern.permute.xlu0 0
      %1737 = vperm.xlu0 %1736, %v1438
      %v1738 = vpop.permute.xlu0 %1737
      %1739 = vset.pattern.permute.xlu0 0
      %1740 = vperm.xlu0 %1739, %v1439
      %v1741 = vpop.permute.xlu0 %1740
      %1742 = vset.pattern.permute.xlu0 0
      %1743 = vperm.xlu0 %1742, %v1440
      %v1744 = vpop.permute.xlu0 %1743
      %1745 = vset.pattern.permute.xlu0 0
      %1746 = vperm.xlu0 %1745, %v1441
      %v1747 = vpop.permute.xlu0 %1746
      %1748 = vset.pattern.permute.xlu0 0
      %1749 = vperm.xlu0 %1748, %v1442
      %v1750 = vpop.permute.xlu0 %1749
      %1751 = vset.pattern.permute.xlu0 0
      %1752 = vperm.xlu0 %1751, %v1443
      %v1753 = vpop.permute.xlu0 %1752
      %1754 = vset.pattern.permute.xlu0 0
      %1755 = vperm.xlu0 %1754, %v1444
      %v1756 = vpop.permute.xlu0 %1755
      %1757 = vset.pattern.permute.xlu0 0
      %1758 = vperm.xlu0 %1757, %v1445
      %v1759 = vpop.permute.xlu0 %1758
      %1760 = vset.pattern.permute.xlu0 0
      %1761 = vperm.xlu0 %1760, %v1446
      %v1762 = vpop.permute.xlu0 %1761
      %1763 = vset.pattern.permute.xlu0 0
      %1764 = vperm.xlu0 %1763, %v1447
      %v1765 = vpop.permute.xlu0 %1764
      %1766 = vset.pattern.permute.xlu0 0
      %1767 = vperm.xlu0 %1766, %v1448
      %v1768 = vpop.permute.xlu0 %1767
      %1769 = vset.pattern.permute.xlu0 0
      %1770 = vperm.xlu0 %1769, %v1449
      %v1771 = vpop.permute.xlu0 %1770
      %1772 = vset.pattern.permute.xlu0 0
      %1773 = vperm.xlu0 %1772, %v1450
      %v1774 = vpop.permute.xlu0 %1773
      %1775 = vset.pattern.permute.xlu0 0
      %1776 = vperm.xlu0 %1775, %v1451
      %v1777 = vpop.permute.xlu0 %1776
      %1778 = vset.pattern.permute.xlu0 0
      %1779 = vperm.xlu0 %1778, %v1452
      %v1780 = vpop.permute.xlu0 %1779
      %1781 = vset.pattern.permute.xlu0 0
      %1782 = vperm.xlu0 %1781, %v1453
      %v1783 = vpop.permute.xlu0 %1782
      %1784 = vset.pattern.permute.xlu0 0
      %1785 = vperm.xlu0 %1784, %v1454
      %v1786 = vpop.permute.xlu0 %1785
      %1787 = vset.pattern.permute.xlu0 0
      %1788 = vperm.xlu0 %1787, %v1455
      %v1789 = vpop.permute.xlu0 %1788
      %1790 = vset.pattern.permute.xlu0 0
      %1791 = vperm.xlu0 %1790, %v1456
      %v1792 = vpop.permute.xlu0 %1791
      %1793 = vset.pattern.permute.xlu0 0
      %1794 = vperm.xlu0 %1793, %v1457
      %v1795 = vpop.permute.xlu0 %1794
      %1796 = vset.pattern.permute.xlu0 0
      %1797 = vperm.xlu0 %1796, %v1458
      %v1798 = vpop.permute.xlu0 %1797
      %1799 = vset.pattern.permute.xlu0 0
      %1800 = vperm.xlu0 %1799, %v1459
      %v1801 = vpop.permute.xlu0 %1800
      %1802 = vset.pattern.permute.xlu0 0
      %1803 = vperm.xlu0 %1802, %v1460
      %v1804 = vpop.permute.xlu0 %1803
      %1805 = vset.pattern.permute.xlu0 0
      %1806 = vperm.xlu0 %1805, %v1461
      %v1807 = vpop.permute.xlu0 %1806
      %1808 = vset.pattern.permute.xlu0 0
      %1809 = vperm.xlu0 %1808, %v1462
      %v1810 = vpop.permute.xlu0 %1809
      %1811 = vset.pattern.permute.xlu0 0
      %1812 = vperm.xlu0 %1811, %v1463
      %v1813 = vpop.permute.xlu0 %1812
      %1814 = vset.pattern.permute.xlu0 0
      %1815 = vperm.xlu0 %1814, %v1464
      %v1816 = vpop.permute.xlu0 %1815
      %1817 = vset.pattern.permute.xlu0 0
      %1818 = vperm.xlu0 %1817, %v1465
      %v1819 = vpop.permute.xlu0 %1818
      %1820 = vset.pattern.permute.xlu0 0
      %1821 = vperm.xlu0 %1820, %v1466
      %v1822 = vpop.permute.xlu0 %1821
      %1823 = vset.pattern.permute.xlu0 0
      %1824 = vperm.xlu0 %1823, %v1467
      %v1825 = vpop.permute.xlu0 %1824
      %1826 = vset.pattern.permute.xlu0 0
      %1827 = vperm.xlu0 %1826, %v1468
      %v1828 = vpop.permute.xlu0 %1827
      %1829 = vset.pattern.permute.xlu0 0
      %1830 = vperm.xlu0 %1829, %v1469
      %v1831 = vpop.permute.xlu0 %1830
      %1832 = vset.pattern.permute.xlu0 0
      %1833 = vperm.xlu0 %1832, %v1470
      %v1834 = vpop.permute.xlu0 %1833
      %1835 = vset.pattern.permute.xlu0 0
      %1836 = vperm.xlu0 %1835, %v1471
      %v1837 = vpop.permute.xlu0 %1836
      %1838 = vset.pattern.permute.xlu0 0
      %1839 = vperm.xlu0 %1838, %v1472
      %v1840 = vpop.permute.xlu0 %1839
      %1841 = vset.pattern.permute.xlu0 0
      %1842 = vperm.xlu0 %1841, %v1473
      %v1843 = vpop.permute.xlu0 %1842
      %1844 = vset.pattern.permute.xlu0 0
      %1845 = vperm.xlu0 %1844, %v1474
      %v1846 = vpop.permute.xlu0 %1845
      %1847 = vset.pattern.permute.xlu0 0
      %1848 = vperm.xlu0 %1847, %v1475
      %v1849 = vpop.permute.xlu0 %1848
      %1850 = vset.pattern.permute.xlu0 0
      %1851 = vperm.xlu0 %1850, %v1476
      %v1852 = vpop.permute.xlu0 %1851
      %1853 = vset.pattern.permute.xlu0 0
      %1854 = vperm.xlu0 %1853, %v1477
      %v1855 = vpop.permute.xlu0 %1854
      %1856 = vset.pattern.permute.xlu0 0
      %1857 = vperm.xlu0 %1856, %v1478
      %v1858 = vpop.permute.xlu0 %1857
      %1859 = vset.pattern.permute.xlu0 0
      %1860 = vperm.xlu0 %1859, %v1479
      %v1861 = vpop.permute.xlu0 %1860
      %1862 = vset.pattern.permute.xlu0 0
      %1863 = vperm.xlu0 %1862, %v1480
      %v1864 = vpop.permute.xlu0 %1863
      %vm1865 = vcmp.eq.s32.totalorder %v1483, %v1352
      %vm1866 = vcmp.eq.s32.totalorder %v1486, %v1352
      %vm1867 = vcmp.eq.s32.totalorder %v1489, %v1352
      %vm1868 = vcmp.eq.s32.totalorder %v1492, %v1352
      %vm1869 = vcmp.eq.s32.totalorder %v1495, %v1352
      %vm1870 = vcmp.eq.s32.totalorder %v1498, %v1352
      %vm1871 = vcmp.eq.s32.totalorder %v1501, %v1352
      %vm1872 = vcmp.eq.s32.totalorder %v1504, %v1352
      %vm1873 = vcmp.eq.s32.totalorder %v1507, %v1352
      %vm1874 = vcmp.eq.s32.totalorder %v1510, %v1352
      %vm1875 = vcmp.eq.s32.totalorder %v1513, %v1352
      %vm1876 = vcmp.eq.s32.totalorder %v1516, %v1352
      %vm1877 = vcmp.eq.s32.totalorder %v1519, %v1352
      %vm1878 = vcmp.eq.s32.totalorder %v1522, %v1352
      %vm1879 = vcmp.eq.s32.totalorder %v1525, %v1352
      %vm1880 = vcmp.eq.s32.totalorder %v1528, %v1352
      %vm1881 = vcmp.eq.s32.totalorder %v1531, %v1352
      %vm1882 = vcmp.eq.s32.totalorder %v1534, %v1352
      %vm1883 = vcmp.eq.s32.totalorder %v1537, %v1352
      %vm1884 = vcmp.eq.s32.totalorder %v1540, %v1352
      %vm1885 = vcmp.eq.s32.totalorder %v1543, %v1352
      %vm1886 = vcmp.eq.s32.totalorder %v1546, %v1352
      %vm1887 = vcmp.eq.s32.totalorder %v1549, %v1352
      %vm1888 = vcmp.eq.s32.totalorder %v1552, %v1352
      %vm1889 = vcmp.eq.s32.totalorder %v1555, %v1352
      %vm1890 = vcmp.eq.s32.totalorder %v1558, %v1352
      %vm1891 = vcmp.eq.s32.totalorder %v1561, %v1352
      %vm1892 = vcmp.eq.s32.totalorder %v1564, %v1352
      %vm1893 = vcmp.eq.s32.totalorder %v1567, %v1352
      %vm1894 = vcmp.eq.s32.totalorder %v1570, %v1352
      %vm1895 = vcmp.eq.s32.totalorder %v1573, %v1352
      %vm1896 = vcmp.eq.s32.totalorder %v1576, %v1352
      %vm1897 = vcmp.eq.s32.totalorder %v1579, %v1352
      %vm1898 = vcmp.eq.s32.totalorder %v1582, %v1352
      %vm1899 = vcmp.eq.s32.totalorder %v1585, %v1352
      %vm1900 = vcmp.eq.s32.totalorder %v1588, %v1352
      %vm1901 = vcmp.eq.s32.totalorder %v1591, %v1352
      %vm1902 = vcmp.eq.s32.totalorder %v1594, %v1352
      %vm1903 = vcmp.eq.s32.totalorder %v1597, %v1352
      %vm1904 = vcmp.eq.s32.totalorder %v1600, %v1352
      %vm1905 = vcmp.eq.s32.totalorder %v1603, %v1352
      %vm1906 = vcmp.eq.s32.totalorder %v1606, %v1352
      %vm1907 = vcmp.eq.s32.totalorder %v1609, %v1352
      %vm1908 = vcmp.eq.s32.totalorder %v1612, %v1352
      %vm1909 = vcmp.eq.s32.totalorder %v1615, %v1352
      %vm1910 = vcmp.eq.s32.totalorder %v1618, %v1352
      %vm1911 = vcmp.eq.s32.totalorder %v1621, %v1352
      %vm1912 = vcmp.eq.s32.totalorder %v1624, %v1352
      %vm1913 = vcmp.eq.s32.totalorder %v1627, %v1352
      %vm1914 = vcmp.eq.s32.totalorder %v1630, %v1352
      %vm1915 = vcmp.eq.s32.totalorder %v1633, %v1352
      %vm1916 = vcmp.eq.s32.totalorder %v1636, %v1352
      %vm1917 = vcmp.eq.s32.totalorder %v1639, %v1352
      %vm1918 = vcmp.eq.s32.totalorder %v1642, %v1352
      %vm1919 = vcmp.eq.s32.totalorder %v1645, %v1352
      %vm1920 = vcmp.eq.s32.totalorder %v1648, %v1352
      %vm1921 = vcmp.eq.s32.totalorder %v1651, %v1352
      %vm1922 = vcmp.eq.s32.totalorder %v1654, %v1352
      %vm1923 = vcmp.eq.s32.totalorder %v1657, %v1352
      %vm1924 = vcmp.eq.s32.totalorder %v1660, %v1352
      %vm1925 = vcmp.eq.s32.totalorder %v1663, %v1352
      %vm1926 = vcmp.eq.s32.totalorder %v1666, %v1352
      %vm1927 = vcmp.eq.s32.totalorder %v1669, %v1352
      %vm1928 = vcmp.eq.s32.totalorder %v1672, %v1352
      %vm1929 = vcmp.eq.s32.totalorder %v1675, %v1352
      %vm1930 = vcmp.eq.s32.totalorder %v1678, %v1352
      %vm1931 = vcmp.eq.s32.totalorder %v1681, %v1352
      %vm1932 = vcmp.eq.s32.totalorder %v1684, %v1352
      %vm1933 = vcmp.eq.s32.totalorder %v1687, %v1352
      %vm1934 = vcmp.eq.s32.totalorder %v1690, %v1352
      %vm1935 = vcmp.eq.s32.totalorder %v1693, %v1352
      %vm1936 = vcmp.eq.s32.totalorder %v1696, %v1352
      %vm1937 = vcmp.eq.s32.totalorder %v1699, %v1352
      %vm1938 = vcmp.eq.s32.totalorder %v1702, %v1352
      %vm1939 = vcmp.eq.s32.totalorder %v1705, %v1352
      %vm1940 = vcmp.eq.s32.totalorder %v1708, %v1352
      %vm1941 = vcmp.eq.s32.totalorder %v1711, %v1352
      %vm1942 = vcmp.eq.s32.totalorder %v1714, %v1352
      %vm1943 = vcmp.eq.s32.totalorder %v1717, %v1352
      %vm1944 = vcmp.eq.s32.totalorder %v1720, %v1352
      %vm1945 = vcmp.eq.s32.totalorder %v1723, %v1352
      %vm1946 = vcmp.eq.s32.totalorder %v1726, %v1352
      %vm1947 = vcmp.eq.s32.totalorder %v1729, %v1352
      %vm1948 = vcmp.eq.s32.totalorder %v1732, %v1352
      %vm1949 = vcmp.eq.s32.totalorder %v1735, %v1352
      %vm1950 = vcmp.eq.s32.totalorder %v1738, %v1352
      %vm1951 = vcmp.eq.s32.totalorder %v1741, %v1352
      %vm1952 = vcmp.eq.s32.totalorder %v1744, %v1352
      %vm1953 = vcmp.eq.s32.totalorder %v1747, %v1352
      %vm1954 = vcmp.eq.s32.totalorder %v1750, %v1352
      %vm1955 = vcmp.eq.s32.totalorder %v1753, %v1352
      %vm1956 = vcmp.eq.s32.totalorder %v1756, %v1352
      %vm1957 = vcmp.eq.s32.totalorder %v1759, %v1352
      %vm1958 = vcmp.eq.s32.totalorder %v1762, %v1352
      %vm1959 = vcmp.eq.s32.totalorder %v1765, %v1352
      %vm1960 = vcmp.eq.s32.totalorder %v1768, %v1352
      %vm1961 = vcmp.eq.s32.totalorder %v1771, %v1352
      %vm1962 = vcmp.eq.s32.totalorder %v1774, %v1352
      %vm1963 = vcmp.eq.s32.totalorder %v1777, %v1352
      %vm1964 = vcmp.eq.s32.totalorder %v1780, %v1352
      %vm1965 = vcmp.eq.s32.totalorder %v1783, %v1352
      %vm1966 = vcmp.eq.s32.totalorder %v1786, %v1352
      %vm1967 = vcmp.eq.s32.totalorder %v1789, %v1352
      %vm1968 = vcmp.eq.s32.totalorder %v1792, %v1352
      %vm1969 = vcmp.eq.s32.totalorder %v1795, %v1352
      %vm1970 = vcmp.eq.s32.totalorder %v1798, %v1352
      %vm1971 = vcmp.eq.s32.totalorder %v1801, %v1352
      %vm1972 = vcmp.eq.s32.totalorder %v1804, %v1352
      %vm1973 = vcmp.eq.s32.totalorder %v1807, %v1352
      %vm1974 = vcmp.eq.s32.totalorder %v1810, %v1352
      %vm1975 = vcmp.eq.s32.totalorder %v1813, %v1352
      %vm1976 = vcmp.eq.s32.totalorder %v1816, %v1352
      %vm1977 = vcmp.eq.s32.totalorder %v1819, %v1352
      %vm1978 = vcmp.eq.s32.totalorder %v1822, %v1352
      %vm1979 = vcmp.eq.s32.totalorder %v1825, %v1352
      %vm1980 = vcmp.eq.s32.totalorder %v1828, %v1352
      %vm1981 = vcmp.eq.s32.totalorder %v1831, %v1352
      %vm1982 = vcmp.eq.s32.totalorder %v1834, %v1352
      %vm1983 = vcmp.eq.s32.totalorder %v1837, %v1352
      %vm1984 = vcmp.eq.s32.totalorder %v1840, %v1352
      %vm1985 = vcmp.eq.s32.totalorder %v1843, %v1352
      %vm1986 = vcmp.eq.s32.totalorder %v1846, %v1352
      %vm1987 = vcmp.eq.s32.totalorder %v1849, %v1352
      %vm1988 = vcmp.eq.s32.totalorder %v1852, %v1352
      %vm1989 = vcmp.eq.s32.totalorder %v1855, %v1352
      %vm1990 = vcmp.eq.s32.totalorder %v1858, %v1352
      %vm1991 = vcmp.eq.s32.totalorder %v1861, %v1352
      %vm1992 = vcmp.eq.s32.totalorder %v1864, %v1352
      %v1993 = vsel %vm1865, 1.0, 0.0
      %v1994 = vsel %vm1866, 1.0, 0.0
      %v1995 = vsel %vm1867, 1.0, 0.0
      %v1996 = vsel %vm1868, 1.0, 0.0
      %v1997 = vsel %vm1869, 1.0, 0.0
      %v1998 = vsel %vm1870, 1.0, 0.0
      %v1999 = vsel %vm1871, 1.0, 0.0
      %v2000 = vsel %vm1872, 1.0, 0.0
      %v2001 = vsel %vm1873, 1.0, 0.0
      %v2002 = vsel %vm1874, 1.0, 0.0
      %v2003 = vsel %vm1875, 1.0, 0.0
      %v2004 = vsel %vm1876, 1.0, 0.0
      %v2005 = vsel %vm1877, 1.0, 0.0
      %v2006 = vsel %vm1878, 1.0, 0.0
      %v2007 = vsel %vm1879, 1.0, 0.0
      %v2008 = vsel %vm1880, 1.0, 0.0
      %v2009 = vsel %vm1881, 1.0, 0.0
      %v2010 = vsel %vm1882, 1.0, 0.0
      %v2011 = vsel %vm1883, 1.0, 0.0
      %v2012 = vsel %vm1884, 1.0, 0.0
      %v2013 = vsel %vm1885, 1.0, 0.0
      %v2014 = vsel %vm1886, 1.0, 0.0
      %v2015 = vsel %vm1887, 1.0, 0.0
      %v2016 = vsel %vm1888, 1.0, 0.0
      %v2017 = vsel %vm1889, 1.0, 0.0
      %v2018 = vsel %vm1890, 1.0, 0.0
      %v2019 = vsel %vm1891, 1.0, 0.0
      %v2020 = vsel %vm1892, 1.0, 0.0
      %v2021 = vsel %vm1893, 1.0, 0.0
      %v2022 = vsel %vm1894, 1.0, 0.0
      %v2023 = vsel %vm1895, 1.0, 0.0
      %v2024 = vsel %vm1896, 1.0, 0.0
      %v2025 = vsel %vm1897, 1.0, 0.0
      %v2026 = vsel %vm1898, 1.0, 0.0
      %v2027 = vsel %vm1899, 1.0, 0.0
      %v2028 = vsel %vm1900, 1.0, 0.0
      %v2029 = vsel %vm1901, 1.0, 0.0
      %v2030 = vsel %vm1902, 1.0, 0.0
      %v2031 = vsel %vm1903, 1.0, 0.0
      %v2032 = vsel %vm1904, 1.0, 0.0
      %v2033 = vsel %vm1905, 1.0, 0.0
      %v2034 = vsel %vm1906, 1.0, 0.0
      %v2035 = vsel %vm1907, 1.0, 0.0
      %v2036 = vsel %vm1908, 1.0, 0.0
      %v2037 = vsel %vm1909, 1.0, 0.0
      %v2038 = vsel %vm1910, 1.0, 0.0
      %v2039 = vsel %vm1911, 1.0, 0.0
      %v2040 = vsel %vm1912, 1.0, 0.0
      %v2041 = vsel %vm1913, 1.0, 0.0
      %v2042 = vsel %vm1914, 1.0, 0.0
      %v2043 = vsel %vm1915, 1.0, 0.0
      %v2044 = vsel %vm1916, 1.0, 0.0
      %v2045 = vsel %vm1917, 1.0, 0.0
      %v2046 = vsel %vm1918, 1.0, 0.0
      %v2047 = vsel %vm1919, 1.0, 0.0
      %v2048 = vsel %vm1920, 1.0, 0.0
      %v2049 = vsel %vm1921, 1.0, 0.0
      %v2050 = vsel %vm1922, 1.0, 0.0
      %v2051 = vsel %vm1923, 1.0, 0.0
      %v2052 = vsel %vm1924, 1.0, 0.0
      %v2053 = vsel %vm1925, 1.0, 0.0
      %v2054 = vsel %vm1926, 1.0, 0.0
      %v2055 = vsel %vm1927, 1.0, 0.0
      %v2056 = vsel %vm1928, 1.0, 0.0
      %v2057 = vsel %vm1929, 1.0, 0.0
      %v2058 = vsel %vm1930, 1.0, 0.0
      %v2059 = vsel %vm1931, 1.0, 0.0
      %v2060 = vsel %vm1932, 1.0, 0.0
      %v2061 = vsel %vm1933, 1.0, 0.0
      %v2062 = vsel %vm1934, 1.0, 0.0
      %v2063 = vsel %vm1935, 1.0, 0.0
      %v2064 = vsel %vm1936, 1.0, 0.0
      %v2065 = vsel %vm1937, 1.0, 0.0
      %v2066 = vsel %vm1938, 1.0, 0.0
      %v2067 = vsel %vm1939, 1.0, 0.0
      %v2068 = vsel %vm1940, 1.0, 0.0
      %v2069 = vsel %vm1941, 1.0, 0.0
      %v2070 = vsel %vm1942, 1.0, 0.0
      %v2071 = vsel %vm1943, 1.0, 0.0
      %v2072 = vsel %vm1944, 1.0, 0.0
      %v2073 = vsel %vm1945, 1.0, 0.0
      %v2074 = vsel %vm1946, 1.0, 0.0
      %v2075 = vsel %vm1947, 1.0, 0.0
      %v2076 = vsel %vm1948, 1.0, 0.0
      %v2077 = vsel %vm1949, 1.0, 0.0
      %v2078 = vsel %vm1950, 1.0, 0.0
      %v2079 = vsel %vm1951, 1.0, 0.0
      %v2080 = vsel %vm1952, 1.0, 0.0
      %v2081 = vsel %vm1953, 1.0, 0.0
      %v2082 = vsel %vm1954, 1.0, 0.0
      %v2083 = vsel %vm1955, 1.0, 0.0
      %v2084 = vsel %vm1956, 1.0, 0.0
      %v2085 = vsel %vm1957, 1.0, 0.0
      %v2086 = vsel %vm1958, 1.0, 0.0
      %v2087 = vsel %vm1959, 1.0, 0.0
      %v2088 = vsel %vm1960, 1.0, 0.0
      %v2089 = vsel %vm1961, 1.0, 0.0
      %v2090 = vsel %vm1962, 1.0, 0.0
      %v2091 = vsel %vm1963, 1.0, 0.0
      %v2092 = vsel %vm1964, 1.0, 0.0
      %v2093 = vsel %vm1965, 1.0, 0.0
      %v2094 = vsel %vm1966, 1.0, 0.0
      %v2095 = vsel %vm1967, 1.0, 0.0
      %v2096 = vsel %vm1968, 1.0, 0.0
      %v2097 = vsel %vm1969, 1.0, 0.0
      %v2098 = vsel %vm1970, 1.0, 0.0
      %v2099 = vsel %vm1971, 1.0, 0.0
      %v2100 = vsel %vm1972, 1.0, 0.0
      %v2101 = vsel %vm1973, 1.0, 0.0
      %v2102 = vsel %vm1974, 1.0, 0.0
      %v2103 = vsel %vm1975, 1.0, 0.0
      %v2104 = vsel %vm1976, 1.0, 0.0
      %v2105 = vsel %vm1977, 1.0, 0.0
      %v2106 = vsel %vm1978, 1.0, 0.0
      %v2107 = vsel %vm1979, 1.0, 0.0
      %v2108 = vsel %vm1980, 1.0, 0.0
      %v2109 = vsel %vm1981, 1.0, 0.0
      %v2110 = vsel %vm1982, 1.0, 0.0
      %v2111 = vsel %vm1983, 1.0, 0.0
      %v2112 = vsel %vm1984, 1.0, 0.0
      %v2113 = vsel %vm1985, 1.0, 0.0
      %v2114 = vsel %vm1986, 1.0, 0.0
      %v2115 = vsel %vm1987, 1.0, 0.0
      %v2116 = vsel %vm1988, 1.0, 0.0
      %v2117 = vsel %vm1989, 1.0, 0.0
      %v2118 = vsel %vm1990, 1.0, 0.0
      %v2119 = vsel %vm1991, 1.0, 0.0
      %v2120 = vsel %vm1992, 1.0, 0.0
      %v2121 = vpack.c.bf16 %v1994, %v1993
      %v2122 = vpack.c.bf16 %v1996, %v1995
      %v2123 = vpack.c.bf16 %v1998, %v1997
      %v2124 = vpack.c.bf16 %v2000, %v1999
      %v2125 = vpack.c.bf16 %v2002, %v2001
      %v2126 = vpack.c.bf16 %v2004, %v2003
      %v2127 = vpack.c.bf16 %v2006, %v2005
      %v2128 = vpack.c.bf16 %v2008, %v2007
      %v2129 = vpack.c.bf16 %v2010, %v2009
      %v2130 = vpack.c.bf16 %v2012, %v2011
      %v2131 = vpack.c.bf16 %v2014, %v2013
      %v2132 = vpack.c.bf16 %v2016, %v2015
      %v2133 = vpack.c.bf16 %v2018, %v2017
      %v2134 = vpack.c.bf16 %v2020, %v2019
      %v2135 = vpack.c.bf16 %v2022, %v2021
      %v2136 = vpack.c.bf16 %v2024, %v2023
      %v2137 = vpack.c.bf16 %v2026, %v2025
      %v2138 = vpack.c.bf16 %v2028, %v2027
      %v2139 = vpack.c.bf16 %v2030, %v2029
      %v2140 = vpack.c.bf16 %v2032, %v2031
      %v2141 = vpack.c.bf16 %v2034, %v2033
      %v2142 = vpack.c.bf16 %v2036, %v2035
      %v2143 = vpack.c.bf16 %v2038, %v2037
      %v2144 = vpack.c.bf16 %v2040, %v2039
      %v2145 = vpack.c.bf16 %v2042, %v2041
      %v2146 = vpack.c.bf16 %v2044, %v2043
      %v2147 = vpack.c.bf16 %v2046, %v2045
      %v2148 = vpack.c.bf16 %v2048, %v2047
      %v2149 = vpack.c.bf16 %v2050, %v2049
      %v2150 = vpack.c.bf16 %v2052, %v2051
      %v2151 = vpack.c.bf16 %v2054, %v2053
      %v2152 = vpack.c.bf16 %v2056, %v2055
      %v2153 = vpack.c.bf16 %v2058, %v2057
      %v2154 = vpack.c.bf16 %v2060, %v2059
      %v2155 = vpack.c.bf16 %v2062, %v2061
      %v2156 = vpack.c.bf16 %v2064, %v2063
      %v2157 = vpack.c.bf16 %v2066, %v2065
      %v2158 = vpack.c.bf16 %v2068, %v2067
      %v2159 = vpack.c.bf16 %v2070, %v2069
      %v2160 = vpack.c.bf16 %v2072, %v2071
      %v2161 = vpack.c.bf16 %v2074, %v2073
      %v2162 = vpack.c.bf16 %v2076, %v2075
      %v2163 = vpack.c.bf16 %v2078, %v2077
      %v2164 = vpack.c.bf16 %v2080, %v2079
      %v2165 = vpack.c.bf16 %v2082, %v2081
      %v2166 = vpack.c.bf16 %v2084, %v2083
      %v2167 = vpack.c.bf16 %v2086, %v2085
      %v2168 = vpack.c.bf16 %v2088, %v2087
      %v2169 = vpack.c.bf16 %v2090, %v2089
      %v2170 = vpack.c.bf16 %v2092, %v2091
      %v2171 = vpack.c.bf16 %v2094, %v2093
      %v2172 = vpack.c.bf16 %v2096, %v2095
      %v2173 = vpack.c.bf16 %v2098, %v2097
      %v2174 = vpack.c.bf16 %v2100, %v2099
      %v2175 = vpack.c.bf16 %v2102, %v2101
      %v2176 = vpack.c.bf16 %v2104, %v2103
      %v2177 = vpack.c.bf16 %v2106, %v2105
      %v2178 = vpack.c.bf16 %v2108, %v2107
      %v2179 = vpack.c.bf16 %v2110, %v2109
      %v2180 = vpack.c.bf16 %v2112, %v2111
      %v2181 = vpack.c.bf16 %v2114, %v2113
      %v2182 = vpack.c.bf16 %v2116, %v2115
      %v2183 = vpack.c.bf16 %v2118, %v2117
      %v2184 = vpack.c.bf16 %v2120, %v2119
      %v2185 = vld [vmem:[%s4] sm:$0xf]
      %v2186 = vld [vmem:[%s4 + $0x4] sm:$0xf]
      %v2187 = vld [vmem:[%s4 + $0x8] sm:$0xf]
      %v2188 = vld [vmem:[%s4 + $0xc] sm:$0xf]
      %v2189 = vld [vmem:[%s4 + $0x10] sm:$0xf]
      %v2190 = vld [vmem:[%s4 + $0x14] sm:$0xf]
      %v2191 = vld [vmem:[%s4 + $0x18] sm:$0xf]
      %v2192 = vld [vmem:[%s4 + $0x1c] sm:$0xf]
      %v2193 = vld [vmem:[%s4 + $0x20] sm:$0xf]
      %v2194 = vld [vmem:[%s4 + $0x24] sm:$0xf]
      %v2195 = vld [vmem:[%s4 + $0x28] sm:$0xf]
      %v2196 = vld [vmem:[%s4 + $0x2c] sm:$0xf]
      %v2197 = vld [vmem:[%s4 + $0x30] sm:$0xf]
      %v2198 = vld [vmem:[%s4 + $0x34] sm:$0xf]
      %v2199 = vld [vmem:[%s4 + $0x38] sm:$0xf]
      %v2200 = vld [vmem:[%s4 + $0x3c] sm:$0xf]
      %v2217 = vunpack.c.l.b16 %v2185
      %v2218 = vunpack.c.l.b16 %v2186
      %v2219 = vunpack.c.l.b16 %v2187
      %v2220 = vunpack.c.l.b16 %v2188
      %v2221 = vunpack.c.l.b16 %v2189
      %v2222 = vunpack.c.l.b16 %v2190
      %v2223 = vunpack.c.l.b16 %v2191
      %v2224 = vunpack.c.l.b16 %v2192
      %v2225 = vunpack.c.l.b16 %v2193
      %v2226 = vunpack.c.l.b16 %v2194
      %v2227 = vunpack.c.l.b16 %v2195
      %v2228 = vunpack.c.l.b16 %v2196
      %v2229 = vunpack.c.l.b16 %v2197
      %v2230 = vunpack.c.l.b16 %v2198
      %v2231 = vunpack.c.l.b16 %v2199
      %v2232 = vunpack.c.l.b16 %v2200
      %v2233 = vpack.c.b16 %v2218, %v2217
      %v2234 = vpack.c.b16 %v2220, %v2219
      %v2235 = vpack.c.b16 %v2222, %v2221
      %v2236 = vpack.c.b16 %v2224, %v2223
      %v2237 = vpack.c.b16 %v2226, %v2225
      %v2238 = vpack.c.b16 %v2228, %v2227
      %v2239 = vpack.c.b16 %v2230, %v2229
      %v2240 = vpack.c.b16 %v2232, %v2231
      %2249 = vmatprep.subr.bf16.mxu0 0
      %2250 = vmatpush1.bf16.msra.mxu0 %v2233
      %2251 = vmatprep.subr.bf16.mxu0 0
      %2252 = vmatpush1.bf16.msra.mxu0 %v2234
      %2253 = vmatprep.subr.bf16.mxu0 0
      %2254 = vmatpush1.bf16.msra.mxu0 %v2235
      %2255 = vmatprep.subr.bf16.mxu0 0
      %2256 = vmatpush1.bf16.msra.mxu0 %v2236
      %2257 = vmatprep.subr.bf16.mxu0 0
      %2258 = vmatpush1.bf16.msra.mxu0 %v2237
      %2259 = vmatprep.subr.bf16.mxu0 0
      %2260 = vmatpush1.bf16.msra.mxu0 %v2238
      %2261 = vmatprep.subr.bf16.mxu0 0
      %2262 = vmatpush1.bf16.msra.mxu0 %v2239
      %2263 = vmatprep.subr.bf16.mxu0 0
      %2264 = vmatpush1.bf16.msra.mxu0 %v2240
      %2265 = vmatprep.subr.bf16.mxu0 0
      %2266 = vmatpush1.bf16.msra.mxu0 0
      %2267 = vmatprep.subr.bf16.mxu0 0
      %2268 = vmatpush1.bf16.msra.mxu0 0
      %2269 = vmatprep.subr.bf16.mxu0 0
      %2270 = vmatpush1.bf16.msra.mxu0 0
      %2271 = vmatprep.subr.bf16.mxu0 0
      %2272 = vmatpush1.bf16.msra.mxu0 0
      %2273 = vmatprep.subr.bf16.mxu0 0
      %2274 = vmatpush1.bf16.msra.mxu0 0
      %2275 = vmatprep.subr.bf16.mxu0 0
      %2276 = vmatpush1.bf16.msra.mxu0 0
      %2277 = vmatprep.subr.bf16.mxu0 0
      %2278 = vmatpush1.bf16.msra.mxu0 0
      %2279 = vmatprep.subr.bf16.mxu0 0
      %2280 = vmatpush1.bf16.msra.mxu0 0
      %2281 = vmatprep.mubr.bf16.mxu0 0
      %2282 = vmatmul.mubr.bf16.gmra.mrb[0].mxu0 %v2121
      %v2283 = vpop.f32.mrb[0].mxu0
      %v2284 = vadd.f32 0.0, %v2283
      %v2285 = vpop.f32.mrb[0].mxu0
      %v2286 = vpop.f32.mrb[0].mxu0
      %v2287 = vadd.f32 0.0, %v2286
      %v2288 = vpop.f32.mrb[0].mxu0
      %2289 = vmatprep.mubr.bf16.mxu0 0
      %2290 = vmatmul.mubr.bf16.gmra.mrb[0].mxu0 %v2122
      %v2291 = vpop.f32.mrb[0].mxu0
      %v2292 = vadd.f32 0.0, %v2291
      %v2293 = vpop.f32.mrb[0].mxu0
      %v2294 = vpop.f32.mrb[0].mxu0
      %v2295 = vadd.f32 0.0, %v2294
      %v2296 = vpop.f32.mrb[0].mxu0
      %2297 = vmatprep.mubr.bf16.mxu0 0
      %2298 = vmatmul.mubr.bf16.gmra.mrb[0].mxu0 %v2123
      %v2299 = vpop.f32.mrb[0].mxu0
      %v2300 = vadd.f32 0.0, %v2299
      %v2301 = vpop.f32.mrb[0].mxu0
      %v2302 = vpop.f32.mrb[0].mxu0
      %v2303 = vadd.f32 0.0, %v2302
      %v2304 = vpop.f32.mrb[0].mxu0
      %2305 = vmatprep.mubr.bf16.mxu0 0
      %2306 = vmatmul.mubr.bf16.gmra.mrb[0].mxu0 %v2124
      %v2307 = vpop.f32.mrb[0].mxu0
      %v2308 = vadd.f32 0.0, %v2307
      %v2309 = vpop.f32.mrb[0].mxu0
      %v2310 = vpop.f32.mrb[0].mxu0
      %v2311 = vadd.f32 0.0, %v2310
      %v2312 = vpop.f32.mrb[0].mxu0
      %2313 = vmatprep.mubr.bf16.mxu0 0
      %2314 = vmatmul.mubr.bf16.gmra.mrb[0].mxu0 %v2125
      %v2315 = vpop.f32.mrb[0].mxu0
      %v2316 = vadd.f32 0.0, %v2315
      %v2317 = vpop.f32.mrb[0].mxu0
      %v2318 = vpop.f32.mrb[0].mxu0
      %v2319 = vadd.f32 0.0, %v2318
      %v2320 = vpop.f32.mrb[0].mxu0
      %2321 = vmatprep.mubr.bf16.mxu0 0
      %2322 = vmatmul.mubr.bf16.gmra.mrb[0].mxu0 %v2126
      %v2323 = vpop.f32.mrb[0].mxu0
      %v2324 = vadd.f32 0.0, %v2323
      %v2325 = vpop.f32.mrb[0].mxu0
      %v2326 = vpop.f32.mrb[0].mxu0
      %v2327 = vadd.f32 0.0, %v2326
      %v2328 = vpop.f32.mrb[0].mxu0
      %2329 = vmatprep.mubr.bf16.mxu0 0
      %2330 = vmatmul.mubr.bf16.gmra.mrb[0].mxu0 %v2127
      %v2331 = vpop.f32.mrb[0].mxu0
      %v2332 = vadd.f32 0.0, %v2331
      %v2333 = vpop.f32.mrb[0].mxu0
      %v2334 = vpop.f32.mrb[0].mxu0
      %v2335 = vadd.f32 0.0, %v2334
      %v2336 = vpop.f32.mrb[0].mxu0
      %2337 = vmatprep.mubr.bf16.mxu0 0
      %2338 = vmatmul.mubr.bf16.gmra.mrb[0].mxu0 %v2128
      %v2339 = vpop.f32.mrb[0].mxu0
      %v2340 = vadd.f32 0.0, %v2339
      %v2341 = vpop.f32.mrb[0].mxu0
      %v2342 = vpop.f32.mrb[0].mxu0
      %v2343 = vadd.f32 0.0, %v2342
      %v2344 = vpop.f32.mrb[0].mxu0
      %2345 = vmatprep.mubr.bf16.mxu0 0
      %2346 = vmatmul.mubr.bf16.gmra.mrb[0].mxu0 %v2129
      %v2347 = vpop.f32.mrb[0].mxu0
      %v2348 = vadd.f32 0.0, %v2347
      %v2349 = vpop.f32.mrb[0].mxu0
      %v2350 = vpop.f32.mrb[0].mxu0
      %v2351 = vadd.f32 0.0, %v2350
      %v2352 = vpop.f32.mrb[0].mxu0
      %2353 = vmatprep.mubr.bf16.mxu0 0
      %2354 = vmatmul.mubr.bf16.gmra.mrb[0].mxu0 %v2130
      %v2355 = vpop.f32.mrb[0].mxu0
      %v2356 = vadd.f32 0.0, %v2355
      %v2357 = vpop.f32.mrb[0].mxu0
      %v2358 = vpop.f32.mrb[0].mxu0
      %v2359 = vadd.f32 0.0, %v2358
      %v2360 = vpop.f32.mrb[0].mxu0
      %2361 = vmatprep.mubr.bf16.mxu0 0
      %2362 = vmatmul.mubr.bf16.gmra.mrb[0].mxu0 %v2131
      %v2363 = vpop.f32.mrb[0].mxu0
      %v2364 = vadd.f32 0.0, %v2363
      %v2365 = vpop.f32.mrb[0].mxu0
      %v2366 = vpop.f32.mrb[0].mxu0
      %v2367 = vadd.f32 0.0, %v2366
      %v2368 = vpop.f32.mrb[0].mxu0
      %2369 = vmatprep.mubr.bf16.mxu0 0
      %2370 = vmatmul.mubr.bf16.gmra.mrb[0].mxu0 %v2132
      %v2371 = vpop.f32.mrb[0].mxu0
      %v2372 = vadd.f32 0.0, %v2371
      %v2373 = vpop.f32.mrb[0].mxu0
      %v2374 = vpop.f32.mrb[0].mxu0
      %v2375 = vadd.f32 0.0, %v2374
      %v2376 = vpop.f32.mrb[0].mxu0
      %2377 = vmatprep.mubr.bf16.mxu0 0
      %2378 = vmatmul.mubr.bf16.gmra.mrb[0].mxu0 %v2133
      %v2379 = vpop.f32.mrb[0].mxu0
      %v2380 = vadd.f32 0.0, %v2379
      %v2381 = vpop.f32.mrb[0].mxu0
      %v2382 = vpop.f32.mrb[0].mxu0
      %v2383 = vadd.f32 0.0, %v2382
      %v2384 = vpop.f32.mrb[0].mxu0
      %2385 = vmatprep.mubr.bf16.mxu0 0
      %2386 = vmatmul.mubr.bf16.gmra.mrb[0].mxu0 %v2134
      %v2387 = vpop.f32.mrb[0].mxu0
      %v2388 = vadd.f32 0.0, %v2387
      %v2389 = vpop.f32.mrb[0].mxu0
      %v2390 = vpop.f32.mrb[0].mxu0
      %v2391 = vadd.f32 0.0, %v2390
      %v2392 = vpop.f32.mrb[0].mxu0
      %2393 = vmatprep.mubr.bf16.mxu0 0
      %2394 = vmatmul.mubr.bf16.gmra.mrb[0].mxu0 %v2135
      %v2395 = vpop.f32.mrb[0].mxu0
      %v2396 = vadd.f32 0.0, %v2395
      %v2397 = vpop.f32.mrb[0].mxu0
      %v2398 = vpop.f32.mrb[0].mxu0
      %v2399 = vadd.f32 0.0, %v2398
      %v2400 = vpop.f32.mrb[0].mxu0
      %2401 = vmatprep.mubr.bf16.mxu0 0
      %2402 = vmatmul.mubr.bf16.gmra.mrb[0].mxu0 %v2136
      %v2403 = vpop.f32.mrb[0].mxu0
      %v2404 = vadd.f32 0.0, %v2403
      %v2405 = vpop.f32.mrb[0].mxu0
      %v2406 = vpop.f32.mrb[0].mxu0
      %v2407 = vadd.f32 0.0, %v2406
      %v2408 = vpop.f32.mrb[0].mxu0
      %2409 = vmatprep.mubr.bf16.mxu0 0
      %2410 = vmatmul.mubr.bf16.gmra.mrb[0].mxu0 %v2137
      %v2411 = vpop.f32.mrb[0].mxu0
      %v2412 = vadd.f32 0.0, %v2411
      %v2413 = vpop.f32.mrb[0].mxu0
      %v2414 = vpop.f32.mrb[0].mxu0
      %v2415 = vadd.f32 0.0, %v2414
      %v2416 = vpop.f32.mrb[0].mxu0
      %2417 = vmatprep.mubr.bf16.mxu0 0
      %2418 = vmatmul.mubr.bf16.gmra.mrb[0].mxu0 %v2138
      %v2419 = vpop.f32.mrb[0].mxu0
      %v2420 = vadd.f32 0.0, %v2419
      %v2421 = vpop.f32.mrb[0].mxu0
      %v2422 = vpop.f32.mrb[0].mxu0
      %v2423 = vadd.f32 0.0, %v2422
      %v2424 = vpop.f32.mrb[0].mxu0
      %2425 = vmatprep.mubr.bf16.mxu0 0
      %2426 = vmatmul.mubr.bf16.gmra.mrb[0].mxu0 %v2139
      %v2427 = vpop.f32.mrb[0].mxu0
      %v2428 = vadd.f32 0.0, %v2427
      %v2429 = vpop.f32.mrb[0].mxu0
      %v2430 = vpop.f32.mrb[0].mxu0
      %v2431 = vadd.f32 0.0, %v2430
      %v2432 = vpop.f32.mrb[0].mxu0
      %2433 = vmatprep.mubr.bf16.mxu0 0
      %2434 = vmatmul.mubr.bf16.gmra.mrb[0].mxu0 %v2140
      %v2435 = vpop.f32.mrb[0].mxu0
      %v2436 = vadd.f32 0.0, %v2435
      %v2437 = vpop.f32.mrb[0].mxu0
      %v2438 = vpop.f32.mrb[0].mxu0
      %v2439 = vadd.f32 0.0, %v2438
      %v2440 = vpop.f32.mrb[0].mxu0
      %2441 = vmatprep.mubr.bf16.mxu0 0
      %2442 = vmatmul.mubr.bf16.gmra.mrb[0].mxu0 %v2141
      %v2443 = vpop.f32.mrb[0].mxu0
      %v2444 = vadd.f32 0.0, %v2443
      %v2445 = vpop.f32.mrb[0].mxu0
      %v2446 = vpop.f32.mrb[0].mxu0
      %v2447 = vadd.f32 0.0, %v2446
      %v2448 = vpop.f32.mrb[0].mxu0
      %2449 = vmatprep.mubr.bf16.mxu0 0
      %2450 = vmatmul.mubr.bf16.gmra.mrb[0].mxu0 %v2142
      %v2451 = vpop.f32.mrb[0].mxu0
      %v2452 = vadd.f32 0.0, %v2451
      %v2453 = vpop.f32.mrb[0].mxu0
      %v2454 = vpop.f32.mrb[0].mxu0
      %v2455 = vadd.f32 0.0, %v2454
      %v2456 = vpop.f32.mrb[0].mxu0
      %2457 = vmatprep.mubr.bf16.mxu0 0
      %2458 = vmatmul.mubr.bf16.gmra.mrb[0].mxu0 %v2143
      %v2459 = vpop.f32.mrb[0].mxu0
      %v2460 = vadd.f32 0.0, %v2459
      %v2461 = vpop.f32.mrb[0].mxu0
      %v2462 = vpop.f32.mrb[0].mxu0
      %v2463 = vadd.f32 0.0, %v2462
      %v2464 = vpop.f32.mrb[0].mxu0
      %2465 = vmatprep.mubr.bf16.mxu0 0
      %2466 = vmatmul.mubr.bf16.gmra.mrb[0].mxu0 %v2144
      %v2467 = vpop.f32.mrb[0].mxu0
      %v2468 = vadd.f32 0.0, %v2467
      %v2469 = vpop.f32.mrb[0].mxu0
      %v2470 = vpop.f32.mrb[0].mxu0
      %v2471 = vadd.f32 0.0, %v2470
      %v2472 = vpop.f32.mrb[0].mxu0
      %2473 = vmatprep.mubr.bf16.mxu0 0
      %2474 = vmatmul.mubr.bf16.gmra.mrb[0].mxu0 %v2145
      %v2475 = vpop.f32.mrb[0].mxu0
      %v2476 = vadd.f32 0.0, %v2475
      %v2477 = vpop.f32.mrb[0].mxu0
      %v2478 = vpop.f32.mrb[0].mxu0
      %v2479 = vadd.f32 0.0, %v2478
      %v2480 = vpop.f32.mrb[0].mxu0
      %2481 = vmatprep.mubr.bf16.mxu0 0
      %2482 = vmatmul.mubr.bf16.gmra.mrb[0].mxu0 %v2146
      %v2483 = vpop.f32.mrb[0].mxu0
      %v2484 = vadd.f32 0.0, %v2483
      %v2485 = vpop.f32.mrb[0].mxu0
      %v2486 = vpop.f32.mrb[0].mxu0
      %v2487 = vadd.f32 0.0, %v2486
      %v2488 = vpop.f32.mrb[0].mxu0
      %2489 = vmatprep.mubr.bf16.mxu0 0
      %2490 = vmatmul.mubr.bf16.gmra.mrb[0].mxu0 %v2147
      %v2491 = vpop.f32.mrb[0].mxu0
      %v2492 = vadd.f32 0.0, %v2491
      %v2493 = vpop.f32.mrb[0].mxu0
      %v2494 = vpop.f32.mrb[0].mxu0
      %v2495 = vadd.f32 0.0, %v2494
      %v2496 = vpop.f32.mrb[0].mxu0
      %2497 = vmatprep.mubr.bf16.mxu0 0
      %2498 = vmatmul.mubr.bf16.gmra.mrb[0].mxu0 %v2148
      %v2499 = vpop.f32.mrb[0].mxu0
      %v2500 = vadd.f32 0.0, %v2499
      %v2501 = vpop.f32.mrb[0].mxu0
      %v2502 = vpop.f32.mrb[0].mxu0
      %v2503 = vadd.f32 0.0, %v2502
      %v2504 = vpop.f32.mrb[0].mxu0
      %2505 = vmatprep.mubr.bf16.mxu0 0
      %2506 = vmatmul.mubr.bf16.gmra.mrb[0].mxu0 %v2149
      %v2507 = vpop.f32.mrb[0].mxu0
      %v2508 = vadd.f32 0.0, %v2507
      %v2509 = vpop.f32.mrb[0].mxu0
      %v2510 = vpop.f32.mrb[0].mxu0
      %v2511 = vadd.f32 0.0, %v2510
      %v2512 = vpop.f32.mrb[0].mxu0
      %2513 = vmatprep.mubr.bf16.mxu0 0
      %2514 = vmatmul.mubr.bf16.gmra.mrb[0].mxu0 %v2150
      %v2515 = vpop.f32.mrb[0].mxu0
      %v2516 = vadd.f32 0.0, %v2515
      %v2517 = vpop.f32.mrb[0].mxu0
      %v2518 = vpop.f32.mrb[0].mxu0
      %v2519 = vadd.f32 0.0, %v2518
      %v2520 = vpop.f32.mrb[0].mxu0
      %2521 = vmatprep.mubr.bf16.mxu0 0
      %2522 = vmatmul.mubr.bf16.gmra.mrb[0].mxu0 %v2151
      %v2523 = vpop.f32.mrb[0].mxu0
      %v2524 = vadd.f32 0.0, %v2523
      %v2525 = vpop.f32.mrb[0].mxu0
      %v2526 = vpop.f32.mrb[0].mxu0
      %v2527 = vadd.f32 0.0, %v2526
      %v2528 = vpop.f32.mrb[0].mxu0
      %2529 = vmatprep.mubr.bf16.mxu0 0
      %2530 = vmatmul.mubr.bf16.gmra.mrb[0].mxu0 %v2152
      %v2531 = vpop.f32.mrb[0].mxu0
      %v2532 = vadd.f32 0.0, %v2531
      %v2533 = vpop.f32.mrb[0].mxu0
      %v2534 = vpop.f32.mrb[0].mxu0
      %v2535 = vadd.f32 0.0, %v2534
      %v2536 = vpop.f32.mrb[0].mxu0
      %2537 = vmatprep.mubr.bf16.mxu0 0
      %2538 = vmatmul.mubr.bf16.gmra.mrb[0].mxu0 %v2153
      %v2539 = vpop.f32.mrb[0].mxu0
      %v2540 = vadd.f32 0.0, %v2539
      %v2541 = vpop.f32.mrb[0].mxu0
      %v2542 = vpop.f32.mrb[0].mxu0
      %v2543 = vadd.f32 0.0, %v2542
      %v2544 = vpop.f32.mrb[0].mxu0
      %2545 = vmatprep.mubr.bf16.mxu0 0
      %2546 = vmatmul.mubr.bf16.gmra.mrb[0].mxu0 %v2154
      %v2547 = vpop.f32.mrb[0].mxu0
      %v2548 = vadd.f32 0.0, %v2547
      %v2549 = vpop.f32.mrb[0].mxu0
      %v2550 = vpop.f32.mrb[0].mxu0
      %v2551 = vadd.f32 0.0, %v2550
      %v2552 = vpop.f32.mrb[0].mxu0
      %2553 = vmatprep.mubr.bf16.mxu0 0
      %2554 = vmatmul.mubr.bf16.gmra.mrb[0].mxu0 %v2155
      %v2555 = vpop.f32.mrb[0].mxu0
      %v2556 = vadd.f32 0.0, %v2555
      %v2557 = vpop.f32.mrb[0].mxu0
      %v2558 = vpop.f32.mrb[0].mxu0
      %v2559 = vadd.f32 0.0, %v2558
      %v2560 = vpop.f32.mrb[0].mxu0
      %2561 = vmatprep.mubr.bf16.mxu0 0
      %2562 = vmatmul.mubr.bf16.gmra.mrb[0].mxu0 %v2156
      %v2563 = vpop.f32.mrb[0].mxu0
      %v2564 = vadd.f32 0.0, %v2563
      %v2565 = vpop.f32.mrb[0].mxu0
      %v2566 = vpop.f32.mrb[0].mxu0
      %v2567 = vadd.f32 0.0, %v2566
      %v2568 = vpop.f32.mrb[0].mxu0
      %2569 = vmatprep.mubr.bf16.mxu0 0
      %2570 = vmatmul.mubr.bf16.gmra.mrb[0].mxu0 %v2157
      %v2571 = vpop.f32.mrb[0].mxu0
      %v2572 = vadd.f32 0.0, %v2571
      %v2573 = vpop.f32.mrb[0].mxu0
      %v2574 = vpop.f32.mrb[0].mxu0
      %v2575 = vadd.f32 0.0, %v2574
      %v2576 = vpop.f32.mrb[0].mxu0
      %2577 = vmatprep.mubr.bf16.mxu0 0
      %2578 = vmatmul.mubr.bf16.gmra.mrb[0].mxu0 %v2158
      %v2579 = vpop.f32.mrb[0].mxu0
      %v2580 = vadd.f32 0.0, %v2579
      %v2581 = vpop.f32.mrb[0].mxu0
      %v2582 = vpop.f32.mrb[0].mxu0
      %v2583 = vadd.f32 0.0, %v2582
      %v2584 = vpop.f32.mrb[0].mxu0
      %2585 = vmatprep.mubr.bf16.mxu0 0
      %2586 = vmatmul.mubr.bf16.gmra.mrb[0].mxu0 %v2159
      %v2587 = vpop.f32.mrb[0].mxu0
      %v2588 = vadd.f32 0.0, %v2587
      %v2589 = vpop.f32.mrb[0].mxu0
      %v2590 = vpop.f32.mrb[0].mxu0
      %v2591 = vadd.f32 0.0, %v2590
      %v2592 = vpop.f32.mrb[0].mxu0
      %2593 = vmatprep.mubr.bf16.mxu0 0
      %2594 = vmatmul.mubr.bf16.gmra.mrb[0].mxu0 %v2160
      %v2595 = vpop.f32.mrb[0].mxu0
      %v2596 = vadd.f32 0.0, %v2595
      %v2597 = vpop.f32.mrb[0].mxu0
      %v2598 = vpop.f32.mrb[0].mxu0
      %v2599 = vadd.f32 0.0, %v2598
      %v2600 = vpop.f32.mrb[0].mxu0
      %2601 = vmatprep.mubr.bf16.mxu0 0
      %2602 = vmatmul.mubr.bf16.gmra.mrb[0].mxu0 %v2161
      %v2603 = vpop.f32.mrb[0].mxu0
      %v2604 = vadd.f32 0.0, %v2603
      %v2605 = vpop.f32.mrb[0].mxu0
      %v2606 = vpop.f32.mrb[0].mxu0
      %v2607 = vadd.f32 0.0, %v2606
      %v2608 = vpop.f32.mrb[0].mxu0
      %2609 = vmatprep.mubr.bf16.mxu0 0
      %2610 = vmatmul.mubr.bf16.gmra.mrb[0].mxu0 %v2162
      %v2611 = vpop.f32.mrb[0].mxu0
      %v2612 = vadd.f32 0.0, %v2611
      %v2613 = vpop.f32.mrb[0].mxu0
      %v2614 = vpop.f32.mrb[0].mxu0
      %v2615 = vadd.f32 0.0, %v2614
      %v2616 = vpop.f32.mrb[0].mxu0
      %2617 = vmatprep.mubr.bf16.mxu0 0
      %2618 = vmatmul.mubr.bf16.gmra.mrb[0].mxu0 %v2163
      %v2619 = vpop.f32.mrb[0].mxu0
      %v2620 = vadd.f32 0.0, %v2619
      %v2621 = vpop.f32.mrb[0].mxu0
      %v2622 = vpop.f32.mrb[0].mxu0
      %v2623 = vadd.f32 0.0, %v2622
      %v2624 = vpop.f32.mrb[0].mxu0
      %2625 = vmatprep.mubr.bf16.mxu0 0
      %2626 = vmatmul.mubr.bf16.gmra.mrb[0].mxu0 %v2164
      %v2627 = vpop.f32.mrb[0].mxu0
      %v2628 = vadd.f32 0.0, %v2627
      %v2629 = vpop.f32.mrb[0].mxu0
      %v2630 = vpop.f32.mrb[0].mxu0
      %v2631 = vadd.f32 0.0, %v2630
      %v2632 = vpop.f32.mrb[0].mxu0
      %2633 = vmatprep.mubr.bf16.mxu0 0
      %2634 = vmatmul.mubr.bf16.gmra.mrb[0].mxu0 %v2165
      %v2635 = vpop.f32.mrb[0].mxu0
      %v2636 = vadd.f32 0.0, %v2635
      %v2637 = vpop.f32.mrb[0].mxu0
      %v2638 = vpop.f32.mrb[0].mxu0
      %v2639 = vadd.f32 0.0, %v2638
      %v2640 = vpop.f32.mrb[0].mxu0
      %2641 = vmatprep.mubr.bf16.mxu0 0
      %2642 = vmatmul.mubr.bf16.gmra.mrb[0].mxu0 %v2166
      %v2643 = vpop.f32.mrb[0].mxu0
      %v2644 = vadd.f32 0.0, %v2643
      %v2645 = vpop.f32.mrb[0].mxu0
      %v2646 = vpop.f32.mrb[0].mxu0
      %v2647 = vadd.f32 0.0, %v2646
      %v2648 = vpop.f32.mrb[0].mxu0
      %2649 = vmatprep.mubr.bf16.mxu0 0
      %2650 = vmatmul.mubr.bf16.gmra.mrb[0].mxu0 %v2167
      %v2651 = vpop.f32.mrb[0].mxu0
      %v2652 = vadd.f32 0.0, %v2651
      %v2653 = vpop.f32.mrb[0].mxu0
      %v2654 = vpop.f32.mrb[0].mxu0
      %v2655 = vadd.f32 0.0, %v2654
      %v2656 = vpop.f32.mrb[0].mxu0
      %2657 = vmatprep.mubr.bf16.mxu0 0
      %2658 = vmatmul.mubr.bf16.gmra.mrb[0].mxu0 %v2168
      %v2659 = vpop.f32.mrb[0].mxu0
      %v2660 = vadd.f32 0.0, %v2659
      %v2661 = vpop.f32.mrb[0].mxu0
      %v2662 = vpop.f32.mrb[0].mxu0
      %v2663 = vadd.f32 0.0, %v2662
      %v2664 = vpop.f32.mrb[0].mxu0
      %2665 = vmatprep.mubr.bf16.mxu0 0
      %2666 = vmatmul.mubr.bf16.gmra.mrb[0].mxu0 %v2169
      %v2667 = vpop.f32.mrb[0].mxu0
      %v2668 = vadd.f32 0.0, %v2667
      %v2669 = vpop.f32.mrb[0].mxu0
      %v2670 = vpop.f32.mrb[0].mxu0
      %v2671 = vadd.f32 0.0, %v2670
      %v2672 = vpop.f32.mrb[0].mxu0
      %2673 = vmatprep.mubr.bf16.mxu0 0
      %2674 = vmatmul.mubr.bf16.gmra.mrb[0].mxu0 %v2170
      %v2675 = vpop.f32.mrb[0].mxu0
      %v2676 = vadd.f32 0.0, %v2675
      %v2677 = vpop.f32.mrb[0].mxu0
      %v2678 = vpop.f32.mrb[0].mxu0
      %v2679 = vadd.f32 0.0, %v2678
      %v2680 = vpop.f32.mrb[0].mxu0
      %2681 = vmatprep.mubr.bf16.mxu0 0
      %2682 = vmatmul.mubr.bf16.gmra.mrb[0].mxu0 %v2171
      %v2683 = vpop.f32.mrb[0].mxu0
      %v2684 = vadd.f32 0.0, %v2683
      %v2685 = vpop.f32.mrb[0].mxu0
      %v2686 = vpop.f32.mrb[0].mxu0
      %v2687 = vadd.f32 0.0, %v2686
      %v2688 = vpop.f32.mrb[0].mxu0
      %2689 = vmatprep.mubr.bf16.mxu0 0
      %2690 = vmatmul.mubr.bf16.gmra.mrb[0].mxu0 %v2172
      %v2691 = vpop.f32.mrb[0].mxu0
      %v2692 = vadd.f32 0.0, %v2691
      %v2693 = vpop.f32.mrb[0].mxu0
      %v2694 = vpop.f32.mrb[0].mxu0
      %v2695 = vadd.f32 0.0, %v2694
      %v2696 = vpop.f32.mrb[0].mxu0
      %2697 = vmatprep.mubr.bf16.mxu0 0
      %2698 = vmatmul.mubr.bf16.gmra.mrb[0].mxu0 %v2173
      %v2699 = vpop.f32.mrb[0].mxu0
      %v2700 = vadd.f32 0.0, %v2699
      %v2701 = vpop.f32.mrb[0].mxu0
      %v2702 = vpop.f32.mrb[0].mxu0
      %v2703 = vadd.f32 0.0, %v2702
      %v2704 = vpop.f32.mrb[0].mxu0
      %2705 = vmatprep.mubr.bf16.mxu0 0
      %2706 = vmatmul.mubr.bf16.gmra.mrb[0].mxu0 %v2174
      %v2707 = vpop.f32.mrb[0].mxu0
      %v2708 = vadd.f32 0.0, %v2707
      %v2709 = vpop.f32.mrb[0].mxu0
      %v2710 = vpop.f32.mrb[0].mxu0
      %v2711 = vadd.f32 0.0, %v2710
      %v2712 = vpop.f32.mrb[0].mxu0
      %2713 = vmatprep.mubr.bf16.mxu0 0
      %2714 = vmatmul.mubr.bf16.gmra.mrb[0].mxu0 %v2175
      %v2715 = vpop.f32.mrb[0].mxu0
      %v2716 = vadd.f32 0.0, %v2715
      %v2717 = vpop.f32.mrb[0].mxu0
      %v2718 = vpop.f32.mrb[0].mxu0
      %v2719 = vadd.f32 0.0, %v2718
      %v2720 = vpop.f32.mrb[0].mxu0
      %2721 = vmatprep.mubr.bf16.mxu0 0
      %2722 = vmatmul.mubr.bf16.gmra.mrb[0].mxu0 %v2176
      %v2723 = vpop.f32.mrb[0].mxu0
      %v2724 = vadd.f32 0.0, %v2723
      %v2725 = vpop.f32.mrb[0].mxu0
      %v2726 = vpop.f32.mrb[0].mxu0
      %v2727 = vadd.f32 0.0, %v2726
      %v2728 = vpop.f32.mrb[0].mxu0
      %2729 = vmatprep.mubr.bf16.mxu0 0
      %2730 = vmatmul.mubr.bf16.gmra.mrb[0].mxu0 %v2177
      %v2731 = vpop.f32.mrb[0].mxu0
      %v2732 = vadd.f32 0.0, %v2731
      %v2733 = vpop.f32.mrb[0].mxu0
      %v2734 = vpop.f32.mrb[0].mxu0
      %v2735 = vadd.f32 0.0, %v2734
      %v2736 = vpop.f32.mrb[0].mxu0
      %2737 = vmatprep.mubr.bf16.mxu0 0
      %2738 = vmatmul.mubr.bf16.gmra.mrb[0].mxu0 %v2178
      %v2739 = vpop.f32.mrb[0].mxu0
      %v2740 = vadd.f32 0.0, %v2739
      %v2741 = vpop.f32.mrb[0].mxu0
      %v2742 = vpop.f32.mrb[0].mxu0
      %v2743 = vadd.f32 0.0, %v2742
      %v2744 = vpop.f32.mrb[0].mxu0
      %2745 = vmatprep.mubr.bf16.mxu0 0
      %2746 = vmatmul.mubr.bf16.gmra.mrb[0].mxu0 %v2179
      %v2747 = vpop.f32.mrb[0].mxu0
      %v2748 = vadd.f32 0.0, %v2747
      %v2749 = vpop.f32.mrb[0].mxu0
      %v2750 = vpop.f32.mrb[0].mxu0
      %v2751 = vadd.f32 0.0, %v2750
      %v2752 = vpop.f32.mrb[0].mxu0
      %2753 = vmatprep.mubr.bf16.mxu0 0
      %2754 = vmatmul.mubr.bf16.gmra.mrb[0].mxu0 %v2180
      %v2755 = vpop.f32.mrb[0].mxu0
      %v2756 = vadd.f32 0.0, %v2755
      %v2757 = vpop.f32.mrb[0].mxu0
      %v2758 = vpop.f32.mrb[0].mxu0
      %v2759 = vadd.f32 0.0, %v2758
      %v2760 = vpop.f32.mrb[0].mxu0
      %2761 = vmatprep.mubr.bf16.mxu0 0
      %2762 = vmatmul.mubr.bf16.gmra.mrb[0].mxu0 %v2181
      %v2763 = vpop.f32.mrb[0].mxu0
      %v2764 = vadd.f32 0.0, %v2763
      %v2765 = vpop.f32.mrb[0].mxu0
      %v2766 = vpop.f32.mrb[0].mxu0
      %v2767 = vadd.f32 0.0, %v2766
      %v2768 = vpop.f32.mrb[0].mxu0
      %2769 = vmatprep.mubr.bf16.mxu0 0
      %2770 = vmatmul.mubr.bf16.gmra.mrb[0].mxu0 %v2182
      %v2771 = vpop.f32.mrb[0].mxu0
      %v2772 = vadd.f32 0.0, %v2771
      %v2773 = vpop.f32.mrb[0].mxu0
      %v2774 = vpop.f32.mrb[0].mxu0
      %v2775 = vadd.f32 0.0, %v2774
      %v2776 = vpop.f32.mrb[0].mxu0
      %2777 = vmatprep.mubr.bf16.mxu0 0
      %2778 = vmatmul.mubr.bf16.gmra.mrb[0].mxu0 %v2183
      %v2779 = vpop.f32.mrb[0].mxu0
      %v2780 = vadd.f32 0.0, %v2779
      %v2781 = vpop.f32.mrb[0].mxu0
      %v2782 = vpop.f32.mrb[0].mxu0
      %v2783 = vadd.f32 0.0, %v2782
      %v2784 = vpop.f32.mrb[0].mxu0
      %2785 = vmatprep.mubr.bf16.mxu0 0
      %2786 = vmatmul.mubr.bf16.gmra.mrb[0].mxu0 %v2184
      %v2787 = vpop.f32.mrb[0].mxu0
      %v2788 = vadd.f32 0.0, %v2787
      %v2789 = vpop.f32.mrb[0].mxu0
      %v2790 = vpop.f32.mrb[0].mxu0
      %v2791 = vadd.f32 0.0, %v2790
      %v2792 = vpop.f32.mrb[0].mxu0
      %2793 = vdwg.mxu0
      %v2794 = vmul.f32 %v1223, %v2284
      %v2795 = vmul.f32 %v1224, %v2287
      %v2796 = vmul.f32 %v1225, %v2292
      %v2797 = vmul.f32 %v1226, %v2295
      %v2798 = vmul.f32 %v1227, %v2300
      %v2799 = vmul.f32 %v1228, %v2303
      %v2800 = vmul.f32 %v1229, %v2308
      %v2801 = vmul.f32 %v1230, %v2311
      %v2802 = vmul.f32 %v1231, %v2316
      %v2803 = vmul.f32 %v1232, %v2319
      %v2804 = vmul.f32 %v1233, %v2324
      %v2805 = vmul.f32 %v1234, %v2327
      %v2806 = vmul.f32 %v1235, %v2332
      %v2807 = vmul.f32 %v1236, %v2335
      %v2808 = vmul.f32 %v1237, %v2340
      %v2809 = vmul.f32 %v1238, %v2343
      %v2810 = vmul.f32 %v1239, %v2348
      %v2811 = vmul.f32 %v1240, %v2351
      %v2812 = vmul.f32 %v1241, %v2356
      %v2813 = vmul.f32 %v1242, %v2359
      %v2814 = vmul.f32 %v1243, %v2364
      %v2815 = vmul.f32 %v1244, %v2367
      %v2816 = vmul.f32 %v1245, %v2372
      %v2817 = vmul.f32 %v1246, %v2375
      %v2818 = vmul.f32 %v1247, %v2380
      %v2819 = vmul.f32 %v1248, %v2383
      %v2820 = vmul.f32 %v1249, %v2388
      %v2821 = vmul.f32 %v1250, %v2391
      %v2822 = vmul.f32 %v1251, %v2396
      %v2823 = vmul.f32 %v1252, %v2399
      %v2824 = vmul.f32 %v1253, %v2404
      %v2825 = vmul.f32 %v1254, %v2407
      %v2826 = vmul.f32 %v1255, %v2412
      %v2827 = vmul.f32 %v1256, %v2415
      %v2828 = vmul.f32 %v1257, %v2420
      %v2829 = vmul.f32 %v1258, %v2423
      %v2830 = vmul.f32 %v1259, %v2428
      %v2831 = vmul.f32 %v1260, %v2431
      %v2832 = vmul.f32 %v1261, %v2436
      %v2833 = vmul.f32 %v1262, %v2439
      %v2834 = vmul.f32 %v1263, %v2444
      %v2835 = vmul.f32 %v1264, %v2447
      %v2836 = vmul.f32 %v1265, %v2452
      %v2837 = vmul.f32 %v1266, %v2455
      %v2838 = vmul.f32 %v1267, %v2460
      %v2839 = vmul.f32 %v1268, %v2463
      %v2840 = vmul.f32 %v1269, %v2468
      %v2841 = vmul.f32 %v1270, %v2471
      %v2842 = vmul.f32 %v1271, %v2476
      %v2843 = vmul.f32 %v1272, %v2479
      %v2844 = vmul.f32 %v1273, %v2484
      %v2845 = vmul.f32 %v1274, %v2487
      %v2846 = vmul.f32 %v1275, %v2492
      %v2847 = vmul.f32 %v1276, %v2495
      %v2848 = vmul.f32 %v1277, %v2500
      %v2849 = vmul.f32 %v1278, %v2503
      %v2850 = vmul.f32 %v1279, %v2508
      %v2851 = vmul.f32 %v1280, %v2511
      %v2852 = vmul.f32 %v1281, %v2516
      %v2853 = vmul.f32 %v1282, %v2519
      %v2854 = vmul.f32 %v1283, %v2524
      %v2855 = vmul.f32 %v1284, %v2527
      %v2856 = vmul.f32 %v1285, %v2532
      %v2857 = vmul.f32 %v1286, %v2535
      %v2858 = vmul.f32 %v1287, %v2540
      %v2859 = vmul.f32 %v1288, %v2543
      %v2860 = vmul.f32 %v1289, %v2548
      %v2861 = vmul.f32 %v1290, %v2551
      %v2862 = vmul.f32 %v1291, %v2556
      %v2863 = vmul.f32 %v1292, %v2559
      %v2864 = vmul.f32 %v1293, %v2564
      %v2865 = vmul.f32 %v1294, %v2567
      %v2866 = vmul.f32 %v1295, %v2572
      %v2867 = vmul.f32 %v1296, %v2575
      %v2868 = vmul.f32 %v1297, %v2580
      %v2869 = vmul.f32 %v1298, %v2583
      %v2870 = vmul.f32 %v1299, %v2588
      %v2871 = vmul.f32 %v1300, %v2591
      %v2872 = vmul.f32 %v1301, %v2596
      %v2873 = vmul.f32 %v1302, %v2599
      %v2874 = vmul.f32 %v1303, %v2604
      %v2875 = vmul.f32 %v1304, %v2607
      %v2876 = vmul.f32 %v1305, %v2612
      %v2877 = vmul.f32 %v1306, %v2615
      %v2878 = vmul.f32 %v1307, %v2620
      %v2879 = vmul.f32 %v1308, %v2623
      %v2880 = vmul.f32 %v1309, %v2628
      %v2881 = vmul.f32 %v1310, %v2631
      %v2882 = vmul.f32 %v1311, %v2636
      %v2883 = vmul.f32 %v1312, %v2639
      %v2884 = vmul.f32 %v1313, %v2644
      %v2885 = vmul.f32 %v1314, %v2647
      %v2886 = vmul.f32 %v1315, %v2652
      %v2887 = vmul.f32 %v1316, %v2655
      %v2888 = vmul.f32 %v1317, %v2660
      %v2889 = vmul.f32 %v1318, %v2663
      %v2890 = vmul.f32 %v1319, %v2668
      %v2891 = vmul.f32 %v1320, %v2671
      %v2892 = vmul.f32 %v1321, %v2676
      %v2893 = vmul.f32 %v1322, %v2679
      %v2894 = vmul.f32 %v1323, %v2684
      %v2895 = vmul.f32 %v1324, %v2687
      %v2896 = vmul.f32 %v1325, %v2692
      %v2897 = vmul.f32 %v1326, %v2695
      %v2898 = vmul.f32 %v1327, %v2700
      %v2899 = vmul.f32 %v1328, %v2703
      %v2900 = vmul.f32 %v1329, %v2708
      %v2901 = vmul.f32 %v1330, %v2711
      %v2902 = vmul.f32 %v1331, %v2716
      %v2903 = vmul.f32 %v1332, %v2719
      %v2904 = vmul.f32 %v1333, %v2724
      %v2905 = vmul.f32 %v1334, %v2727
      %v2906 = vmul.f32 %v1335, %v2732
      %v2907 = vmul.f32 %v1336, %v2735
      %v2908 = vmul.f32 %v1337, %v2740
      %v2909 = vmul.f32 %v1338, %v2743
      %v2910 = vmul.f32 %v1339, %v2748
      %v2911 = vmul.f32 %v1340, %v2751
      %v2912 = vmul.f32 %v1341, %v2756
      %v2913 = vmul.f32 %v1342, %v2759
      %v2914 = vmul.f32 %v1343, %v2764
      %v2915 = vmul.f32 %v1344, %v2767
      %v2916 = vmul.f32 %v1345, %v2772
      %v2917 = vmul.f32 %v1346, %v2775
      %v2918 = vmul.f32 %v1347, %v2780
      %v2919 = vmul.f32 %v1348, %v2783
      %v2920 = vmul.f32 %v1349, %v2788
      %v2921 = vmul.f32 %v1350, %v2791
      %v2922 = vpack.c.bf16 %v2795, %v2794
      %v2923 = vpack.c.bf16 %v2797, %v2796
      %v2924 = vpack.c.bf16 %v2799, %v2798
      %v2925 = vpack.c.bf16 %v2801, %v2800
      %v2926 = vpack.c.bf16 %v2803, %v2802
      %v2927 = vpack.c.bf16 %v2805, %v2804
      %v2928 = vpack.c.bf16 %v2807, %v2806
      %v2929 = vpack.c.bf16 %v2809, %v2808
      %v2930 = vpack.c.bf16 %v2811, %v2810
      %v2931 = vpack.c.bf16 %v2813, %v2812
      %v2932 = vpack.c.bf16 %v2815, %v2814
      %v2933 = vpack.c.bf16 %v2817, %v2816
      %v2934 = vpack.c.bf16 %v2819, %v2818
      %v2935 = vpack.c.bf16 %v2821, %v2820
      %v2936 = vpack.c.bf16 %v2823, %v2822
      %v2937 = vpack.c.bf16 %v2825, %v2824
      %v2938 = vpack.c.bf16 %v2827, %v2826
      %v2939 = vpack.c.bf16 %v2829, %v2828
      %v2940 = vpack.c.bf16 %v2831, %v2830
      %v2941 = vpack.c.bf16 %v2833, %v2832
      %v2942 = vpack.c.bf16 %v2835, %v2834
      %v2943 = vpack.c.bf16 %v2837, %v2836
      %v2944 = vpack.c.bf16 %v2839, %v2838
      %v2945 = vpack.c.bf16 %v2841, %v2840
      %v2946 = vpack.c.bf16 %v2843, %v2842
      %v2947 = vpack.c.bf16 %v2845, %v2844
      %v2948 = vpack.c.bf16 %v2847, %v2846
      %v2949 = vpack.c.bf16 %v2849, %v2848
      %v2950 = vpack.c.bf16 %v2851, %v2850
      %v2951 = vpack.c.bf16 %v2853, %v2852
      %v2952 = vpack.c.bf16 %v2855, %v2854
      %v2953 = vpack.c.bf16 %v2857, %v2856
      %v2954 = vpack.c.bf16 %v2859, %v2858
      %v2955 = vpack.c.bf16 %v2861, %v2860
      %v2956 = vpack.c.bf16 %v2863, %v2862
      %v2957 = vpack.c.bf16 %v2865, %v2864
      %v2958 = vpack.c.bf16 %v2867, %v2866
      %v2959 = vpack.c.bf16 %v2869, %v2868
      %v2960 = vpack.c.bf16 %v2871, %v2870
      %v2961 = vpack.c.bf16 %v2873, %v2872
      %v2962 = vpack.c.bf16 %v2875, %v2874
      %v2963 = vpack.c.bf16 %v2877, %v2876
      %v2964 = vpack.c.bf16 %v2879, %v2878
      %v2965 = vpack.c.bf16 %v2881, %v2880
      %v2966 = vpack.c.bf16 %v2883, %v2882
      %v2967 = vpack.c.bf16 %v2885, %v2884
      %v2968 = vpack.c.bf16 %v2887, %v2886
      %v2969 = vpack.c.bf16 %v2889, %v2888
      %v2970 = vpack.c.bf16 %v2891, %v2890
      %v2971 = vpack.c.bf16 %v2893, %v2892
      %v2972 = vpack.c.bf16 %v2895, %v2894
      %v2973 = vpack.c.bf16 %v2897, %v2896
      %v2974 = vpack.c.bf16 %v2899, %v2898
      %v2975 = vpack.c.bf16 %v2901, %v2900
      %v2976 = vpack.c.bf16 %v2903, %v2902
      %v2977 = vpack.c.bf16 %v2905, %v2904
      %v2978 = vpack.c.bf16 %v2907, %v2906
      %v2979 = vpack.c.bf16 %v2909, %v2908
      %v2980 = vpack.c.bf16 %v2911, %v2910
      %v2981 = vpack.c.bf16 %v2913, %v2912
      %v2982 = vpack.c.bf16 %v2915, %v2914
      %v2983 = vpack.c.bf16 %v2917, %v2916
      %v2984 = vpack.c.bf16 %v2919, %v2918
      %v2985 = vpack.c.bf16 %v2921, %v2920
      %v2986 = vld [vmem:[%s5] sm:$0xf]
      %v2987 = vld [vmem:[%s5 + $0x4] sm:$0xf]
      %v2988 = vld [vmem:[%s5 + $0x8] sm:$0xf]
      %v2989 = vld [vmem:[%s5 + $0xc] sm:$0xf]
      %v2990 = vld [vmem:[%s5 + $0x10] sm:$0xf]
      %v2991 = vld [vmem:[%s5 + $0x14] sm:$0xf]
      %v2992 = vld [vmem:[%s5 + $0x18] sm:$0xf]
      %v2993 = vld [vmem:[%s5 + $0x1c] sm:$0xf]
      %v2994 = vld [vmem:[%s5 + $0x20] sm:$0xf]
      %v2995 = vld [vmem:[%s5 + $0x24] sm:$0xf]
      %v2996 = vld [vmem:[%s5 + $0x28] sm:$0xf]
      %v2997 = vld [vmem:[%s5 + $0x2c] sm:$0xf]
      %v2998 = vld [vmem:[%s5 + $0x30] sm:$0xf]
      %v2999 = vld [vmem:[%s5 + $0x34] sm:$0xf]
      %v3000 = vld [vmem:[%s5 + $0x38] sm:$0xf]
      %v3001 = vld [vmem:[%s5 + $0x3c] sm:$0xf]
      %v3018 = vunpack.c.l.b16 %v2986
      %v3019 = vunpack.c.l.b16 %v2987
      %v3020 = vunpack.c.l.b16 %v2988
      %v3021 = vunpack.c.l.b16 %v2989
      %v3022 = vunpack.c.l.b16 %v2990
      %v3023 = vunpack.c.l.b16 %v2991
      %v3024 = vunpack.c.l.b16 %v2992
      %v3025 = vunpack.c.l.b16 %v2993
      %v3026 = vunpack.c.l.b16 %v2994
      %v3027 = vunpack.c.l.b16 %v2995
      %v3028 = vunpack.c.l.b16 %v2996
      %v3029 = vunpack.c.l.b16 %v2997
      %v3030 = vunpack.c.l.b16 %v2998
      %v3031 = vunpack.c.l.b16 %v2999
      %v3032 = vunpack.c.l.b16 %v3000
      %v3033 = vunpack.c.l.b16 %v3001
      %v3034 = vpack.c.b16 %v3019, %v3018
      %v3035 = vpack.c.b16 %v3021, %v3020
      %v3036 = vpack.c.b16 %v3023, %v3022
      %v3037 = vpack.c.b16 %v3025, %v3024
      %v3038 = vpack.c.b16 %v3027, %v3026
      %v3039 = vpack.c.b16 %v3029, %v3028
      %v3040 = vpack.c.b16 %v3031, %v3030
      %v3041 = vpack.c.b16 %v3033, %v3032
      %3050 = vmatprep.subr.bf16.mxu0 0
      %3051 = vmatpush1.bf16.msra.mxu0 %v3034
      %3052 = vmatprep.subr.bf16.mxu0 0
      %3053 = vmatpush1.bf16.msra.mxu0 %v3035
      %3054 = vmatprep.subr.bf16.mxu0 0
      %3055 = vmatpush1.bf16.msra.mxu0 %v3036
      %3056 = vmatprep.subr.bf16.mxu0 0
      %3057 = vmatpush1.bf16.msra.mxu0 %v3037
      %3058 = vmatprep.subr.bf16.mxu0 0
      %3059 = vmatpush1.bf16.msra.mxu0 %v3038
      %3060 = vmatprep.subr.bf16.mxu0 0
      %3061 = vmatpush1.bf16.msra.mxu0 %v3039
      %3062 = vmatprep.subr.bf16.mxu0 0
      %3063 = vmatpush1.bf16.msra.mxu0 %v3040
      %3064 = vmatprep.subr.bf16.mxu0 0
      %3065 = vmatpush1.bf16.msra.mxu0 %v3041
      %3066 = vmatprep.subr.bf16.mxu0 0
      %3067 = vmatpush1.bf16.msra.mxu0 0
      %3068 = vmatprep.subr.bf16.mxu0 0
      %3069 = vmatpush1.bf16.msra.mxu0 0
      %3070 = vmatprep.subr.bf16.mxu0 0
      %3071 = vmatpush1.bf16.msra.mxu0 0
      %3072 = vmatprep.subr.bf16.mxu0 0
      %3073 = vmatpush1.bf16.msra.mxu0 0
      %3074 = vmatprep.subr.bf16.mxu0 0
      %3075 = vmatpush1.bf16.msra.mxu0 0
      %3076 = vmatprep.subr.bf16.mxu0 0
      %3077 = vmatpush1.bf16.msra.mxu0 0
      %3078 = vmatprep.subr.bf16.mxu0 0
      %3079 = vmatpush1.bf16.msra.mxu0 0
      %3080 = vmatprep.subr.bf16.mxu0 0
      %3081 = vmatpush1.bf16.msra.mxu0 0
      %3082 = vmatprep.mubr.bf16.mxu0 0
      %3083 = vmatmul.mubr.bf16.gmra.mrb[0].mxu0 %v2922
      %v3084 = vpop.f32.mrb[0].mxu0
      %v3085 = vadd.f32 0.0, %v3084
      %v3086 = vpop.f32.mrb[0].mxu0
      %v3087 = vpop.f32.mrb[0].mxu0
      %v3088 = vadd.f32 0.0, %v3087
      %v3089 = vpop.f32.mrb[0].mxu0
      %3090 = vmatprep.mubr.bf16.mxu0 0
      %3091 = vmatmul.mubr.bf16.gmra.mrb[0].mxu0 %v2923
      %v3092 = vpop.f32.mrb[0].mxu0
      %v3093 = vadd.f32 0.0, %v3092
      %v3094 = vpop.f32.mrb[0].mxu0
      %v3095 = vpop.f32.mrb[0].mxu0
      %v3096 = vadd.f32 0.0, %v3095
      %v3097 = vpop.f32.mrb[0].mxu0
      %3098 = vmatprep.mubr.bf16.mxu0 0
      %3099 = vmatmul.mubr.bf16.gmra.mrb[0].mxu0 %v2924
      %v3100 = vpop.f32.mrb[0].mxu0
      %v3101 = vadd.f32 0.0, %v3100
      %v3102 = vpop.f32.mrb[0].mxu0
      %v3103 = vpop.f32.mrb[0].mxu0
      %v3104 = vadd.f32 0.0, %v3103
      %v3105 = vpop.f32.mrb[0].mxu0
      %3106 = vmatprep.mubr.bf16.mxu0 0
      %3107 = vmatmul.mubr.bf16.gmra.mrb[0].mxu0 %v2925
      %v3108 = vpop.f32.mrb[0].mxu0
      %v3109 = vadd.f32 0.0, %v3108
      %v3110 = vpop.f32.mrb[0].mxu0
      %v3111 = vpop.f32.mrb[0].mxu0
      %v3112 = vadd.f32 0.0, %v3111
      %v3113 = vpop.f32.mrb[0].mxu0
      %3114 = vmatprep.mubr.bf16.mxu0 0
      %3115 = vmatmul.mubr.bf16.gmra.mrb[0].mxu0 %v2926
      %v3116 = vpop.f32.mrb[0].mxu0
      %v3117 = vadd.f32 0.0, %v3116
      %v3118 = vpop.f32.mrb[0].mxu0
      %v3119 = vpop.f32.mrb[0].mxu0
      %v3120 = vadd.f32 0.0, %v3119
      %v3121 = vpop.f32.mrb[0].mxu0
      %3122 = vmatprep.mubr.bf16.mxu0 0
      %3123 = vmatmul.mubr.bf16.gmra.mrb[0].mxu0 %v2927
      %v3124 = vpop.f32.mrb[0].mxu0
      %v3125 = vadd.f32 0.0, %v3124
      %v3126 = vpop.f32.mrb[0].mxu0
      %v3127 = vpop.f32.mrb[0].mxu0
      %v3128 = vadd.f32 0.0, %v3127
      %v3129 = vpop.f32.mrb[0].mxu0
      %3130 = vmatprep.mubr.bf16.mxu0 0
      %3131 = vmatmul.mubr.bf16.gmra.mrb[0].mxu0 %v2928
      %v3132 = vpop.f32.mrb[0].mxu0
      %v3133 = vadd.f32 0.0, %v3132
      %v3134 = vpop.f32.mrb[0].mxu0
      %v3135 = vpop.f32.mrb[0].mxu0
      %v3136 = vadd.f32 0.0, %v3135
      %v3137 = vpop.f32.mrb[0].mxu0
      %3138 = vmatprep.mubr.bf16.mxu0 0
      %3139 = vmatmul.mubr.bf16.gmra.mrb[0].mxu0 %v2929
      %v3140 = vpop.f32.mrb[0].mxu0
      %v3141 = vadd.f32 0.0, %v3140
      %v3142 = vpop.f32.mrb[0].mxu0
      %v3143 = vpop.f32.mrb[0].mxu0
      %v3144 = vadd.f32 0.0, %v3143
      %v3145 = vpop.f32.mrb[0].mxu0
      %3146 = vmatprep.mubr.bf16.mxu0 0
      %3147 = vmatmul.mubr.bf16.gmra.mrb[0].mxu0 %v2930
      %v3148 = vpop.f32.mrb[0].mxu0
      %v3149 = vadd.f32 0.0, %v3148
      %v3150 = vpop.f32.mrb[0].mxu0
      %v3151 = vpop.f32.mrb[0].mxu0
      %v3152 = vadd.f32 0.0, %v3151
      %v3153 = vpop.f32.mrb[0].mxu0
      %3154 = vmatprep.mubr.bf16.mxu0 0
      %3155 = vmatmul.mubr.bf16.gmra.mrb[0].mxu0 %v2931
      %v3156 = vpop.f32.mrb[0].mxu0
      %v3157 = vadd.f32 0.0, %v3156
      %v3158 = vpop.f32.mrb[0].mxu0
      %v3159 = vpop.f32.mrb[0].mxu0
      %v3160 = vadd.f32 0.0, %v3159
      %v3161 = vpop.f32.mrb[0].mxu0
      %3162 = vmatprep.mubr.bf16.mxu0 0
      %3163 = vmatmul.mubr.bf16.gmra.mrb[0].mxu0 %v2932
      %v3164 = vpop.f32.mrb[0].mxu0
      %v3165 = vadd.f32 0.0, %v3164
      %v3166 = vpop.f32.mrb[0].mxu0
      %v3167 = vpop.f32.mrb[0].mxu0
      %v3168 = vadd.f32 0.0, %v3167
      %v3169 = vpop.f32.mrb[0].mxu0
      %3170 = vmatprep.mubr.bf16.mxu0 0
      %3171 = vmatmul.mubr.bf16.gmra.mrb[0].mxu0 %v2933
      %v3172 = vpop.f32.mrb[0].mxu0
      %v3173 = vadd.f32 0.0, %v3172
      %v3174 = vpop.f32.mrb[0].mxu0
      %v3175 = vpop.f32.mrb[0].mxu0
      %v3176 = vadd.f32 0.0, %v3175
      %v3177 = vpop.f32.mrb[0].mxu0
      %3178 = vmatprep.mubr.bf16.mxu0 0
      %3179 = vmatmul.mubr.bf16.gmra.mrb[0].mxu0 %v2934
      %v3180 = vpop.f32.mrb[0].mxu0
      %v3181 = vadd.f32 0.0, %v3180
      %v3182 = vpop.f32.mrb[0].mxu0
      %v3183 = vpop.f32.mrb[0].mxu0
      %v3184 = vadd.f32 0.0, %v3183
      %v3185 = vpop.f32.mrb[0].mxu0
      %3186 = vmatprep.mubr.bf16.mxu0 0
      %3187 = vmatmul.mubr.bf16.gmra.mrb[0].mxu0 %v2935
      %v3188 = vpop.f32.mrb[0].mxu0
      %v3189 = vadd.f32 0.0, %v3188
      %v3190 = vpop.f32.mrb[0].mxu0
      %v3191 = vpop.f32.mrb[0].mxu0
      %v3192 = vadd.f32 0.0, %v3191
      %v3193 = vpop.f32.mrb[0].mxu0
      %3194 = vmatprep.mubr.bf16.mxu0 0
      %3195 = vmatmul.mubr.bf16.gmra.mrb[0].mxu0 %v2936
      %v3196 = vpop.f32.mrb[0].mxu0
      %v3197 = vadd.f32 0.0, %v3196
      %v3198 = vpop.f32.mrb[0].mxu0
      %v3199 = vpop.f32.mrb[0].mxu0
      %v3200 = vadd.f32 0.0, %v3199
      %v3201 = vpop.f32.mrb[0].mxu0
      %3202 = vmatprep.mubr.bf16.mxu0 0
      %3203 = vmatmul.mubr.bf16.gmra.mrb[0].mxu0 %v2937
      %v3204 = vpop.f32.mrb[0].mxu0
      %v3205 = vadd.f32 0.0, %v3204
      %v3206 = vpop.f32.mrb[0].mxu0
      %v3207 = vpop.f32.mrb[0].mxu0
      %v3208 = vadd.f32 0.0, %v3207
      %v3209 = vpop.f32.mrb[0].mxu0
      %3210 = vmatprep.mubr.bf16.mxu0 0
      %3211 = vmatmul.mubr.bf16.gmra.mrb[0].mxu0 %v2938
      %v3212 = vpop.f32.mrb[0].mxu0
      %v3213 = vadd.f32 0.0, %v3212
      %v3214 = vpop.f32.mrb[0].mxu0
      %v3215 = vpop.f32.mrb[0].mxu0
      %v3216 = vadd.f32 0.0, %v3215
      %v3217 = vpop.f32.mrb[0].mxu0
      %3218 = vmatprep.mubr.bf16.mxu0 0
      %3219 = vmatmul.mubr.bf16.gmra.mrb[0].mxu0 %v2939
      %v3220 = vpop.f32.mrb[0].mxu0
      %v3221 = vadd.f32 0.0, %v3220
      %v3222 = vpop.f32.mrb[0].mxu0
      %v3223 = vpop.f32.mrb[0].mxu0
      %v3224 = vadd.f32 0.0, %v3223
      %v3225 = vpop.f32.mrb[0].mxu0
      %3226 = vmatprep.mubr.bf16.mxu0 0
      %3227 = vmatmul.mubr.bf16.gmra.mrb[0].mxu0 %v2940
      %v3228 = vpop.f32.mrb[0].mxu0
      %v3229 = vadd.f32 0.0, %v3228
      %v3230 = vpop.f32.mrb[0].mxu0
      %v3231 = vpop.f32.mrb[0].mxu0
      %v3232 = vadd.f32 0.0, %v3231
      %v3233 = vpop.f32.mrb[0].mxu0
      %3234 = vmatprep.mubr.bf16.mxu0 0
      %3235 = vmatmul.mubr.bf16.gmra.mrb[0].mxu0 %v2941
      %v3236 = vpop.f32.mrb[0].mxu0
      %v3237 = vadd.f32 0.0, %v3236
      %v3238 = vpop.f32.mrb[0].mxu0
      %v3239 = vpop.f32.mrb[0].mxu0
      %v3240 = vadd.f32 0.0, %v3239
      %v3241 = vpop.f32.mrb[0].mxu0
      %3242 = vmatprep.mubr.bf16.mxu0 0
      %3243 = vmatmul.mubr.bf16.gmra.mrb[0].mxu0 %v2942
      %v3244 = vpop.f32.mrb[0].mxu0
      %v3245 = vadd.f32 0.0, %v3244
      %v3246 = vpop.f32.mrb[0].mxu0
      %v3247 = vpop.f32.mrb[0].mxu0
      %v3248 = vadd.f32 0.0, %v3247
      %v3249 = vpop.f32.mrb[0].mxu0
      %3250 = vmatprep.mubr.bf16.mxu0 0
      %3251 = vmatmul.mubr.bf16.gmra.mrb[0].mxu0 %v2943
      %v3252 = vpop.f32.mrb[0].mxu0
      %v3253 = vadd.f32 0.0, %v3252
      %v3254 = vpop.f32.mrb[0].mxu0
      %v3255 = vpop.f32.mrb[0].mxu0
      %v3256 = vadd.f32 0.0, %v3255
      %v3257 = vpop.f32.mrb[0].mxu0
      %3258 = vmatprep.mubr.bf16.mxu0 0
      %3259 = vmatmul.mubr.bf16.gmra.mrb[0].mxu0 %v2944
      %v3260 = vpop.f32.mrb[0].mxu0
      %v3261 = vadd.f32 0.0, %v3260
      %v3262 = vpop.f32.mrb[0].mxu0
      %v3263 = vpop.f32.mrb[0].mxu0
      %v3264 = vadd.f32 0.0, %v3263
      %v3265 = vpop.f32.mrb[0].mxu0
      %3266 = vmatprep.mubr.bf16.mxu0 0
      %3267 = vmatmul.mubr.bf16.gmra.mrb[0].mxu0 %v2945
      %v3268 = vpop.f32.mrb[0].mxu0
      %v3269 = vadd.f32 0.0, %v3268
      %v3270 = vpop.f32.mrb[0].mxu0
      %v3271 = vpop.f32.mrb[0].mxu0
      %v3272 = vadd.f32 0.0, %v3271
      %v3273 = vpop.f32.mrb[0].mxu0
      %3274 = vmatprep.mubr.bf16.mxu0 0
      %3275 = vmatmul.mubr.bf16.gmra.mrb[0].mxu0 %v2946
      %v3276 = vpop.f32.mrb[0].mxu0
      %v3277 = vadd.f32 0.0, %v3276
      %v3278 = vpop.f32.mrb[0].mxu0
      %v3279 = vpop.f32.mrb[0].mxu0
      %v3280 = vadd.f32 0.0, %v3279
      %v3281 = vpop.f32.mrb[0].mxu0
      %3282 = vmatprep.mubr.bf16.mxu0 0
      %3283 = vmatmul.mubr.bf16.gmra.mrb[0].mxu0 %v2947
      %v3284 = vpop.f32.mrb[0].mxu0
      %v3285 = vadd.f32 0.0, %v3284
      %v3286 = vpop.f32.mrb[0].mxu0
      %v3287 = vpop.f32.mrb[0].mxu0
      %v3288 = vadd.f32 0.0, %v3287
      %v3289 = vpop.f32.mrb[0].mxu0
      %3290 = vmatprep.mubr.bf16.mxu0 0
      %3291 = vmatmul.mubr.bf16.gmra.mrb[0].mxu0 %v2948
      %v3292 = vpop.f32.mrb[0].mxu0
      %v3293 = vadd.f32 0.0, %v3292
      %v3294 = vpop.f32.mrb[0].mxu0
      %v3295 = vpop.f32.mrb[0].mxu0
      %v3296 = vadd.f32 0.0, %v3295
      %v3297 = vpop.f32.mrb[0].mxu0
      %3298 = vmatprep.mubr.bf16.mxu0 0
      %3299 = vmatmul.mubr.bf16.gmra.mrb[0].mxu0 %v2949
      %v3300 = vpop.f32.mrb[0].mxu0
      %v3301 = vadd.f32 0.0, %v3300
      %v3302 = vpop.f32.mrb[0].mxu0
      %v3303 = vpop.f32.mrb[0].mxu0
      %v3304 = vadd.f32 0.0, %v3303
      %v3305 = vpop.f32.mrb[0].mxu0
      %3306 = vmatprep.mubr.bf16.mxu0 0
      %3307 = vmatmul.mubr.bf16.gmra.mrb[0].mxu0 %v2950
      %v3308 = vpop.f32.mrb[0].mxu0
      %v3309 = vadd.f32 0.0, %v3308
      %v3310 = vpop.f32.mrb[0].mxu0
      %v3311 = vpop.f32.mrb[0].mxu0
      %v3312 = vadd.f32 0.0, %v3311
      %v3313 = vpop.f32.mrb[0].mxu0
      %3314 = vmatprep.mubr.bf16.mxu0 0
      %3315 = vmatmul.mubr.bf16.gmra.mrb[0].mxu0 %v2951
      %v3316 = vpop.f32.mrb[0].mxu0
      %v3317 = vadd.f32 0.0, %v3316
      %v3318 = vpop.f32.mrb[0].mxu0
      %v3319 = vpop.f32.mrb[0].mxu0
      %v3320 = vadd.f32 0.0, %v3319
      %v3321 = vpop.f32.mrb[0].mxu0
      %3322 = vmatprep.mubr.bf16.mxu0 0
      %3323 = vmatmul.mubr.bf16.gmra.mrb[0].mxu0 %v2952
      %v3324 = vpop.f32.mrb[0].mxu0
      %v3325 = vadd.f32 0.0, %v3324
      %v3326 = vpop.f32.mrb[0].mxu0
      %v3327 = vpop.f32.mrb[0].mxu0
      %v3328 = vadd.f32 0.0, %v3327
      %v3329 = vpop.f32.mrb[0].mxu0
      %3330 = vmatprep.mubr.bf16.mxu0 0
      %3331 = vmatmul.mubr.bf16.gmra.mrb[0].mxu0 %v2953
      %v3332 = vpop.f32.mrb[0].mxu0
      %v3333 = vadd.f32 0.0, %v3332
      %v3334 = vpop.f32.mrb[0].mxu0
      %v3335 = vpop.f32.mrb[0].mxu0
      %v3336 = vadd.f32 0.0, %v3335
      %v3337 = vpop.f32.mrb[0].mxu0
      %3338 = vmatprep.mubr.bf16.mxu0 0
      %3339 = vmatmul.mubr.bf16.gmra.mrb[0].mxu0 %v2954
      %v3340 = vpop.f32.mrb[0].mxu0
      %v3341 = vadd.f32 0.0, %v3340
      %v3342 = vpop.f32.mrb[0].mxu0
      %v3343 = vpop.f32.mrb[0].mxu0
      %v3344 = vadd.f32 0.0, %v3343
      %v3345 = vpop.f32.mrb[0].mxu0
      %3346 = vmatprep.mubr.bf16.mxu0 0
      %3347 = vmatmul.mubr.bf16.gmra.mrb[0].mxu0 %v2955
      %v3348 = vpop.f32.mrb[0].mxu0
      %v3349 = vadd.f32 0.0, %v3348
      %v3350 = vpop.f32.mrb[0].mxu0
      %v3351 = vpop.f32.mrb[0].mxu0
      %v3352 = vadd.f32 0.0, %v3351
      %v3353 = vpop.f32.mrb[0].mxu0
      %3354 = vmatprep.mubr.bf16.mxu0 0
      %3355 = vmatmul.mubr.bf16.gmra.mrb[0].mxu0 %v2956
      %v3356 = vpop.f32.mrb[0].mxu0
      %v3357 = vadd.f32 0.0, %v3356
      %v3358 = vpop.f32.mrb[0].mxu0
      %v3359 = vpop.f32.mrb[0].mxu0
      %v3360 = vadd.f32 0.0, %v3359
      %v3361 = vpop.f32.mrb[0].mxu0
      %3362 = vmatprep.mubr.bf16.mxu0 0
      %3363 = vmatmul.mubr.bf16.gmra.mrb[0].mxu0 %v2957
      %v3364 = vpop.f32.mrb[0].mxu0
      %v3365 = vadd.f32 0.0, %v3364
      %v3366 = vpop.f32.mrb[0].mxu0
      %v3367 = vpop.f32.mrb[0].mxu0
      %v3368 = vadd.f32 0.0, %v3367
      %v3369 = vpop.f32.mrb[0].mxu0
      %3370 = vmatprep.mubr.bf16.mxu0 0
      %3371 = vmatmul.mubr.bf16.gmra.mrb[0].mxu0 %v2958
      %v3372 = vpop.f32.mrb[0].mxu0
      %v3373 = vadd.f32 0.0, %v3372
      %v3374 = vpop.f32.mrb[0].mxu0
      %v3375 = vpop.f32.mrb[0].mxu0
      %v3376 = vadd.f32 0.0, %v3375
      %v3377 = vpop.f32.mrb[0].mxu0
      %3378 = vmatprep.mubr.bf16.mxu0 0
      %3379 = vmatmul.mubr.bf16.gmra.mrb[0].mxu0 %v2959
      %v3380 = vpop.f32.mrb[0].mxu0
      %v3381 = vadd.f32 0.0, %v3380
      %v3382 = vpop.f32.mrb[0].mxu0
      %v3383 = vpop.f32.mrb[0].mxu0
      %v3384 = vadd.f32 0.0, %v3383
      %v3385 = vpop.f32.mrb[0].mxu0
      %3386 = vmatprep.mubr.bf16.mxu0 0
      %3387 = vmatmul.mubr.bf16.gmra.mrb[0].mxu0 %v2960
      %v3388 = vpop.f32.mrb[0].mxu0
      %v3389 = vadd.f32 0.0, %v3388
      %v3390 = vpop.f32.mrb[0].mxu0
      %v3391 = vpop.f32.mrb[0].mxu0
      %v3392 = vadd.f32 0.0, %v3391
      %v3393 = vpop.f32.mrb[0].mxu0
      %3394 = vmatprep.mubr.bf16.mxu0 0
      %3395 = vmatmul.mubr.bf16.gmra.mrb[0].mxu0 %v2961
      %v3396 = vpop.f32.mrb[0].mxu0
      %v3397 = vadd.f32 0.0, %v3396
      %v3398 = vpop.f32.mrb[0].mxu0
      %v3399 = vpop.f32.mrb[0].mxu0
      %v3400 = vadd.f32 0.0, %v3399
      %v3401 = vpop.f32.mrb[0].mxu0
      %3402 = vmatprep.mubr.bf16.mxu0 0
      %3403 = vmatmul.mubr.bf16.gmra.mrb[0].mxu0 %v2962
      %v3404 = vpop.f32.mrb[0].mxu0
      %v3405 = vadd.f32 0.0, %v3404
      %v3406 = vpop.f32.mrb[0].mxu0
      %v3407 = vpop.f32.mrb[0].mxu0
      %v3408 = vadd.f32 0.0, %v3407
      %v3409 = vpop.f32.mrb[0].mxu0
      %3410 = vmatprep.mubr.bf16.mxu0 0
      %3411 = vmatmul.mubr.bf16.gmra.mrb[0].mxu0 %v2963
      %v3412 = vpop.f32.mrb[0].mxu0
      %v3413 = vadd.f32 0.0, %v3412
      %v3414 = vpop.f32.mrb[0].mxu0
      %v3415 = vpop.f32.mrb[0].mxu0
      %v3416 = vadd.f32 0.0, %v3415
      %v3417 = vpop.f32.mrb[0].mxu0
      %3418 = vmatprep.mubr.bf16.mxu0 0
      %3419 = vmatmul.mubr.bf16.gmra.mrb[0].mxu0 %v2964
      %v3420 = vpop.f32.mrb[0].mxu0
      %v3421 = vadd.f32 0.0, %v3420
      %v3422 = vpop.f32.mrb[0].mxu0
      %v3423 = vpop.f32.mrb[0].mxu0
      %v3424 = vadd.f32 0.0, %v3423
      %v3425 = vpop.f32.mrb[0].mxu0
      %3426 = vmatprep.mubr.bf16.mxu0 0
      %3427 = vmatmul.mubr.bf16.gmra.mrb[0].mxu0 %v2965
      %v3428 = vpop.f32.mrb[0].mxu0
      %v3429 = vadd.f32 0.0, %v3428
      %v3430 = vpop.f32.mrb[0].mxu0
      %v3431 = vpop.f32.mrb[0].mxu0
      %v3432 = vadd.f32 0.0, %v3431
      %v3433 = vpop.f32.mrb[0].mxu0
      %3434 = vmatprep.mubr.bf16.mxu0 0
      %3435 = vmatmul.mubr.bf16.gmra.mrb[0].mxu0 %v2966
      %v3436 = vpop.f32.mrb[0].mxu0
      %v3437 = vadd.f32 0.0, %v3436
      %v3438 = vpop.f32.mrb[0].mxu0
      %v3439 = vpop.f32.mrb[0].mxu0
      %v3440 = vadd.f32 0.0, %v3439
      %v3441 = vpop.f32.mrb[0].mxu0
      %3442 = vmatprep.mubr.bf16.mxu0 0
      %3443 = vmatmul.mubr.bf16.gmra.mrb[0].mxu0 %v2967
      %v3444 = vpop.f32.mrb[0].mxu0
      %v3445 = vadd.f32 0.0, %v3444
      %v3446 = vpop.f32.mrb[0].mxu0
      %v3447 = vpop.f32.mrb[0].mxu0
      %v3448 = vadd.f32 0.0, %v3447
      %v3449 = vpop.f32.mrb[0].mxu0
      %3450 = vmatprep.mubr.bf16.mxu0 0
      %3451 = vmatmul.mubr.bf16.gmra.mrb[0].mxu0 %v2968
      %v3452 = vpop.f32.mrb[0].mxu0
      %v3453 = vadd.f32 0.0, %v3452
      %v3454 = vpop.f32.mrb[0].mxu0
      %v3455 = vpop.f32.mrb[0].mxu0
      %v3456 = vadd.f32 0.0, %v3455
      %v3457 = vpop.f32.mrb[0].mxu0
      %3458 = vmatprep.mubr.bf16.mxu0 0
      %3459 = vmatmul.mubr.bf16.gmra.mrb[0].mxu0 %v2969
      %v3460 = vpop.f32.mrb[0].mxu0
      %v3461 = vadd.f32 0.0, %v3460
      %v3462 = vpop.f32.mrb[0].mxu0
      %v3463 = vpop.f32.mrb[0].mxu0
      %v3464 = vadd.f32 0.0, %v3463
      %v3465 = vpop.f32.mrb[0].mxu0
      %3466 = vmatprep.mubr.bf16.mxu0 0
      %3467 = vmatmul.mubr.bf16.gmra.mrb[0].mxu0 %v2970
      %v3468 = vpop.f32.mrb[0].mxu0
      %v3469 = vadd.f32 0.0, %v3468
      %v3470 = vpop.f32.mrb[0].mxu0
      %v3471 = vpop.f32.mrb[0].mxu0
      %v3472 = vadd.f32 0.0, %v3471
      %v3473 = vpop.f32.mrb[0].mxu0
      %3474 = vmatprep.mubr.bf16.mxu0 0
      %3475 = vmatmul.mubr.bf16.gmra.mrb[0].mxu0 %v2971
      %v3476 = vpop.f32.mrb[0].mxu0
      %v3477 = vadd.f32 0.0, %v3476
      %v3478 = vpop.f32.mrb[0].mxu0
      %v3479 = vpop.f32.mrb[0].mxu0
      %v3480 = vadd.f32 0.0, %v3479
      %v3481 = vpop.f32.mrb[0].mxu0
      %3482 = vmatprep.mubr.bf16.mxu0 0
      %3483 = vmatmul.mubr.bf16.gmra.mrb[0].mxu0 %v2972
      %v3484 = vpop.f32.mrb[0].mxu0
      %v3485 = vadd.f32 0.0, %v3484
      %v3486 = vpop.f32.mrb[0].mxu0
      %v3487 = vpop.f32.mrb[0].mxu0
      %v3488 = vadd.f32 0.0, %v3487
      %v3489 = vpop.f32.mrb[0].mxu0
      %3490 = vmatprep.mubr.bf16.mxu0 0
      %3491 = vmatmul.mubr.bf16.gmra.mrb[0].mxu0 %v2973
      %v3492 = vpop.f32.mrb[0].mxu0
      %v3493 = vadd.f32 0.0, %v3492
      %v3494 = vpop.f32.mrb[0].mxu0
      %v3495 = vpop.f32.mrb[0].mxu0
      %v3496 = vadd.f32 0.0, %v3495
      %v3497 = vpop.f32.mrb[0].mxu0
      %3498 = vmatprep.mubr.bf16.mxu0 0
      %3499 = vmatmul.mubr.bf16.gmra.mrb[0].mxu0 %v2974
      %v3500 = vpop.f32.mrb[0].mxu0
      %v3501 = vadd.f32 0.0, %v3500
      %v3502 = vpop.f32.mrb[0].mxu0
      %v3503 = vpop.f32.mrb[0].mxu0
      %v3504 = vadd.f32 0.0, %v3503
      %v3505 = vpop.f32.mrb[0].mxu0
      %3506 = vmatprep.mubr.bf16.mxu0 0
      %3507 = vmatmul.mubr.bf16.gmra.mrb[0].mxu0 %v2975
      %v3508 = vpop.f32.mrb[0].mxu0
      %v3509 = vadd.f32 0.0, %v3508
      %v3510 = vpop.f32.mrb[0].mxu0
      %v3511 = vpop.f32.mrb[0].mxu0
      %v3512 = vadd.f32 0.0, %v3511
      %v3513 = vpop.f32.mrb[0].mxu0
      %3514 = vmatprep.mubr.bf16.mxu0 0
      %3515 = vmatmul.mubr.bf16.gmra.mrb[0].mxu0 %v2976
      %v3516 = vpop.f32.mrb[0].mxu0
      %v3517 = vadd.f32 0.0, %v3516
      %v3518 = vpop.f32.mrb[0].mxu0
      %v3519 = vpop.f32.mrb[0].mxu0
      %v3520 = vadd.f32 0.0, %v3519
      %v3521 = vpop.f32.mrb[0].mxu0
      %3522 = vmatprep.mubr.bf16.mxu0 0
      %3523 = vmatmul.mubr.bf16.gmra.mrb[0].mxu0 %v2977
      %v3524 = vpop.f32.mrb[0].mxu0
      %v3525 = vadd.f32 0.0, %v3524
      %v3526 = vpop.f32.mrb[0].mxu0
      %v3527 = vpop.f32.mrb[0].mxu0
      %v3528 = vadd.f32 0.0, %v3527
      %v3529 = vpop.f32.mrb[0].mxu0
      %3530 = vmatprep.mubr.bf16.mxu0 0
      %3531 = vmatmul.mubr.bf16.gmra.mrb[0].mxu0 %v2978
      %v3532 = vpop.f32.mrb[0].mxu0
      %v3533 = vadd.f32 0.0, %v3532
      %v3534 = vpop.f32.mrb[0].mxu0
      %v3535 = vpop.f32.mrb[0].mxu0
      %v3536 = vadd.f32 0.0, %v3535
      %v3537 = vpop.f32.mrb[0].mxu0
      %3538 = vmatprep.mubr.bf16.mxu0 0
      %3539 = vmatmul.mubr.bf16.gmra.mrb[0].mxu0 %v2979
      %v3540 = vpop.f32.mrb[0].mxu0
      %v3541 = vadd.f32 0.0, %v3540
      %v3542 = vpop.f32.mrb[0].mxu0
      %v3543 = vpop.f32.mrb[0].mxu0
      %v3544 = vadd.f32 0.0, %v3543
      %v3545 = vpop.f32.mrb[0].mxu0
      %3546 = vmatprep.mubr.bf16.mxu0 0
      %3547 = vmatmul.mubr.bf16.gmra.mrb[0].mxu0 %v2980
      %v3548 = vpop.f32.mrb[0].mxu0
      %v3549 = vadd.f32 0.0, %v3548
      %v3550 = vpop.f32.mrb[0].mxu0
      %v3551 = vpop.f32.mrb[0].mxu0
      %v3552 = vadd.f32 0.0, %v3551
      %v3553 = vpop.f32.mrb[0].mxu0
      %3554 = vmatprep.mubr.bf16.mxu0 0
      %3555 = vmatmul.mubr.bf16.gmra.mrb[0].mxu0 %v2981
      %v3556 = vpop.f32.mrb[0].mxu0
      %v3557 = vadd.f32 0.0, %v3556
      %v3558 = vpop.f32.mrb[0].mxu0
      %v3559 = vpop.f32.mrb[0].mxu0
      %v3560 = vadd.f32 0.0, %v3559
      %v3561 = vpop.f32.mrb[0].mxu0
      %3562 = vmatprep.mubr.bf16.mxu0 0
      %3563 = vmatmul.mubr.bf16.gmra.mrb[0].mxu0 %v2982
      %v3564 = vpop.f32.mrb[0].mxu0
      %v3565 = vadd.f32 0.0, %v3564
      %v3566 = vpop.f32.mrb[0].mxu0
      %v3567 = vpop.f32.mrb[0].mxu0
      %v3568 = vadd.f32 0.0, %v3567
      %v3569 = vpop.f32.mrb[0].mxu0
      %3570 = vmatprep.mubr.bf16.mxu0 0
      %3571 = vmatmul.mubr.bf16.gmra.mrb[0].mxu0 %v2983
      %v3572 = vpop.f32.mrb[0].mxu0
      %v3573 = vadd.f32 0.0, %v3572
      %v3574 = vpop.f32.mrb[0].mxu0
      %v3575 = vpop.f32.mrb[0].mxu0
      %v3576 = vadd.f32 0.0, %v3575
      %v3577 = vpop.f32.mrb[0].mxu0
      %3578 = vmatprep.mubr.bf16.mxu0 0
      %3579 = vmatmul.mubr.bf16.gmra.mrb[0].mxu0 %v2984
      %v3580 = vpop.f32.mrb[0].mxu0
      %v3581 = vadd.f32 0.0, %v3580
      %v3582 = vpop.f32.mrb[0].mxu0
      %v3583 = vpop.f32.mrb[0].mxu0
      %v3584 = vadd.f32 0.0, %v3583
      %v3585 = vpop.f32.mrb[0].mxu0
      %3586 = vmatprep.mubr.bf16.mxu0 0
      %3587 = vmatmul.mubr.bf16.gmra.mrb[0].mxu0 %v2985
      %v3588 = vpop.f32.mrb[0].mxu0
      %v3589 = vadd.f32 0.0, %v3588
      %v3590 = vpop.f32.mrb[0].mxu0
      %v3591 = vpop.f32.mrb[0].mxu0
      %v3592 = vadd.f32 0.0, %v3591
      %v3593 = vpop.f32.mrb[0].mxu0
      %3594 = vdwg.mxu0
      %vm3595 = vcmask 261120
      %3596 = vst.msk [vmem:[%s275] sm:$0xff] %vm3595, %v3085
      %3597 = vst.msk [vmem:[%s275 + $0x8] sm:$0xff] %vm3595, %v3088
      %3598 = vst.msk [vmem:[%s275 + $0x10] sm:$0xff] %vm3595, %v3093
      %3599 = vst.msk [vmem:[%s275 + $0x18] sm:$0xff] %vm3595, %v3096
      %3600 = vst.msk [vmem:[%s275 + $0x20] sm:$0xff] %vm3595, %v3101
      %3601 = vst.msk [vmem:[%s275 + $0x28] sm:$0xff] %vm3595, %v3104
      %3602 = vst.msk [vmem:[%s275 + $0x30] sm:$0xff] %vm3595, %v3109
      %3603 = vst.msk [vmem:[%s275 + $0x38] sm:$0xff] %vm3595, %v3112
      %3604 = vst.msk [vmem:[%s275 + $0x40] sm:$0xff] %vm3595, %v3117
      %3605 = vst.msk [vmem:[%s275 + $0x48] sm:$0xff] %vm3595, %v3120
      %3606 = vst.msk [vmem:[%s275 + $0x50] sm:$0xff] %vm3595, %v3125
      %3607 = vst.msk [vmem:[%s275 + $0x58] sm:$0xff] %vm3595, %v3128
      %3608 = vst.msk [vmem:[%s275 + $0x60] sm:$0xff] %vm3595, %v3133
      %3609 = vst.msk [vmem:[%s275 + $0x68] sm:$0xff] %vm3595, %v3136
      %3610 = vst.msk [vmem:[%s275 + $0x70] sm:$0xff] %vm3595, %v3141
      %3611 = vst.msk [vmem:[%s275 + $0x78] sm:$0xff] %vm3595, %v3144
      %3612 = vst.msk [vmem:[%s275 + $0x80] sm:$0xff] %vm3595, %v3149
      %3613 = vst.msk [vmem:[%s275 + $0x88] sm:$0xff] %vm3595, %v3152
      %3614 = vst.msk [vmem:[%s275 + $0x90] sm:$0xff] %vm3595, %v3157
      %3615 = vst.msk [vmem:[%s275 + $0x98] sm:$0xff] %vm3595, %v3160
      %3616 = vst.msk [vmem:[%s275 + $0xa0] sm:$0xff] %vm3595, %v3165
      %3617 = vst.msk [vmem:[%s275 + $0xa8] sm:$0xff] %vm3595, %v3168
      %3618 = vst.msk [vmem:[%s275 + $0xb0] sm:$0xff] %vm3595, %v3173
      %3619 = vst.msk [vmem:[%s275 + $0xb8] sm:$0xff] %vm3595, %v3176
      %3620 = vst.msk [vmem:[%s275 + $0xc0] sm:$0xff] %vm3595, %v3181
      %3621 = vst.msk [vmem:[%s275 + $0xc8] sm:$0xff] %vm3595, %v3184
      %3622 = vst.msk [vmem:[%s275 + $0xd0] sm:$0xff] %vm3595, %v3189
      %3623 = vst.msk [vmem:[%s275 + $0xd8] sm:$0xff] %vm3595, %v3192
      %3624 = vst.msk [vmem:[%s275 + $0xe0] sm:$0xff] %vm3595, %v3197
      %3625 = vst.msk [vmem:[%s275 + $0xe8] sm:$0xff] %vm3595, %v3200
      %3626 = vst.msk [vmem:[%s275 + $0xf0] sm:$0xff] %vm3595, %v3205
      %3627 = vst.msk [vmem:[%s275 + $0xf8] sm:$0xff] %vm3595, %v3208
      %3628 = vst.msk [vmem:[%s275 + $0x100] sm:$0xff] %vm3595, %v3213
      %3629 = vst.msk [vmem:[%s275 + $0x108] sm:$0xff] %vm3595, %v3216
      %3630 = vst.msk [vmem:[%s275 + $0x110] sm:$0xff] %vm3595, %v3221
      %3631 = vst.msk [vmem:[%s275 + $0x118] sm:$0xff] %vm3595, %v3224
      %3632 = vst.msk [vmem:[%s275 + $0x120] sm:$0xff] %vm3595, %v3229
      %3633 = vst.msk [vmem:[%s275 + $0x128] sm:$0xff] %vm3595, %v3232
      %3634 = vst.msk [vmem:[%s275 + $0x130] sm:$0xff] %vm3595, %v3237
      %3635 = vst.msk [vmem:[%s275 + $0x138] sm:$0xff] %vm3595, %v3240
      %3636 = vst.msk [vmem:[%s275 + $0x140] sm:$0xff] %vm3595, %v3245
      %3637 = vst.msk [vmem:[%s275 + $0x148] sm:$0xff] %vm3595, %v3248
      %3638 = vst.msk [vmem:[%s275 + $0x150] sm:$0xff] %vm3595, %v3253
      %3639 = vst.msk [vmem:[%s275 + $0x158] sm:$0xff] %vm3595, %v3256
      %3640 = vst.msk [vmem:[%s275 + $0x160] sm:$0xff] %vm3595, %v3261
      %3641 = vst.msk [vmem:[%s275 + $0x168] sm:$0xff] %vm3595, %v3264
      %3642 = vst.msk [vmem:[%s275 + $0x170] sm:$0xff] %vm3595, %v3269
      %3643 = vst.msk [vmem:[%s275 + $0x178] sm:$0xff] %vm3595, %v3272
      %3644 = vst.msk [vmem:[%s275 + $0x180] sm:$0xff] %vm3595, %v3277
      %3645 = vst.msk [vmem:[%s275 + $0x188] sm:$0xff] %vm3595, %v3280
      %3646 = vst.msk [vmem:[%s275 + $0x190] sm:$0xff] %vm3595, %v3285
      %3647 = vst.msk [vmem:[%s275 + $0x198] sm:$0xff] %vm3595, %v3288
      %3648 = vst.msk [vmem:[%s275 + $0x1a0] sm:$0xff] %vm3595, %v3293
      %3649 = vst.msk [vmem:[%s275 + $0x1a8] sm:$0xff] %vm3595, %v3296
      %3650 = vst.msk [vmem:[%s275 + $0x1b0] sm:$0xff] %vm3595, %v3301
      %3651 = vst.msk [vmem:[%s275 + $0x1b8] sm:$0xff] %vm3595, %v3304
      %3652 = vst.msk [vmem:[%s275 + $0x1c0] sm:$0xff] %vm3595, %v3309
      %3653 = vst.msk [vmem:[%s275 + $0x1c8] sm:$0xff] %vm3595, %v3312
      %3654 = vst.msk [vmem:[%s275 + $0x1d0] sm:$0xff] %vm3595, %v3317
      %3655 = vst.msk [vmem:[%s275 + $0x1d8] sm:$0xff] %vm3595, %v3320
      %3656 = vst.msk [vmem:[%s275 + $0x1e0] sm:$0xff] %vm3595, %v3325
      %3657 = vst.msk [vmem:[%s275 + $0x1e8] sm:$0xff] %vm3595, %v3328
      %3658 = vst.msk [vmem:[%s275 + $0x1f0] sm:$0xff] %vm3595, %v3333
      %3659 = vst.msk [vmem:[%s275 + $0x1f8] sm:$0xff] %vm3595, %v3336
      %3660 = vst.msk [vmem:[%s275 + $0x200] sm:$0xff] %vm3595, %v3341
      %3661 = vst.msk [vmem:[%s275 + $0x208] sm:$0xff] %vm3595, %v3344
      %3662 = vst.msk [vmem:[%s275 + $0x210] sm:$0xff] %vm3595, %v3349
      %3663 = vst.msk [vmem:[%s275 + $0x218] sm:$0xff] %vm3595, %v3352
      %3664 = vst.msk [vmem:[%s275 + $0x220] sm:$0xff] %vm3595, %v3357
      %3665 = vst.msk [vmem:[%s275 + $0x228] sm:$0xff] %vm3595, %v3360
      %3666 = vst.msk [vmem:[%s275 + $0x230] sm:$0xff] %vm3595, %v3365
      %3667 = vst.msk [vmem:[%s275 + $0x238] sm:$0xff] %vm3595, %v3368
      %3668 = vst.msk [vmem:[%s275 + $0x240] sm:$0xff] %vm3595, %v3373
      %3669 = vst.msk [vmem:[%s275 + $0x248] sm:$0xff] %vm3595, %v3376
      %3670 = vst.msk [vmem:[%s275 + $0x250] sm:$0xff] %vm3595, %v3381
      %3671 = vst.msk [vmem:[%s275 + $0x258] sm:$0xff] %vm3595, %v3384
      %3672 = vst.msk [vmem:[%s275 + $0x260] sm:$0xff] %vm3595, %v3389
      %3673 = vst.msk [vmem:[%s275 + $0x268] sm:$0xff] %vm3595, %v3392
      %3674 = vst.msk [vmem:[%s275 + $0x270] sm:$0xff] %vm3595, %v3397
      %3675 = vst.msk [vmem:[%s275 + $0x278] sm:$0xff] %vm3595, %v3400
      %3676 = vst.msk [vmem:[%s275 + $0x280] sm:$0xff] %vm3595, %v3405
      %3677 = vst.msk [vmem:[%s275 + $0x288] sm:$0xff] %vm3595, %v3408
      %3678 = vst.msk [vmem:[%s275 + $0x290] sm:$0xff] %vm3595, %v3413
      %3679 = vst.msk [vmem:[%s275 + $0x298] sm:$0xff] %vm3595, %v3416
      %3680 = vst.msk [vmem:[%s275 + $0x2a0] sm:$0xff] %vm3595, %v3421
      %3681 = vst.msk [vmem:[%s275 + $0x2a8] sm:$0xff] %vm3595, %v3424
      %3682 = vst.msk [vmem:[%s275 + $0x2b0] sm:$0xff] %vm3595, %v3429
      %3683 = vst.msk [vmem:[%s275 + $0x2b8] sm:$0xff] %vm3595, %v3432
      %3684 = vst.msk [vmem:[%s275 + $0x2c0] sm:$0xff] %vm3595, %v3437
      %3685 = vst.msk [vmem:[%s275 + $0x2c8] sm:$0xff] %vm3595, %v3440
      %3686 = vst.msk [vmem:[%s275 + $0x2d0] sm:$0xff] %vm3595, %v3445
      %3687 = vst.msk [vmem:[%s275 + $0x2d8] sm:$0xff] %vm3595, %v3448
      %3688 = vst.msk [vmem:[%s275 + $0x2e0] sm:$0xff] %vm3595, %v3453
      %3689 = vst.msk [vmem:[%s275 + $0x2e8] sm:$0xff] %vm3595, %v3456
      %3690 = vst.msk [vmem:[%s275 + $0x2f0] sm:$0xff] %vm3595, %v3461
      %3691 = vst.msk [vmem:[%s275 + $0x2f8] sm:$0xff] %vm3595, %v3464
      %3692 = vst.msk [vmem:[%s275 + $0x300] sm:$0xff] %vm3595, %v3469
      %3693 = vst.msk [vmem:[%s275 + $0x308] sm:$0xff] %vm3595, %v3472
      %3694 = vst.msk [vmem:[%s275 + $0x310] sm:$0xff] %vm3595, %v3477
      %3695 = vst.msk [vmem:[%s275 + $0x318] sm:$0xff] %vm3595, %v3480
      %3696 = vst.msk [vmem:[%s275 + $0x320] sm:$0xff] %vm3595, %v3485
      %3697 = vst.msk [vmem:[%s275 + $0x328] sm:$0xff] %vm3595, %v3488
      %3698 = vst.msk [vmem:[%s275 + $0x330] sm:$0xff] %vm3595, %v3493
      %3699 = vst.msk [vmem:[%s275 + $0x338] sm:$0xff] %vm3595, %v3496
      %3700 = vst.msk [vmem:[%s275 + $0x340] sm:$0xff] %vm3595, %v3501
      %3701 = vst.msk [vmem:[%s275 + $0x348] sm:$0xff] %vm3595, %v3504
      %3702 = vst.msk [vmem:[%s275 + $0x350] sm:$0xff] %vm3595, %v3509
      %3703 = vst.msk [vmem:[%s275 + $0x358] sm:$0xff] %vm3595, %v3512
      %3704 = vst.msk [vmem:[%s275 + $0x360] sm:$0xff] %vm3595, %v3517
      %3705 = vst.msk [vmem:[%s275 + $0x368] sm:$0xff] %vm3595, %v3520
      %3706 = vst.msk [vmem:[%s275 + $0x370] sm:$0xff] %vm3595, %v3525
      %3707 = vst.msk [vmem:[%s275 + $0x378] sm:$0xff] %vm3595, %v3528
      %3708 = vst.msk [vmem:[%s275 + $0x380] sm:$0xff] %vm3595, %v3533
      %3709 = vst.msk [vmem:[%s275 + $0x388] sm:$0xff] %vm3595, %v3536
      %3710 = vst.msk [vmem:[%s275 + $0x390] sm:$0xff] %vm3595, %v3541
      %3711 = vst.msk [vmem:[%s275 + $0x398] sm:$0xff] %vm3595, %v3544
      %3712 = vst.msk [vmem:[%s275 + $0x3a0] sm:$0xff] %vm3595, %v3549
      %3713 = vst.msk [vmem:[%s275 + $0x3a8] sm:$0xff] %vm3595, %v3552
      %3714 = vst.msk [vmem:[%s275 + $0x3b0] sm:$0xff] %vm3595, %v3557
      %3715 = vst.msk [vmem:[%s275 + $0x3b8] sm:$0xff] %vm3595, %v3560
      %3716 = vst.msk [vmem:[%s275 + $0x3c0] sm:$0xff] %vm3595, %v3565
      %3717 = vst.msk [vmem:[%s275 + $0x3c8] sm:$0xff] %vm3595, %v3568
      %3718 = vst.msk [vmem:[%s275 + $0x3d0] sm:$0xff] %vm3595, %v3573
      %3719 = vst.msk [vmem:[%s275 + $0x3d8] sm:$0xff] %vm3595, %v3576
      %3720 = vst.msk [vmem:[%s275 + $0x3e0] sm:$0xff] %vm3595, %v3581
      %3721 = vst.msk [vmem:[%s275 + $0x3e8] sm:$0xff] %vm3595, %v3584
      %3722 = vst.msk [vmem:[%s275 + $0x3f0] sm:$0xff] %vm3595, %v3589
      %3723 = vst.msk [vmem:[%s275 + $0x3f8] sm:$0xff] %vm3595, %v3592
      %s3724 = smul.u32 128, %s17
      %p3725 = scmp.lt.s32.totalorder %s3724, 511
      %s3726 = scalar_select %p3725, %s3724, 511
      %s3727 = smul.addr %s3726, 8
      %s3728 = scalar_lea.vmem %s6, %s3727
      // Predicated region
      $region45: #{multitower_edge_forward.1} parent=43 // pred_check
        %p3729 = pneg %p171
      $region46: #{multitower_edge_forward.1} parent=43 // pred_check_branch
        %3731 = sbr.rel (%p3729) target = $region48
      $region47: #{multitower_edge_forward.1} parent=43 // pred_region
        %s3732 = smul.u32 128, %s17
      $region48: #{multitower_edge_forward.1} parent=43 // pred_fallthru
        _
    $region44: #{multitower_edge_forward.1} parent=5 // pred_fallthru
      _
    %p3733 = scmp.le.s32.totalorder 2, %s12
    // Predicated region
    $region49: #{multitower_edge_forward.1} parent=5 // pred_check
      %p3734 = pneg %p3733
    $region50: #{multitower_edge_forward.1} parent=5 // pred_check_branch
      %3736 = sbr.rel (%p3734) target = $region52
    $region51: #{multitower_edge_forward.1} parent=5 // pred_region
      %s3737 = ssub.s32 %s12, 2
      // Predicated region
      $region53: #{multitower_edge_forward.1} parent=51 // pred_check
        %p3738 = pneg %p177
      $region54: #{multitower_edge_forward.1} parent=51 // pred_check_branch
        %3740 = sbr.rel (%p3738) target = $region56
      $region55: #{multitower_edge_forward.1} parent=51 // pred_region
        %s3741 = smul.u32 128, %s18
        %p3742 = scmp.lt.s32.totalorder %s3741, 511
        %s3743 = scalar_select %p3742, %s3741, 511
        %s3744 = smul.addr %s3743, 8
        %s3745 = scalar_lea.vmem %s6, %s3744
      $region56: #{multitower_edge_forward.1} parent=51 // pred_fallthru
        _
    $region52: #{multitower_edge_forward.1} parent=5 // pred_fallthru
      _
  $region6: #{multitower_edge_forward.1} parent=0 // loop_footer
    %s16 = sadd.s32 1, %s12
  $region7: #{multitower_edge_forward.1} parent=0 // loop_footer_branch
    %11 = sbr.rel target = $region3
  $region8: #{multitower_edge_forward.1} parent=0 // loop_exit
    _

</llo_original>
